<compile_context>
chip_gen: v7x
topology: tpu7x:2x2x1
jax: 0.10.0
libtpu: 0.0.40
codegen_flags: <defaults>
</compile_context>

<pallas_src>
import functools
from collections import OrderedDict

import jax
import jax.numpy as jnp
from jax.experimental import pallas as pl
from jax.experimental.pallas import tpu as pltpu


LANES = 128                    # TPU lane width; every channel axis is padded to this
NUM_INSTANCE_CLASSES = 8
NUM_SEMANTIC_CLASSES = 12
NUM_DEPTH_BINS = 8
MAX_DEPTH = 8.0
PIX_TILE = 256                 # pixels per grid step of the fused frustum kernel
NEG_INF = -1e30                # bias of padded semantic-class lanes (excluded from CE/argmax)

# Slab lane layout emitted by the fused depth/frustum kernel (per pixel):
#   lanes  0..11 : occupied-voxel semantic logits (12..15 = -1e30 pads)
#   lane   16    : depth prediction
#   lanes 32..47 : depth features (16 channels)
DEPTH_LANE = 16
DFEAT_LANE = 32

# bf16 matmul operands (native on v5e/v6e/v7x MXUs); accumulation stays f32 via
# preferred_element_type.  All elementwise / loss math is done in f32.
MATMUL_DTYPE = jnp.bfloat16
OUT_DTYPE = jnp.bfloat16       # feature-map / inspection outputs (halves writeback)


# ----------------------------------------------------------------------------
# Pallas kernels
# ----------------------------------------------------------------------------
def _conv_matmul_kernel(col_ref, w_ref, b_ref, o_ref, *, activation):
    """One M-tile of a conv-as-matmul: (tm, Kp) x (Kp, 128) + bias, lane-dense out."""
    a = col_ref[...].astype(MATMUL_DTYPE)
    w = w_ref[...].astype(MATMUL_DTYPE)
    acc = jnp.dot(a, w, preferred_element_type=jnp.float32) + b_ref[...]
    if activation == "relu":
        acc = jnp.maximum(acc, 0.0)
    o_ref[...] = acc.astype(o_ref.dtype)


def _enc2_inst_kernel(col_ref, w2_ref, b2_ref, wi_ref, bi_ref,
                      b2_out, inst_out, iloss_out, *, n_rows, tm):
    """One M-tile of enc2 (3x3 stride-2 conv) fused with the 1x1 instance head.
    Emits a per-tile partial squared-sum loss (lane 0 of an (8,128) block)."""
    col = col_ref[...].astype(MATMUL_DTYPE)
    y2 = jnp.dot(col, w2_ref[...].astype(MATMUL_DTYPE),
                 preferred_element_type=jnp.float32) + b2_ref[...]
    y2 = jnp.maximum(y2, 0.0)
    b2_out[...] = y2.astype(b2_out.dtype)

    inst = jnp.dot(y2.astype(MATMUL_DTYPE), wi_ref[...].astype(MATMUL_DTYPE),
                   preferred_element_type=jnp.float32) + bi_ref[...]
    inst_out[...] = inst.astype(inst_out.dtype)

    # Padded logit lanes are exactly zero; mask padded M rows (if any).
    row = jax.lax.broadcasted_iota(jnp.int32, inst.shape, 0) + pl.program_id(0) * tm
    partial = jnp.sum(jnp.where(row < n_rows, inst * inst, 0.0))

    r = jax.lax.broadcasted_iota(jnp.int32, (8, LANES), 0)
    c = jax.lax.broadcasted_iota(jnp.int32, (8, LANES), 1)
    iloss_out[...] = jnp.where((r == 0) & (c == 0), partial, 0.0)


def _depth_frustum_kernel(b1_ref, tgt_ref,
                          wdf_ref, bdf_ref, wdp_ref, bdp_ref,
                          wf1_ref, bf1_ref, wf2_ref, bf2_ref,
                          slab_o, loss_o, *, max_depth, depth_lane, sem_keep):
    """Fused: depth head + L1 loss + occupied-voxel frustum MLP + CE loss for one
    tile of pixels.  Only the occupied depth bin needs the MLP (the empty-voxel
    CE term is a constant added outside), which cuts MXU/EUP work by the number
    of depth bins.  Packs [logits | depth | dfeat] into one lane-dense bf16 slab
    via static weight-column placement -- no lane shuffles, no padded stores."""
    b1 = b1_ref[...].astype(MATMUL_DTYPE)                       # (tm, 128)
    tm = b1.shape[0]
    lane = jax.lax.broadcasted_iota(jnp.int32, (tm, LANES), 1)

    # ---- depth2d head (dfeat lands in lanes DFEAT_LANE..+15, depth in lane
    #      depth_lane purely via the pre-padded weight matrices) --------------
    dfeat = jnp.maximum(
        jnp.dot(b1, wdf_ref[...].astype(MATMUL_DTYPE),
                preferred_element_type=jnp.float32) + bdf_ref[...], 0.0)
    dfeat_m = dfeat.astype(MATMUL_DTYPE)
    dpred = jax.nn.sigmoid(
        jnp.dot(dfeat_m, wdp_ref[...].astype(MATMUL_DTYPE),
                preferred_element_type=jnp.float32) + bdp_ref[...]) * max_depth

    # L1 depth-loss partial (f32); masked to the real depth lane -> no narrow slices.
    l1 = jnp.sum(jnp.abs(jnp.where(lane == depth_lane, dpred - tgt_ref[...], 0.0)))

    # ---- frustum3d per-voxel MLP, occupied voxel only ----------------------
    h = jnp.maximum(
        jnp.dot(dfeat_m, wf1_ref[...].astype(MATMUL_DTYPE),
                preferred_element_type=jnp.float32) + bf1_ref[...], 0.0)
    logits = jnp.dot(h.astype(MATMUL_DTYPE), wf2_ref[...].astype(MATMUL_DTYPE),
                     preferred_element_type=jnp.float32) + bf2_ref[...]   # pads = -1e30

    # cross-entropy vs class 0 for the occupied voxels of this tile (f32)
    m = jnp.max(logits, axis=-1, keepdims=True)
    lse = m + jnp.log(jnp.sum(jnp.exp(logits - m), axis=-1, keepdims=True))
    ce = jnp.sum(lse - logits[:, 0:1])

    # ---- lane-dense packed slab: [logits | depth | dfeat] -------------------
    slab = (jnp.where(lane < sem_keep, logits, 0.0)
            + jnp.where(lane == depth_lane, dpred, 0.0)
            + dfeat)                                            # dfeat only at 32..47
    slab_o[...] = slab.astype(slab_o.dtype)

    # per-tile loss partials, lane-dense (8,128) block; zeros elsewhere
    r = jax.lax.broadcasted_iota(jnp.int32, (8, LANES), 0)
    c = jax.lax.broadcasted_iota(jnp.int32, (8, LANES), 1)
    loss_o[...] = jnp.where((r == 0) & (c == 0), l1,
                            jnp.where((r == 0) & (c == 1), ce, 0.0))


# ----------------------------------------------------------------------------
# Glue: im2col + lane-dense conv wrapper + fused-kernel wrappers
# ----------------------------------------------------------------------------
def _im2col(x, kh, kw, stride, pad):
    # TODO(synk): at real resolutions replace this XLA-side materialization with
    # an in-kernel 3x3 conv (9 shifted (tm,C)x(C,128) matmuls) to avoid the 9x
    # HBM round trip of the col tensor.
    B, H, W, C = x.shape
    xp = jnp.pad(x, ((0, 0), (pad, pad), (pad, pad), (0, 0)))
    ho = (H + 2 * pad - kh) // stride + 1
    wo = (W + 2 * pad - kw) // stride + 1
    cols = []
    for i in range(kh):
        for j in range(kw):
            cols.append(xp[:, i:i + stride * ho:stride, j:j + stride * wo:stride, :])
    col = jnp.concatenate(cols, axis=-1)                        # (B, ho, wo, kh*kw*C)
    return col.reshape(B * ho * wo, kh * kw * C), (B, ho, wo)


def _pad_rows(col, tile):
    """Pad M to a multiple of 8 (and of `tile` when tiling); return (col, Mp, tm)."""
    M = col.shape[0]
    Mp = -(-M // 8) * 8
    if Mp >= tile:
        Mp = -(-Mp // tile) * tile
        tm = tile
    else:
        tm = Mp
    if Mp != M:
        col = jnp.pad(col, ((0, Mp - M), (0, 0)))
    return col, Mp, tm


def conv2d_p128(x, wmat, brow, kh, kw, stride, pad, activation, tile=256):
    """Conv as matmul; wmat is the pre-padded compact (Kp, 128) bf16 weight;
    output has 128 (padded) lanes in bf16.  Tiled over M (double-buffered)."""
    col, (B, ho, wo) = _im2col(x, kh, kw, stride, pad)
    col = col.astype(MATMUL_DTYPE)
    M, K = col.shape
    Kp = wmat.shape[0]
    if Kp != K:
        col = jnp.pad(col, ((0, 0), (0, Kp - K)))
    col, Mp, tm = _pad_rows(col, tile)

    y = pl.pallas_call(
        functools.partial(_conv_matmul_kernel, activation=activation),
        out_shape=jax.ShapeDtypeStruct((Mp, LANES), OUT_DTYPE),
        grid=(Mp // tm,),
        in_specs=[
            pl.BlockSpec((tm, Kp), lambda i: (i, 0)),
            pl.BlockSpec((Kp, LANES), lambda i: (0, 0)),
            pl.BlockSpec((1, LANES), lambda i: (0, 0)),
        ],
        out_specs=pl.BlockSpec((tm, LANES), lambda i: (i, 0)),
        compiler_params=pltpu.CompilerParams(dimension_semantics=("parallel",)),
    )(col, wmat, brow)
    return y[:M].reshape(B, ho, wo, LANES)


def encoder2_and_instance(b1p, kp, tile=256):
    """M-tiled fused enc2 conv + per-location instance head + per-tile partial
    squared-sum loss (reduced outside so the grid stays 'parallel')."""
    # Compact contraction: im2col over the 16 REAL channels only (K = 144).
    col, (B, ho, wo) = _im2col(b1p[..., :16], 3, 3, stride=2, pad=1)
    col = col.astype(MATMUL_DTYPE)
    M, K = col.shape
    Kp = kp["enc2_w"].shape[0]
    if Kp != K:
        col = jnp.pad(col, ((0, 0), (0, Kp - K)))
    col, Mp, tm = _pad_rows(col, tile)
    n_tiles = Mp // tm

    const = lambda i: (0, 0)
    b2p, instp, iloss = pl.pallas_call(
        functools.partial(_enc2_inst_kernel, n_rows=M, tm=tm),
        out_shape=(jax.ShapeDtypeStruct((Mp, LANES), OUT_DTYPE),
                   jax.ShapeDtypeStruct((Mp, LANES), OUT_DTYPE),
                   jax.ShapeDtypeStruct((n_tiles * 8, LANES), jnp.float32)),
        grid=(n_tiles,),
        in_specs=[
            pl.BlockSpec((tm, Kp), lambda i: (i, 0)),
            pl.BlockSpec((Kp, LANES), const),
            pl.BlockSpec((1, LANES), const),
            pl.BlockSpec((LANES, LANES), const),
            pl.BlockSpec((1, LANES), const),
        ],
        out_specs=(pl.BlockSpec((tm, LANES), lambda i: (i, 0)),
                   pl.BlockSpec((tm, LANES), lambda i: (i, 0)),
                   pl.BlockSpec((8, LANES), lambda i: (i, 0))),
        compiler_params=pltpu.CompilerParams(dimension_semantics=("parallel",)),
    )(col, kp["enc2_w"], kp["enc2_b"], kp["inst_w"], kp["inst_b"])

    inst_loss = jnp.sum(iloss[:, 0]) / float(M * NUM_INSTANCE_CLASSES)
    return (b2p[:M].reshape(B, ho, wo, LANES),
            instp[:M].reshape(B, ho, wo, LANES),
            inst_loss)


def depth_projection_frustum(b1p, depth_targets, kp):
    """One fused, pixel-tiled pallas_call for depth head + occupied-voxel
    frustum MLP + both loss partials.  Returns (slab, l1_sum, ce_occupied_sum)."""
    B, H, W, _ = b1p.shape
    P = B * H * W
    tm = PIX_TILE if P % PIX_TILE == 0 else P
    assert P % tm == 0 and tm % 8 == 0, "pixel count must tile cleanly at these shapes"
    n_tiles = P // tm

    const = lambda i: (0, 0)
    # NOTE: weight blocks use a constant index map, so they are not re-fetched
    # across grid steps; Buffered(1) would only shave the second VMEM buffer.
    slab, loss = pl.pallas_call(
        functools.partial(_depth_frustum_kernel, max_depth=MAX_DEPTH,
                          depth_lane=DEPTH_LANE, sem_keep=16),
        out_shape=(jax.ShapeDtypeStruct((P, LANES), OUT_DTYPE),
                   jax.ShapeDtypeStruct((n_tiles * 8, LANES), jnp.float32)),
        grid=(n_tiles,),
        in_specs=[
            pl.BlockSpec((tm, LANES), lambda i: (i, 0)),        # b1p tile (bf16)
            # TODO(synk): narrow (tm,1) target load; fold into a lane-dense slab
            # if this masked load ever shows up in profiles (it is ~1KB/tile).
            pl.BlockSpec((tm, 1), lambda i: (i, 0)),
            pl.BlockSpec((LANES, LANES), const),                # dfeat W
            pl.BlockSpec((1, LANES), const),                    # dfeat b
            pl.BlockSpec((LANES, LANES), const),                # dpred W
            pl.BlockSpec((1, LANES), const),                    # dpred b
            pl.BlockSpec((LANES, LANES), const),                # fr1 W
            pl.BlockSpec((1, LANES), const),                    # fr1 b
            pl.BlockSpec((LANES, LANES), const),                # fr2 W
            pl.BlockSpec((1, LANES), const),                    # fr2 b
        ],
        out_specs=(pl.BlockSpec((tm, LANES), lambda i: (i, 0)),
                   pl.BlockSpec((8, LANES), lambda i: (i, 0))),
        # No cross-tile accumulation -> fully parallel (both TCs on v7x).
        compiler_params=pltpu.CompilerParams(dimension_semantics=("parallel",)),
    )(b1p.reshape(P, LANES), depth_targets.reshape(P, 1).astype(jnp.float32),
      kp["dfeat_w"], kp["dfeat_b"], kp["dpred_w"], kp["dpred_b"],
      kp["fr1_w"], kp["fr1_b"], kp["fr2_w"], kp["fr2_b"])

    return slab, jnp.sum(loss[:, 0]), jnp.sum(loss[:, 1])


# ----------------------------------------------------------------------------
# Parameters (deterministic, synthetic) and lane-dense padded kernel matrices
# ----------------------------------------------------------------------------
def init_params(key):
    def w(k, shape, scale=0.1):
        return (scale * jax.random.normal(jax.random.fold_in(key, k), shape)
                ).astype(jnp.float32)

    return {
        # encoder2d (ResNetEncoder stand-in)
        "enc1_w": w(1, (3, 3, 3, 16)),  "enc1_b": w(2, (16,), 0.01),
        "enc2_w": w(3, (3, 3, 16, 32)), "enc2_b": w(4, (32,), 0.01),
        "enc3_w": w(5, (3, 3, 32, 64)), "enc3_b": w(6, (64,), 0.01),
        # depth2d
        "dfeat_w": w(7, (1, 1, 16, 16)), "dfeat_b": w(8, (16,), 0.01),
        "dpred_w": w(9, (1, 1, 16, 1)),  "dpred_b": w(10, (1,), 0.01),
        # instance2d (GeneralizedRCNN stand-in: per-location class logits)
        "inst_w": w(11, (1, 1, 32, NUM_INSTANCE_CLASSES)),
        "inst_b": w(12, (NUM_INSTANCE_CLASSES,), 0.01),
        # frustum3d (per-voxel 1x1x1 convs == channel matmuls)
        "fr1_w": w(13, (16, 32)), "fr1_b": w(14, (32,), 0.01),
        "fr2_w": w(15, (32, NUM_SEMANTIC_CLASSES)),
        "fr2_b": w(16, (NUM_SEMANTIC_CLASSES,), 0.01),
    }


def build_kernel_params(p):
    """Pre-pad / pre-reshape all weights once, outside the hot path.
    Conv matrices use the COMPACT real input-channel count (K = kh*kw*cin_real,
    rounded up to 8); all matmul operands are pre-cast to bf16; biases stay f32.
    The depth-head matrices statically place dfeat at lanes 32..47 and the depth
    prediction at lane 16 so the fused kernel can pack its output without any
    lane shuffles."""
    def conv_mat(w, cin_pad):
        kh, kw, cin, cout = w.shape
        wf = jnp.zeros((kh, kw, cin_pad, LANES), jnp.float32)
        wf = wf.at[:, :, :cin, :cout].set(w)
        wm = wf.reshape(kh * kw * cin_pad, LANES)
        K = wm.shape[0]
        Kp = -(-K // 8) * 8
        if Kp != K:
            wm = jnp.pad(wm, ((0, Kp - K), (0, 0)))
        return wm.astype(MATMUL_DTYPE)

    def bias_row(b, lane_off=0, fill=0.0):
        out = jnp.full((1, LANES), fill, jnp.float32)
        return out.at[0, lane_off:lane_off + b.shape[0]].set(b)

    def dense_mat(w, row_off=0, col_off=0):
        cin, cout = w.shape
        out = jnp.zeros((LANES, LANES), jnp.float32)
        out = out.at[row_off:row_off + cin, col_off:col_off + cout].set(w)
        return out.astype(MATMUL_DTYPE)

    return {
        "enc1_w": conv_mat(p["enc1_w"], cin_pad=3),  "enc1_b": bias_row(p["enc1_b"]),
        "enc2_w": conv_mat(p["enc2_w"], cin_pad=16), "enc2_b": bias_row(p["enc2_b"]),
        "enc3_w": conv_mat(p["enc3_w"], cin_pad=32), "enc3_b": bias_row(p["enc3_b"]),
        "inst_w": dense_mat(p["inst_w"].reshape(32, NUM_INSTANCE_CLASSES)),
        "inst_b": bias_row(p["inst_b"]),
        # depth head: features live at lanes DFEAT_LANE..+15, depth at DEPTH_LANE
        "dfeat_w": dense_mat(p["dfeat_w"].reshape(16, 16), col_off=DFEAT_LANE),
        "dfeat_b": bias_row(p["dfeat_b"], lane_off=DFEAT_LANE),
        "dpred_w": dense_mat(p["dpred_w"].reshape(16, 1),
                             row_off=DFEAT_LANE, col_off=DEPTH_LANE),
        "dpred_b": bias_row(p["dpred_b"], lane_off=DEPTH_LANE),
        "fr1_w": dense_mat(p["fr1_w"], row_off=DFEAT_LANE),
        "fr1_b": bias_row(p["fr1_b"]),
        "fr2_w": dense_mat(p["fr2_w"]),
        # padded class lanes get -1e30 -> excluded from softmax/argmax
        "fr2_b": bias_row(p["fr2_b"], fill=NEG_INF),
    }


TRAINING_STAGES = OrderedDict(
    [("LEVEL-64", False), ("LEVEL-128", False), ("LEVEL-256", False), ("FULL", True)]
)


def get_current_training_stage():
    for level, status in TRAINING_STAGES.items():
        if status:
            return level


# ----------------------------------------------------------------------------
# Forward pass (mirrors PanopticReconstruction.forward)
# ----------------------------------------------------------------------------
def panoptic_forward(images_nchw, depth_targets, kp):
    losses, results = {}, {}
    D = NUM_DEPTH_BINS

    x = jnp.transpose(images_nchw, (0, 2, 3, 1)).astype(MATMUL_DTYPE)  # NCHW -> NHWC

    # ---- encoder2d + instance2d ------------------------------------------
    # TODO(synk): full GeneralizedRCNN (RPN proposals, RoIAlign, NMS) has no
    # clean Pallas equivalent; a per-location classification head stands in.
    b1p = conv2d_p128(x, kp["enc1_w"], kp["enc1_b"], 3, 3, 1, 1, "relu")   # (B,16,16,128)
    b2p, instp, inst_loss = encoder2_and_instance(b1p, kp)                 # (B, 8, 8,128)
    b3p = conv2d_p128(b2p[..., :32], kp["enc3_w"], kp["enc3_b"],
                      3, 3, 2, 1, "relu")                                  # (B, 4, 4,128)
    image_features = {"blocks": [b1p[..., :16], b2p[..., :32], b3p[..., :64]]}

    losses["instance"] = inst_loss
    results["instance"] = {
        "logits": instp[..., :NUM_INSTANCE_CLASSES].astype(jnp.float32)}

    # ---- depth2d + projection + frustum3d : ONE fused kernel ---------------
    # TODO(synk): MinkowskiEngine SparseTensor projection / sparse 3D UNet are
    # replaced by a dense depth-bin one-hot frustum with a per-voxel MLP.
    slab, l1_sum, ce_occ_sum = depth_projection_frustum(b1p, depth_targets, kp)

    B, H, W = b1p.shape[:3]
    P = B * H * W

    slab_f = slab.astype(jnp.float32)
    sem_occ = slab_f[:, :NUM_SEMANTIC_CLASSES]              # (P, 12)
    dpred = slab_f[:, DEPTH_LANE:DEPTH_LANE + 1]            # (P, 1)
    dfeat = slab_f[:, DFEAT_LANE:DFEAT_LANE + 16]           # (P, 16)

    losses["depth"] = l1_sum / float(P)
    results["depth"] = {"prediction": dpred.reshape(B, H, W, 1),
                        "features": dfeat.reshape(B, H, W, 16)}

    # Empty-voxel (zero-feature) semantic logits are a single constant row;
    # their CE contribution is closed-form and added to the kernel's partials.
    h_emp = jnp.maximum(kp["fr1_b"], 0.0)
    logits_emp = (jnp.dot(h_emp.astype(MATMUL_DTYPE), kp["fr2_w"],
                          preferred_element_type=jnp.float32) + kp["fr2_b"])[0]
    m_e = jnp.max(logits_emp)
    ce_emp = m_e + jnp.log(jnp.sum(jnp.exp(logits_emp - m_e))) - logits_emp[0]
    losses["frustum"] = (ce_occ_sum + float(P * (D - 1)) * ce_emp) / float(P * D)

    # ---- rebuild the small (B, D, H, W, .) result tensors outside the kernel
    # (layout plumbing only; the kernel never writes padded frustum slabs) ----
    bins = jnp.clip(jnp.floor(dpred / MAX_DEPTH * D), 0, D - 1).astype(jnp.int32)  # (P,1)
    occ = bins == jnp.arange(D, dtype=jnp.int32)[None, :]                          # (P,D)

    frustum_feat = jnp.where(occ[:, :, None], dfeat[:, None, :], 0.0)
    results["projection"] = (frustum_feat.reshape(B, H, W, D, 16)
                             .transpose(0, 3, 1, 2, 4))

    sem_emp = logits_emp[:NUM_SEMANTIC_CLASSES]
    sem_logits = jnp.where(occ[:, :, None], sem_occ[:, None, :],
                           sem_emp[None, None, :])
    results["frustum"] = {"semantic_logits":
                          sem_logits.reshape(B, H, W, D, NUM_SEMANTIC_CLASSES)
                          .transpose(0, 3, 1, 2, 4)}

    if get_current_training_stage() == "FULL":
        pan_occ = jnp.argmax(sem_occ, axis=-1).astype(jnp.int32)      # (P,)
        pan_emp = jnp.argmax(sem_emp).astype(jnp.int32)
        pan = jnp.where(occ, pan_occ[:, None], pan_emp)               # (P, D)
        results["panoptic"] = pan.reshape(B, H, W, D).transpose(0, 3, 1, 2)

    results["image_features"] = image_features
    return losses, results


# ----------------------------------------------------------------------------
if __name__ == "__main__":
    key = jax.random.PRNGKey(0)
    k_img, k_depth, k_par = jax.random.split(key, 3)

    B, C_IN, H, W = 2, 3, 16, 16
    images = jax.random.normal(k_img, (B, C_IN, H, W), jnp.float32)          # NCHW
    depth_targets = jax.random.uniform(
        k_depth, (B, H, W, 1), jnp.float32, 0.0, MAX_DEPTH)

    params = init_params(k_par)
    kernel_params = build_kernel_params(params)                 # padded once, outside hot path

    forward = jax.jit(panoptic_forward)
    losses, results = forward(images, depth_targets, kernel_params)
    jax.block_until_ready((losses, results))

    print("KERNEL_OK")
</pallas_src>

<mosaic_0001>
module attributes {stable_mosaic.version = 11 : i64} {
  func.func @_conv_matmul_kernel(%arg0: i32, %arg1: memref<256x32xbf16, #tpu.memory_space<vmem>>, %arg2: memref<32x128xbf16, #tpu.memory_space<vmem>>, %arg3: memref<1x128xf32, #tpu.memory_space<vmem>>, %arg4: memref<256x128xbf16, #tpu.memory_space<vmem>>) attributes {dimension_semantics = [#tpu.dimension_semantics<parallel>], iteration_bounds = array<i64: 2>, scalar_prefetch = 0 : i64, scratch_operands = 0 : i64, tpu.core_type = #tpu.core_type<tc>, window_params = [{transform_indices = @transform_0, window_bounds = array<i64: 256, 32>}, {pipeline_mode = #tpu.pipeline_mode<synchronous>, transform_indices = @transform_1, window_bounds = array<i64: 32, 128>}, {pipeline_mode = #tpu.pipeline_mode<synchronous>, transform_indices = @transform_2, window_bounds = array<i64: 1, 128>}, {transform_indices = @transform_3, window_bounds = array<i64: 256, 128>}]} {
    %c0 = arith.constant 0 : index
    %c0_0 = arith.constant 0 : index
    %0 = vector.load %arg1[%c0, %c0_0] : memref<256x32xbf16, #tpu.memory_space<vmem>>, vector<256x32xbf16>
    %c0_1 = arith.constant 0 : index
    %c0_2 = arith.constant 0 : index
    %1 = vector.load %arg2[%c0_1, %c0_2] : memref<32x128xbf16, #tpu.memory_space<vmem>>, vector<32x128xbf16>
    %cst = arith.constant dense<0.000000e+00> : vector<256x128xf32>
    %2 = tpu.matmul %0, %1, %cst {dimension_numbers = #tpu.dot_dimension_numbers<[1], [0], [0], [1], [0, 0, 1, 1], [], []>} : vector<256x32xbf16>, vector<32x128xbf16>, vector<256x128xf32> -> vector<256x128xf32>
    %c0_3 = arith.constant 0 : index
    %c0_4 = arith.constant 0 : index
    %3 = vector.load %arg3[%c0_3, %c0_4] : memref<1x128xf32, #tpu.memory_space<vmem>>, vector<1x128xf32>
    %4 = vector.broadcast %3 : vector<1x128xf32> to vector<256x128xf32>
    %5 = arith.addf %2, %4 : vector<256x128xf32>
    %cst_5 = arith.constant 0.000000e+00 : f32
    %6 = vector.broadcast %cst_5 : f32 to vector<256x128xf32>
    %7 = arith.maximumf %5, %6 : vector<256x128xf32>
    %8 = arith.truncf %7 : vector<256x128xf32> to vector<256x128xbf16>
    %c0_6 = arith.constant 0 : index
    %c0_7 = arith.constant 0 : index
    %9 = vector.load %arg4[%c0_6, %c0_7] : memref<256x128xbf16, #tpu.memory_space<vmem>>, vector<256x128xbf16>
    tpu.vector_store %arg4[%c0_6, %c0_7], %8 {strides = array<i32>} : memref<256x128xbf16, #tpu.memory_space<vmem>>, vector<256x128xbf16>,
    return
  }
  func.func @transform_0(%arg0: i32) -> (i32, i32) {
    %c0_i32 = arith.constant 0 : i32
    %c0_i32_0 = arith.constant 0 : i32
    return %arg0, %c0_i32 : i32, i32
  }
  func.func @transform_1(%arg0: i32) -> (i32, i32) {
    %c0_i32 = arith.constant 0 : i32
    %c0_i32_0 = arith.constant 0 : i32
    %c0_i32_1 = arith.constant 0 : i32
    return %c0_i32, %c0_i32_0 : i32, i32
  }
  func.func @transform_2(%arg0: i32) -> (i32, i32) {
    %c0_i32 = arith.constant 0 : i32
    %c0_i32_0 = arith.constant 0 : i32
    %c0_i32_1 = arith.constant 0 : i32
    return %c0_i32, %c0_i32_0 : i32, i32
  }
  func.func @transform_3(%arg0: i32) -> (i32, i32) {
    %c0_i32 = arith.constant 0 : i32
    %c0_i32_0 = arith.constant 0 : i32
    return %arg0, %c0_i32 : i32, i32
  }
}

module attributes {stable_mosaic.version = 11 : i64} {
  func.func @_enc2_inst_kernel(%arg0: i32, %arg1: memref<128x144xbf16, #tpu.memory_space<vmem>>, %arg2: memref<144x128xbf16, #tpu.memory_space<vmem>>, %arg3: memref<1x128xf32, #tpu.memory_space<vmem>>, %arg4: memref<128x128xbf16, #tpu.memory_space<vmem>>, %arg5: memref<1x128xf32, #tpu.memory_space<vmem>>, %arg6: memref<128x128xbf16, #tpu.memory_space<vmem>>, %arg7: memref<128x128xbf16, #tpu.memory_space<vmem>>, %arg8: memref<8x128xf32, #tpu.memory_space<vmem>>) attributes {dimension_semantics = [#tpu.dimension_semantics<parallel>], iteration_bounds = array<i64: 1>, scalar_prefetch = 0 : i64, scratch_operands = 0 : i64, tpu.core_type = #tpu.core_type<tc>, window_params = [{transform_indices = @transform_0, window_bounds = array<i64: 128, 144>}, {pipeline_mode = #tpu.pipeline_mode<synchronous>, transform_indices = @transform_1, window_bounds = array<i64: 144, 128>}, {pipeline_mode = #tpu.pipeline_mode<synchronous>, transform_indices = @transform_2, window_bounds = array<i64: 1, 128>}, {pipeline_mode = #tpu.pipeline_mode<synchronous>, transform_indices = @transform_3, window_bounds = array<i64: 128, 128>}, {pipeline_mode = #tpu.pipeline_mode<synchronous>, transform_indices = @transform_4, window_bounds = array<i64: 1, 128>}, {transform_indices = @transform_5, window_bounds = array<i64: 128, 128>}, {transform_indices = @transform_6, window_bounds = array<i64: 128, 128>}, {transform_indices = @transform_7, window_bounds = array<i64: 8, 128>}]} {
    %c0 = arith.constant 0 : index
    %c0_0 = arith.constant 0 : index
    %0 = vector.load %arg1[%c0, %c0_0] : memref<128x144xbf16, #tpu.memory_space<vmem>>, vector<128x144xbf16>
    %c0_1 = arith.constant 0 : index
    %c0_2 = arith.constant 0 : index
    %1 = vector.load %arg2[%c0_1, %c0_2] : memref<144x128xbf16, #tpu.memory_space<vmem>>, vector<144x128xbf16>
    %cst = arith.constant dense<0.000000e+00> : vector<128x128xf32>
    %2 = tpu.matmul %0, %1, %cst {dimension_numbers = #tpu.dot_dimension_numbers<[1], [0], [0], [1], [0, 0, 1, 1], [], []>} : vector<128x144xbf16>, vector<144x128xbf16>, vector<128x128xf32> -> vector<128x128xf32>
    %c0_3 = arith.constant 0 : index
    %c0_4 = arith.constant 0 : index
    %3 = vector.load %arg3[%c0_3, %c0_4] : memref<1x128xf32, #tpu.memory_space<vmem>>, vector<1x128xf32>
    %4 = vector.broadcast %3 : vector<1x128xf32> to vector<128x128xf32>
    %5 = arith.addf %2, %4 : vector<128x128xf32>
    %cst_5 = arith.constant 0.000000e+00 : f32
    %6 = vector.broadcast %cst_5 : f32 to vector<128x128xf32>
    %7 = arith.maximumf %5, %6 : vector<128x128xf32>
    %8 = arith.truncf %7 : vector<128x128xf32> to vector<128x128xbf16>
    %c0_6 = arith.constant 0 : index
    %c0_7 = arith.constant 0 : index
    %9 = vector.load %arg6[%c0_6, %c0_7] : memref<128x128xbf16, #tpu.memory_space<vmem>>, vector<128x128xbf16>
    tpu.vector_store %arg6[%c0_6, %c0_7], %8 {strides = array<i32>} : memref<128x128xbf16, #tpu.memory_space<vmem>>, vector<128x128xbf16>,
    %10 = arith.truncf %7 : vector<128x128xf32> to vector<128x128xbf16>
    %c0_8 = arith.constant 0 : index
    %c0_9 = arith.constant 0 : index
    %11 = vector.load %arg4[%c0_8, %c0_9] : memref<128x128xbf16, #tpu.memory_space<vmem>>, vector<128x128xbf16>
    %cst_10 = arith.constant dense<0.000000e+00> : vector<128x128xf32>
    %12 = tpu.matmul %10, %11, %cst_10 {dimension_numbers = #tpu.dot_dimension_numbers<[1], [0], [0], [1], [0, 0, 1, 1], [], []>} : vector<128x128xbf16>, vector<128x128xbf16>, vector<128x128xf32> -> vector<128x128xf32>
    %c0_11 = arith.constant 0 : index
    %c0_12 = arith.constant 0 : index
    %13 = vector.load %arg5[%c0_11, %c0_12] : memref<1x128xf32, #tpu.memory_space<vmem>>, vector<1x128xf32>
    %14 = vector.broadcast %13 : vector<1x128xf32> to vector<128x128xf32>
    %15 = arith.addf %12, %14 : vector<128x128xf32>
    %16 = arith.truncf %15 : vector<128x128xf32> to vector<128x128xbf16>
    %c0_13 = arith.constant 0 : index
    %c0_14 = arith.constant 0 : index
    %17 = vector.load %arg7[%c0_13, %c0_14] : memref<128x128xbf16, #tpu.memory_space<vmem>>, vector<128x128xbf16>
    tpu.vector_store %arg7[%c0_13, %c0_14], %16 {strides = array<i32>} : memref<128x128xbf16, #tpu.memory_space<vmem>>, vector<128x128xbf16>,
    %18 = tpu.iota {dimensions = array<i32: 0>} : vector<128x128xi32>
    %c128_i32 = arith.constant 128 : i32
    %19 = arith.muli %arg0, %c128_i32 : i32
    %20 = vector.broadcast %19 : i32 to vector<128x128xi32>
    %21 = arith.addi %18, %20 : vector<128x128xi32>
    %c128_i32_15 = arith.constant 128 : i32
    %22 = vector.broadcast %c128_i32_15 : i32 to vector<128x128xi32>
    %23 = arith.cmpi slt, %21, %22 : vector<128x128xi32>
    %24 = arith.mulf %15, %15 : vector<128x128xf32>
    %cst_16 = arith.constant 0.000000e+00 : f32
    %25 = vector.broadcast %cst_16 : f32 to vector<128x128xf32>
    %26 = arith.select %23, %24, %25 : vector<128x128xi1>, vector<128x128xf32>
    %27 = vector.shape_cast %26 : vector<128x128xf32> to vector<1x128x128xf32>
    %cst_17 = arith.constant dense<0.000000e+00> : vector<1xf32>
    %28 = vector.multi_reduction <add>, %27, %cst_17 [1, 2] : vector<1x128x128xf32> to vector<1xf32>
    %29 = vector.shape_cast %28 : vector<1xf32> to vector<1x1x1xf32>
    %30 = vector.extract %29[0, 0, 0] : f32 from vector<1x1x1xf32>
    %31 = tpu.iota {dimensions = array<i32: 0>} : vector<8x128xi32>
    %32 = tpu.iota {dimensions = array<i32: 1>} : vector<8x128xi32>
    %c0_i32 = arith.constant 0 : i32
    %33 = vector.broadcast %c0_i32 : i32 to vector<8x128xi32>
    %34 = arith.cmpi eq, %31, %33 : vector<8x128xi32>
    %c0_i32_18 = arith.constant 0 : i32
    %35 = vector.broadcast %c0_i32_18 : i32 to vector<8x128xi32>
    %36 = arith.cmpi eq, %32, %35 : vector<8x128xi32>
    %37 = arith.andi %34, %36 : vector<8x128xi1>
    %cst_19 = arith.constant 0.000000e+00 : f32
    %38 = vector.broadcast %30 : f32 to vector<8x128xf32>
    %39 = vector.broadcast %cst_19 : f32 to vector<8x128xf32>
    %40 = arith.select %37, %38, %39 : vector<8x128xi1>, vector<8x128xf32>
    %c0_20 = arith.constant 0 : index
    %c0_21 = arith.constant 0 : index
    %41 = vector.load %arg8[%c0_20, %c0_21] : memref<8x128xf32, #tpu.memory_space<vmem>>, vector<8x128xf32>
    tpu.vector_store %arg8[%c0_20, %c0_21], %40 {strides = array<i32>} : memref<8x128xf32, #tpu.memory_space<vmem>>, vector<8x128xf32>,
    return
  }
  func.func @transform_0(%arg0: i32) -> (i32, i32) {
    %c0_i32 = arith.constant 0 : i32
    %c0_i32_0 = arith.constant 0 : i32
    return %arg0, %c0_i32 : i32, i32
  }
  func.func @transform_1(%arg0: i32) -> (i32, i32) {
    %c0_i32 = arith.constant 0 : i32
    %c0_i32_0 = arith.constant 0 : i32
    %c0_i32_1 = arith.constant 0 : i32
    return %c0_i32, %c0_i32_0 : i32, i32
  }
  func.func @transform_2(%arg0: i32) -> (i32, i32) {
    %c0_i32 = arith.constant 0 : i32
    %c0_i32_0 = arith.constant 0 : i32
    %c0_i32_1 = arith.constant 0 : i32
    return %c0_i32, %c0_i32_0 : i32, i32
  }
  func.func @transform_3(%arg0: i32) -> (i32, i32) {
    %c0_i32 = arith.constant 0 : i32
    %c0_i32_0 = arith.constant 0 : i32
    %c0_i32_1 = arith.constant 0 : i32
    return %c0_i32, %c0_i32_0 : i32, i32
  }
  func.func @transform_4(%arg0: i32) -> (i32, i32) {
    %c0_i32 = arith.constant 0 : i32
    %c0_i32_0 = arith.constant 0 : i32
    %c0_i32_1 = arith.constant 0 : i32
    return %c0_i32, %c0_i32_0 : i32, i32
  }
  func.func @transform_5(%arg0: i32) -> (i32, i32) {
    %c0_i32 = arith.constant 0 : i32
    %c0_i32_0 = arith.constant 0 : i32
    return %arg0, %c0_i32 : i32, i32
  }
  func.func @transform_6(%arg0: i32) -> (i32, i32) {
    %c0_i32 = arith.constant 0 : i32
    %c0_i32_0 = arith.constant 0 : i32
    return %arg0, %c0_i32 : i32, i32
  }
  func.func @transform_7(%arg0: i32) -> (i32, i32) {
    %c0_i32 = arith.constant 0 : i32
    %c0_i32_0 = arith.constant 0 : i32
    return %arg0, %c0_i32 : i32, i32
  }
}

module attributes {stable_mosaic.version = 11 : i64} {
  func.func @_conv_matmul_kernel(%arg0: i32, %arg1: memref<32x288xbf16, #tpu.memory_space<vmem>>, %arg2: memref<288x128xbf16, #tpu.memory_space<vmem>>, %arg3: memref<1x128xf32, #tpu.memory_space<vmem>>, %arg4: memref<32x128xbf16, #tpu.memory_space<vmem>>) attributes {dimension_semantics = [#tpu.dimension_semantics<parallel>], iteration_bounds = array<i64: 1>, scalar_prefetch = 0 : i64, scratch_operands = 0 : i64, tpu.core_type = #tpu.core_type<tc>, window_params = [{transform_indices = @transform_0, window_bounds = array<i64: 32, 288>}, {pipeline_mode = #tpu.pipeline_mode<synchronous>, transform_indices = @transform_1, window_bounds = array<i64: 288, 128>}, {pipeline_mode = #tpu.pipeline_mode<synchronous>, transform_indices = @transform_2, window_bounds = array<i64: 1, 128>}, {transform_indices = @transform_3, window_bounds = array<i64: 32, 128>}]} {
    %c0 = arith.constant 0 : index
    %c0_0 = arith.constant 0 : index
    %0 = vector.load %arg1[%c0, %c0_0] : memref<32x288xbf16, #tpu.memory_space<vmem>>, vector<32x288xbf16>
    %c0_1 = arith.constant 0 : index
    %c0_2 = arith.constant 0 : index
    %1 = vector.load %arg2[%c0_1, %c0_2] : memref<288x128xbf16, #tpu.memory_space<vmem>>, vector<288x128xbf16>
    %cst = arith.constant dense<0.000000e+00> : vector<32x128xf32>
    %2 = tpu.matmul %0, %1, %cst {dimension_numbers = #tpu.dot_dimension_numbers<[1], [0], [0], [1], [0, 0, 1, 1], [], []>} : vector<32x288xbf16>, vector<288x128xbf16>, vector<32x128xf32> -> vector<32x128xf32>
    %c0_3 = arith.constant 0 : index
    %c0_4 = arith.constant 0 : index
    %3 = vector.load %arg3[%c0_3, %c0_4] : memref<1x128xf32, #tpu.memory_space<vmem>>, vector<1x128xf32>
    %4 = vector.broadcast %3 : vector<1x128xf32> to vector<32x128xf32>
    %5 = arith.addf %2, %4 : vector<32x128xf32>
    %cst_5 = arith.constant 0.000000e+00 : f32
    %6 = vector.broadcast %cst_5 : f32 to vector<32x128xf32>
    %7 = arith.maximumf %5, %6 : vector<32x128xf32>
    %8 = arith.truncf %7 : vector<32x128xf32> to vector<32x128xbf16>
    %c0_6 = arith.constant 0 : index
    %c0_7 = arith.constant 0 : index
    %9 = vector.load %arg4[%c0_6, %c0_7] : memref<32x128xbf16, #tpu.memory_space<vmem>>, vector<32x128xbf16>
    tpu.vector_store %arg4[%c0_6, %c0_7], %8 {strides = array<i32>} : memref<32x128xbf16, #tpu.memory_space<vmem>>, vector<32x128xbf16>,
    return
  }
  func.func @transform_0(%arg0: i32) -> (i32, i32) {
    %c0_i32 = arith.constant 0 : i32
    %c0_i32_0 = arith.constant 0 : i32
    return %arg0, %c0_i32 : i32, i32
  }
  func.func @transform_1(%arg0: i32) -> (i32, i32) {
    %c0_i32 = arith.constant 0 : i32
    %c0_i32_0 = arith.constant 0 : i32
    %c0_i32_1 = arith.constant 0 : i32
    return %c0_i32, %c0_i32_0 : i32, i32
  }
  func.func @transform_2(%arg0: i32) -> (i32, i32) {
    %c0_i32 = arith.constant 0 : i32
    %c0_i32_0 = arith.constant 0 : i32
    %c0_i32_1 = arith.constant 0 : i32
    return %c0_i32, %c0_i32_0 : i32, i32
  }
  func.func @transform_3(%arg0: i32) -> (i32, i32) {
    %c0_i32 = arith.constant 0 : i32
    %c0_i32_0 = arith.constant 0 : i32
    return %arg0, %c0_i32 : i32, i32
  }
}

module attributes {stable_mosaic.version = 11 : i64} {
  func.func @_depth_frustum_kernel(%arg0: i32, %arg1: memref<256x128xbf16, #tpu.memory_space<vmem>>, %arg2: memref<256x1xf32, #tpu.memory_space<vmem>>, %arg3: memref<128x128xbf16, #tpu.memory_space<vmem>>, %arg4: memref<1x128xf32, #tpu.memory_space<vmem>>, %arg5: memref<128x128xbf16, #tpu.memory_space<vmem>>, %arg6: memref<1x128xf32, #tpu.memory_space<vmem>>, %arg7: memref<128x128xbf16, #tpu.memory_space<vmem>>, %arg8: memref<1x128xf32, #tpu.memory_space<vmem>>, %arg9: memref<128x128xbf16, #tpu.memory_space<vmem>>, %arg10: memref<1x128xf32, #tpu.memory_space<vmem>>, %arg11: memref<256x128xbf16, #tpu.memory_space<vmem>>, %arg12: memref<8x128xf32, #tpu.memory_space<vmem>>) attributes {dimension_semantics = [#tpu.dimension_semantics<parallel>], iteration_bounds = array<i64: 2>, scalar_prefetch = 0 : i64, scratch_operands = 0 : i64, tpu.core_type = #tpu.core_type<tc>, window_params = [{transform_indices = @transform_0, window_bounds = array<i64: 256, 128>}, {transform_indices = @transform_1, window_bounds = array<i64: 256, 1>}, {pipeline_mode = #tpu.pipeline_mode<synchronous>, transform_indices = @transform_2, window_bounds = array<i64: 128, 128>}, {pipeline_mode = #tpu.pipeline_mode<synchronous>, transform_indices = @transform_3, window_bounds = array<i64: 1, 128>}, {pipeline_mode = #tpu.pipeline_mode<synchronous>, transform_indices = @transform_4, window_bounds = array<i64: 128, 128>}, {pipeline_mode = #tpu.pipeline_mode<synchronous>, transform_indices = @transform_5, window_bounds = array<i64: 1, 128>}, {pipeline_mode = #tpu.pipeline_mode<synchronous>, transform_indices = @transform_6, window_bounds = array<i64: 128, 128>}, {pipeline_mode = #tpu.pipeline_mode<synchronous>, transform_indices = @transform_7, window_bounds = array<i64: 1, 128>}, {pipeline_mode = #tpu.pipeline_mode<synchronous>, transform_indices = @transform_8, window_bounds = array<i64: 128, 128>}, {pipeline_mode = #tpu.pipeline_mode<synchronous>, transform_indices = @transform_9, window_bounds = array<i64: 1, 128>}, {transform_indices = @transform_10, window_bounds = array<i64: 256, 128>}, {transform_indices = @transform_11, window_bounds = array<i64: 8, 128>}]} {
    %c0 = arith.constant 0 : index
    %c0_0 = arith.constant 0 : index
    %0 = vector.load %arg1[%c0, %c0_0] : memref<256x128xbf16, #tpu.memory_space<vmem>>, vector<256x128xbf16>
    %1 = tpu.iota {dimensions = array<i32: 1>} : vector<256x128xi32>
    %c0_1 = arith.constant 0 : index
    %c0_2 = arith.constant 0 : index
    %2 = vector.load %arg3[%c0_1, %c0_2] : memref<128x128xbf16, #tpu.memory_space<vmem>>, vector<128x128xbf16>
    %cst = arith.constant dense<0.000000e+00> : vector<256x128xf32>
    %3 = tpu.matmul %0, %2, %cst {dimension_numbers = #tpu.dot_dimension_numbers<[1], [0], [0], [1], [0, 0, 1, 1], [], []>} : vector<256x128xbf16>, vector<128x128xbf16>, vector<256x128xf32> -> vector<256x128xf32>
    %c0_3 = arith.constant 0 : index
    %c0_4 = arith.constant 0 : index
    %4 = vector.load %arg4[%c0_3, %c0_4] : memref<1x128xf32, #tpu.memory_space<vmem>>, vector<1x128xf32>
    %5 = vector.broadcast %4 : vector<1x128xf32> to vector<256x128xf32>
    %6 = arith.addf %3, %5 : vector<256x128xf32>
    %cst_5 = arith.constant 0.000000e+00 : f32
    %7 = vector.broadcast %cst_5 : f32 to vector<256x128xf32>
    %8 = arith.maximumf %6, %7 : vector<256x128xf32>
    %9 = arith.truncf %8 : vector<256x128xf32> to vector<256x128xbf16>
    %c0_6 = arith.constant 0 : index
    %c0_7 = arith.constant 0 : index
    %10 = vector.load %arg5[%c0_6, %c0_7] : memref<128x128xbf16, #tpu.memory_space<vmem>>, vector<128x128xbf16>
    %cst_8 = arith.constant dense<0.000000e+00> : vector<256x128xf32>
    %11 = tpu.matmul %9, %10, %cst_8 {dimension_numbers = #tpu.dot_dimension_numbers<[1], [0], [0], [1], [0, 0, 1, 1], [], []>} : vector<256x128xbf16>, vector<128x128xbf16>, vector<256x128xf32> -> vector<256x128xf32>
    %c0_9 = arith.constant 0 : index
    %c0_10 = arith.constant 0 : index
    %12 = vector.load %arg6[%c0_9, %c0_10] : memref<1x128xf32, #tpu.memory_space<vmem>>, vector<1x128xf32>
    %13 = vector.broadcast %12 : vector<1x128xf32> to vector<256x128xf32>
    %14 = arith.addf %11, %13 : vector<256x128xf32>
    %15 = arith.negf %14 : vector<256x128xf32>
    %16 = math.exp %15 : vector<256x128xf32>
    %cst_11 = arith.constant 1.000000e+00 : f32
    %17 = vector.broadcast %cst_11 : f32 to vector<256x128xf32>
    %18 = arith.addf %17, %16 : vector<256x128xf32>
    %19 = arith.divf %17, %18 : vector<256x128xf32>
    %cst_12 = arith.constant 8.000000e+00 : f32
    %20 = vector.broadcast %cst_12 : f32 to vector<256x128xf32>
    %21 = arith.mulf %19, %20 : vector<256x128xf32>
    %c16_i32 = arith.constant 16 : i32
    %22 = vector.broadcast %c16_i32 : i32 to vector<256x128xi32>
    %23 = arith.cmpi eq, %1, %22 : vector<256x128xi32>
    %c0_13 = arith.constant 0 : index
    %c0_14 = arith.constant 0 : index
    %24 = vector.load %arg2[%c0_13, %c0_14] : memref<256x1xf32, #tpu.memory_space<vmem>>, vector<256x1xf32>
    %25 = vector.broadcast %24 : vector<256x1xf32> to vector<256x128xf32>
    %26 = arith.subf %21, %25 : vector<256x128xf32>
    %cst_15 = arith.constant 0.000000e+00 : f32
    %27 = vector.broadcast %cst_15 : f32 to vector<256x128xf32>
    %28 = arith.select %23, %26, %27 : vector<256x128xi1>, vector<256x128xf32>
    %29 = math.absf %28 : vector<256x128xf32>
    %30 = vector.shape_cast %29 : vector<256x128xf32> to vector<1x256x128xf32>
    %cst_16 = arith.constant dense<0.000000e+00> : vector<1xf32>
    %31 = vector.multi_reduction <add>, %30, %cst_16 [1, 2] : vector<1x256x128xf32> to vector<1xf32>
    %32 = vector.shape_cast %31 : vector<1xf32> to vector<1x1x1xf32>
    %33 = vector.extract %32[0, 0, 0] : f32 from vector<1x1x1xf32>
    %c0_17 = arith.constant 0 : index
    %c0_18 = arith.constant 0 : index
    %34 = vector.load %arg7[%c0_17, %c0_18] : memref<128x128xbf16, #tpu.memory_space<vmem>>, vector<128x128xbf16>
    %cst_19 = arith.constant dense<0.000000e+00> : vector<256x128xf32>
    %35 = tpu.matmul %9, %34, %cst_19 {dimension_numbers = #tpu.dot_dimension_numbers<[1], [0], [0], [1], [0, 0, 1, 1], [], []>} : vector<256x128xbf16>, vector<128x128xbf16>, vector<256x128xf32> -> vector<256x128xf32>
    %c0_20 = arith.constant 0 : index
    %c0_21 = arith.constant 0 : index
    %36 = vector.load %arg8[%c0_20, %c0_21] : memref<1x128xf32, #tpu.memory_space<vmem>>, vector<1x128xf32>
    %37 = vector.broadcast %36 : vector<1x128xf32> to vector<256x128xf32>
    %38 = arith.addf %35, %37 : vector<256x128xf32>
    %cst_22 = arith.constant 0.000000e+00 : f32
    %39 = vector.broadcast %cst_22 : f32 to vector<256x128xf32>
    %40 = arith.maximumf %38, %39 : vector<256x128xf32>
    %41 = arith.truncf %40 : vector<256x128xf32> to vector<256x128xbf16>
    %c0_23 = arith.constant 0 : index
    %c0_24 = arith.constant 0 : index
    %42 = vector.load %arg9[%c0_23, %c0_24] : memref<128x128xbf16, #tpu.memory_space<vmem>>, vector<128x128xbf16>
    %cst_25 = arith.constant dense<0.000000e+00> : vector<256x128xf32>
    %43 = tpu.matmul %41, %42, %cst_25 {dimension_numbers = #tpu.dot_dimension_numbers<[1], [0], [0], [1], [0, 0, 1, 1], [], []>} : vector<256x128xbf16>, vector<128x128xbf16>, vector<256x128xf32> -> vector<256x128xf32>
    %c0_26 = arith.constant 0 : index
    %c0_27 = arith.constant 0 : index
    %44 = vector.load %arg10[%c0_26, %c0_27] : memref<1x128xf32, #tpu.memory_space<vmem>>, vector<1x128xf32>
    %45 = vector.broadcast %44 : vector<1x128xf32> to vector<256x128xf32>
    %46 = arith.addf %43, %45 : vector<256x128xf32>
    %cst_28 = arith.constant dense<0xFF800000> : vector<256xf32>
    %47 = vector.multi_reduction <maximumf>, %46, %cst_28 [1] : vector<256x128xf32> to vector<256xf32>
    %48 = vector.shape_cast %47 : vector<256xf32> to vector<256x1xf32>
    %49 = vector.broadcast %48 : vector<256x1xf32> to vector<256x128xf32>
    %50 = arith.subf %46, %49 : vector<256x128xf32>
    %51 = math.exp %50 : vector<256x128xf32>
    %cst_29 = arith.constant dense<0.000000e+00> : vector<256xf32>
    %52 = vector.multi_reduction <add>, %51, %cst_29 [1] : vector<256x128xf32> to vector<256xf32>
    %53 = vector.shape_cast %52 : vector<256xf32> to vector<256x1xf32>
    %54 = math.log %53 : vector<256x1xf32>
    %55 = arith.addf %48, %54 : vector<256x1xf32>
    %56 = vector.extract_strided_slice %46 {offsets = [0, 0], sizes = [256, 1], strides = [1, 1]} : vector<256x128xf32> to vector<256x1xf32>
    %57 = arith.subf %55, %56 : vector<256x1xf32>
    %58 = vector.shape_cast %57 : vector<256x1xf32> to vector<1x256x1xf32>
    %cst_30 = arith.constant dense<0.000000e+00> : vector<1xf32>
    %59 = vector.multi_reduction <add>, %58, %cst_30 [1, 2] : vector<1x256x1xf32> to vector<1xf32>
    %60 = vector.shape_cast %59 : vector<1xf32> to vector<1x1x1xf32>
    %61 = vector.extract %60[0, 0, 0] : f32 from vector<1x1x1xf32>
    %c16_i32_31 = arith.constant 16 : i32
    %62 = vector.broadcast %c16_i32_31 : i32 to vector<256x128xi32>
    %63 = arith.cmpi slt, %1, %62 : vector<256x128xi32>
    %cst_32 = arith.constant 0.000000e+00 : f32
    %64 = vector.broadcast %cst_32 : f32 to vector<256x128xf32>
    %65 = arith.select %63, %46, %64 : vector<256x128xi1>, vector<256x128xf32>
    %c16_i32_33 = arith.constant 16 : i32
    %66 = vector.broadcast %c16_i32_33 : i32 to vector<256x128xi32>
    %67 = arith.cmpi eq, %1, %66 : vector<256x128xi32>
    %cst_34 = arith.constant 0.000000e+00 : f32
    %68 = vector.broadcast %cst_34 : f32 to vector<256x128xf32>
    %69 = arith.select %67, %21, %68 : vector<256x128xi1>, vector<256x128xf32>
    %70 = arith.addf %65, %69 : vector<256x128xf32>
    %71 = arith.addf %70, %8 : vector<256x128xf32>
    %72 = arith.truncf %71 : vector<256x128xf32> to vector<256x128xbf16>
    %c0_35 = arith.constant 0 : index
    %c0_36 = arith.constant 0 : index
    %73 = vector.load %arg11[%c0_35, %c0_36] : memref<256x128xbf16, #tpu.memory_space<vmem>>, vector<256x128xbf16>
    tpu.vector_store %arg11[%c0_35, %c0_36], %72 {strides = array<i32>} : memref<256x128xbf16, #tpu.memory_space<vmem>>, vector<256x128xbf16>,
    %74 = tpu.iota {dimensions = array<i32: 0>} : vector<8x128xi32>
    %75 = tpu.iota {dimensions = array<i32: 1>} : vector<8x128xi32>
    %c0_i32 = arith.constant 0 : i32
    %76 = vector.broadcast %c0_i32 : i32 to vector<8x128xi32>
    %77 = arith.cmpi eq, %74, %76 : vector<8x128xi32>
    %c0_i32_37 = arith.constant 0 : i32
    %78 = vector.broadcast %c0_i32_37 : i32 to vector<8x128xi32>
    %79 = arith.cmpi eq, %75, %78 : vector<8x128xi32>
    %80 = arith.andi %77, %79 : vector<8x128xi1>
    %c0_i32_38 = arith.constant 0 : i32
    %81 = vector.broadcast %c0_i32_38 : i32 to vector<8x128xi32>
    %82 = arith.cmpi eq, %74, %81 : vector<8x128xi32>
    %c1_i32 = arith.constant 1 : i32
    %83 = vector.broadcast %c1_i32 : i32 to vector<8x128xi32>
    %84 = arith.cmpi eq, %75, %83 : vector<8x128xi32>
    %85 = arith.andi %82, %84 : vector<8x128xi1>
    %cst_39 = arith.constant 0.000000e+00 : f32
    %86 = vector.broadcast %61 : f32 to vector<8x128xf32>
    %87 = vector.broadcast %cst_39 : f32 to vector<8x128xf32>
    %88 = arith.select %85, %86, %87 : vector<8x128xi1>, vector<8x128xf32>
    %89 = vector.broadcast %33 : f32 to vector<8x128xf32>
    %90 = arith.select %80, %89, %88 : vector<8x128xi1>, vector<8x128xf32>
    %c0_40 = arith.constant 0 : index
    %c0_41 = arith.constant 0 : index
    %91 = vector.load %arg12[%c0_40, %c0_41] : memref<8x128xf32, #tpu.memory_space<vmem>>, vector<8x128xf32>
    tpu.vector_store %arg12[%c0_40, %c0_41], %90 {strides = array<i32>} : memref<8x128xf32, #tpu.memory_space<vmem>>, vector<8x128xf32>,
    return
  }
  func.func @transform_0(%arg0: i32) -> (i32, i32) {
    %c0_i32 = arith.constant 0 : i32
    %c0_i32_0 = arith.constant 0 : i32
    return %arg0, %c0_i32 : i32, i32
  }
  func.func @transform_1(%arg0: i32) -> (i32, i32) {
    %c0_i32 = arith.constant 0 : i32
    %c0_i32_0 = arith.constant 0 : i32
    return %arg0, %c0_i32 : i32, i32
  }
  func.func @transform_2(%arg0: i32) -> (i32, i32) {
    %c0_i32 = arith.constant 0 : i32
    %c0_i32_0 = arith.constant 0 : i32
    %c0_i32_1 = arith.constant 0 : i32
    return %c0_i32, %c0_i32_0 : i32, i32
  }
  func.func @transform_3(%arg0: i32) -> (i32, i32) {
    %c0_i32 = arith.constant 0 : i32
    %c0_i32_0 = arith.constant 0 : i32
    %c0_i32_1 = arith.constant 0 : i32
    return %c0_i32, %c0_i32_0 : i32, i32
  }
  func.func @transform_4(%arg0: i32) -> (i32, i32) {
    %c0_i32 = arith.constant 0 : i32
    %c0_i32_0 = arith.constant 0 : i32
    %c0_i32_1 = arith.constant 0 : i32
    return %c0_i32, %c0_i32_0 : i32, i32
  }
  func.func @transform_5(%arg0: i32) -> (i32, i32) {
    %c0_i32 = arith.constant 0 : i32
    %c0_i32_0 = arith.constant 0 : i32
    %c0_i32_1 = arith.constant 0 : i32
    return %c0_i32, %c0_i32_0 : i32, i32
  }
  func.func @transform_6(%arg0: i32) -> (i32, i32) {
    %c0_i32 = arith.constant 0 : i32
    %c0_i32_0 = arith.constant 0 : i32
    %c0_i32_1 = arith.constant 0 : i32
    return %c0_i32, %c0_i32_0 : i32, i32
  }
  func.func @transform_7(%arg0: i32) -> (i32, i32) {
    %c0_i32 = arith.constant 0 : i32
    %c0_i32_0 = arith.constant 0 : i32
    %c0_i32_1 = arith.constant 0 : i32
    return %c0_i32, %c0_i32_0 : i32, i32
  }
  func.func @transform_8(%arg0: i32) -> (i32, i32) {
    %c0_i32 = arith.constant 0 : i32
    %c0_i32_0 = arith.constant 0 : i32
    %c0_i32_1 = arith.constant 0 : i32
    return %c0_i32, %c0_i32_0 : i32, i32
  }
  func.func @transform_9(%arg0: i32) -> (i32, i32) {
    %c0_i32 = arith.constant 0 : i32
    %c0_i32_0 = arith.constant 0 : i32
    %c0_i32_1 = arith.constant 0 : i32
    return %c0_i32, %c0_i32_0 : i32, i32
  }
  func.func @transform_10(%arg0: i32) -> (i32, i32) {
    %c0_i32 = arith.constant 0 : i32
    %c0_i32_0 = arith.constant 0 : i32
    return %arg0, %c0_i32 : i32, i32
  }
  func.func @transform_11(%arg0: i32) -> (i32, i32) {
    %c0_i32 = arith.constant 0 : i32
    %c0_i32_0 = arith.constant 0 : i32
    return %arg0, %c0_i32 : i32, i32
  }
}

</mosaic_0001>

<llo_original>
// kernel: panoptic_forward.4
$region0: #{panoptic_forward.4}
  #allocation0 [shape = 'u32[]', space=smem, size = 0x4, offset = 0x4, fixed_abs, tag = 'smem constant byte address 0x4 - core index']
  #allocation1 [shape = 'u32[144,128]{1,0:T(1,128)}', space=vmem, size = 0x12000, scoped, tag = 'internal scratch']
  %s0 = inlined_call_operand.vmem [shape: bf16[512,32], index: 0, kind: input, shape index: {}]
  %s1 = inlined_call_operand.hbm [shape: bf16[32,128], index: 1, kind: input, shape index: {}]
  %s2 = inlined_call_operand.hbm [shape: f32[1,128], index: 2, kind: input, shape index: {}]
  %s3 = inlined_call_operand.vmem [shape: bf16[512,128], index: 3, kind: output, shape index: {}]
  %s4 = sld [smem:[#allocation0]]
  $region53: #{panoptic_forward.4} parent=0
    _
  %s6 = ssub.s32 1, %s4
  %s7 = scalar_select 0, %s6, %s4
  $region1: #{panoptic_forward.4} parent=0
    #allocation2 [shape = 'u8[8192]{0}', space=vmem, size = 0x2000, scoped, tag = 'input window, operand 1, single buffered']
    #allocation3 [shape = 's32[2]{0}', space=sflag, size = 0x8, scoped, tag = 'scoped memory for panoptic_forward.4']
    #allocation4 [shape = 'u8[512]{0}', space=vmem, size = 0x400, scoped, tag = 'input window, operand 2, single buffered']
    #allocation5 [shape = 's32[1]{0}', space=sflag, size = 0x4, scoped, tag = 'scoped memory for panoptic_forward.4']
    %8 = vsyncpa [#allocation3], 0
    %9 = vsyncpa [#allocation5], 0
    loop: start=0, step=1, limit=4
    $region2: #{panoptic_forward.4} parent=1 // loop_pre_header
      _
    $region3: #{panoptic_forward.4} parent=1 // loop_header
      %s11 = sphi 0, %s15
      %p12 = scmp.ge.s32.totalorder %s11, 4
      %s21 = sphi 0, %s23
      %s24 = sphi 0, %s21
      %s25 = sphi 0, %s24
      %s41 = sphi 0, %s25
      %s45 = sphi 0, %s45
      %s47 = sphi 0, %s45
      %s48 = sphi 0, %s47
      %s62 = sphi 0, %s48
      %s66 = sphi 0, %s66
      %s68 = sphi 0, %s66
      %s69 = sphi 0, %s68
      %s83 = sphi 0, %s69
      %s89 = sphi 0, %s91
      %s92 = sphi 0, %s89
      %s93 = sphi 0, %s92
      %s109 = sphi 0, %s93
    $region4: #{panoptic_forward.4} parent=1 // loop_header_branch
      %14 = sbr.rel (%p12) target = $region8
    $region5: #{panoptic_forward.4} parent=1 // loop_body
      %s16 = ssub.s32 %s11, 1
      %s17 = ssub.s32 %s11, 2
      %s18 = sadd.s32 %s11, 1
      %s19 = ssub.s32 %s11, %s18
      %p20 = scmp.eq.s32.totalorder %s19, 0
      %s22 = sadd.s32 %s21, 1
      %s23 = scalar_select %p20, %s21, %s22
      %p26 = pneg %p20
      %p27 = scmp.eq.s32.totalorder %s11, 1
      %p28 = por %p26, %p27
      %p29 = scmp.ne.s32.totalorder %s21, %s24
      %p30 = scmp.eq.s32.totalorder %s11, 0
      %p31 = por %p29, %p30
      %p32 = scmp.ne.s32.totalorder %s21, %s24
      %p33 = scmp.eq.s32.totalorder %s16, 1
      %p34 = por %p32, %p33
      %p35 = scmp.ne.s32.totalorder %s24, %s25
      %p36 = scmp.eq.s32.totalorder %s16, 0
      %p37 = por %p35, %p36
      %p38 = scmp.ne.s32.totalorder %s24, %s25
      %p39 = scmp.eq.s32.totalorder %s17, 1
      %p40 = por %p38, %p39
      %p42 = scmp.ne.s32.totalorder %s25, %s41
      %p43 = scmp.eq.s32.totalorder %s17, 0
      %p44 = por %p42, %p43
      %s46 = sadd.s32 %s45, 1
      %p49 = scmp.eq.s32.totalorder %s11, 1
      %p50 = scmp.ne.s32.totalorder %s45, %s47
      %p51 = scmp.eq.s32.totalorder %s11, 0
      %p52 = por %p50, %p51
      %p53 = scmp.ne.s32.totalorder %s45, %s47
      %p54 = scmp.eq.s32.totalorder %s16, 1
      %p55 = por %p53, %p54
      %p56 = scmp.ne.s32.totalorder %s47, %s48
      %p57 = scmp.eq.s32.totalorder %s16, 0
      %p58 = por %p56, %p57
      %p59 = scmp.ne.s32.totalorder %s47, %s48
      %p60 = scmp.eq.s32.totalorder %s17, 1
      %p61 = por %p59, %p60
      %p63 = scmp.ne.s32.totalorder %s48, %s62
      %p64 = scmp.eq.s32.totalorder %s17, 0
      %p65 = por %p63, %p64
      %s67 = sadd.s32 %s66, 1
      %p70 = scmp.eq.s32.totalorder %s11, 1
      %p71 = scmp.ne.s32.totalorder %s66, %s68
      %p72 = scmp.eq.s32.totalorder %s11, 0
      %p73 = por %p71, %p72
      %p74 = scmp.ne.s32.totalorder %s66, %s68
      %p75 = scmp.eq.s32.totalorder %s16, 1
      %p76 = por %p74, %p75
      %p77 = scmp.ne.s32.totalorder %s68, %s69
      %p78 = scmp.eq.s32.totalorder %s16, 0
      %p79 = por %p77, %p78
      %p80 = scmp.ne.s32.totalorder %s68, %s69
      %p81 = scmp.eq.s32.totalorder %s17, 1
      %p82 = por %p80, %p81
      %p84 = scmp.ne.s32.totalorder %s69, %s83
      %p85 = scmp.eq.s32.totalorder %s17, 0
      %p86 = por %p84, %p85
      %s87 = ssub.s32 %s11, %s18
      %p88 = scmp.eq.s32.totalorder %s87, 0
      %s90 = sadd.s32 %s89, 1
      %s91 = scalar_select %p88, %s89, %s90
      %p94 = pneg %p88
      %p95 = scmp.eq.s32.totalorder %s11, 1
      %p96 = por %p94, %p95
      %p97 = scmp.ne.s32.totalorder %s89, %s92
      %p98 = scmp.eq.s32.totalorder %s11, 0
      %p99 = por %p97, %p98
      %p100 = scmp.ne.s32.totalorder %s89, %s92
      %p101 = scmp.eq.s32.totalorder %s16, 1
      %p102 = por %p100, %p101
      %p103 = scmp.ne.s32.totalorder %s92, %s93
      %p104 = scmp.eq.s32.totalorder %s16, 0
      %p105 = por %p103, %p104
      %p106 = scmp.ne.s32.totalorder %s92, %s93
      %p107 = scmp.eq.s32.totalorder %s17, 1
      %p108 = por %p106, %p107
      %p110 = scmp.ne.s32.totalorder %s93, %s109
      %p111 = scmp.eq.s32.totalorder %s17, 0
      %p112 = por %p110, %p111
      %p113 = scmp.le.s32.totalorder 1, %s11
      %p114 = scmp.lt.s32.totalorder %s11, 3
      %p115 = pnand %p113, %p114
      %p116 = pneg %p115
      // Predicated region
      $region9: #{panoptic_forward.4} parent=5 // pred_check
        _
      $region10: #{panoptic_forward.4} parent=5 // pred_check_branch
        %118 = sbr.rel (%p115) target = $region12
      $region11: #{panoptic_forward.4} parent=5 // pred_region
        %s119 = ssub.s32 %s11, 1
        // Predicated region
        $region13: #{panoptic_forward.4} parent=11 // pred_check
          %p120 = pneg %p58
        $region14: #{panoptic_forward.4} parent=11 // pred_check_branch
          %122 = sbr.rel (%p120) target = $region16
        $region15: #{panoptic_forward.4} parent=11 // pred_region
          %s124 = ssub.s32 256, 256
          %125 = vsyncadd [#allocation3], %s124
          %s126 = sshll.u32 [#allocation2], 4
          %s127 = int_to_ptr.vmem [resolvable:$true] %s126
          %132 = dma.hbm_to_vmem [thread:$0]  %s1, 256, %s127, [#allocation3], 64, 64, 4
        $region16: #{panoptic_forward.4} parent=11 // pred_fallthru
          _
        // Predicated region
        $region17: #{panoptic_forward.4} parent=11 // pred_check
          %p133 = pneg %p79
        $region18: #{panoptic_forward.4} parent=11 // pred_check_branch
          %135 = sbr.rel (%p133) target = $region20
        $region19: #{panoptic_forward.4} parent=11 // pred_region
          %s137 = ssub.s32 16, 16
          %138 = vsyncadd [#allocation5], %s137
          %s140 = sshll.u32 [#allocation4], 4
          %s141 = int_to_ptr.vmem [resolvable:$true] %s140
          %143 = dma.hbm_to_vmem [thread:$0]  %s2, 16, %s141, [#allocation5]
        $region20: #{panoptic_forward.4} parent=11 // pred_fallthru
          _
      $region12: #{panoptic_forward.4} parent=5 // pred_fallthru
        _
      %p144 = scmp.lt.s32.totalorder %s11, 2
      // Predicated region
      $region21: #{panoptic_forward.4} parent=5 // pred_check
        %p145 = pneg %p144
      $region22: #{panoptic_forward.4} parent=5 // pred_check_branch
        %147 = sbr.rel (%p145) target = $region24
      $region23: #{panoptic_forward.4} parent=5 // pred_region
        // Predicated region
        $region25: #{panoptic_forward.4} parent=23 // pred_check
          %p148 = pneg %p31
        $region26: #{panoptic_forward.4} parent=23 // pred_check_branch
          %150 = sbr.rel (%p148) target = $region28
        $region27: #{panoptic_forward.4} parent=23 // pred_region
          %s151 = smul.u32 32, %s11
          %p152 = scmp.lt.s32.totalorder %s151, 63
          %s153 = scalar_select %p152, %s151, 63
          %s154 = smul.addr %s153, 4
          %s155 = scalar_lea.vmem %s0, %s154
          %s156 = smul.u32 32, %s11
        $region28: #{panoptic_forward.4} parent=23 // pred_fallthru
          _
      $region24: #{panoptic_forward.4} parent=5 // pred_fallthru
        _
      %p157 = scmp.le.s32.totalorder 1, %s11
      %p158 = scmp.lt.s32.totalorder %s11, 3
      %p159 = pnand %p157, %p158
      %p160 = pneg %p159
      // Predicated region
      $region29: #{panoptic_forward.4} parent=5 // pred_check
        _
      $region30: #{panoptic_forward.4} parent=5 // pred_check_branch
        %162 = sbr.rel (%p159) target = $region32
      $region31: #{panoptic_forward.4} parent=5 // pred_region
        %s163 = ssub.s32 %s11, 1
        // Predicated region
        $region33: #{panoptic_forward.4} parent=31 // pred_check
          %p164 = pneg %p58
        $region34: #{panoptic_forward.4} parent=31 // pred_check_branch
          %166 = sbr.rel (%p164) target = $region36
        $region35: #{panoptic_forward.4} parent=31 // pred_region
          %167 = dma.done [#allocation3], 256
        $region36: #{panoptic_forward.4} parent=31 // pred_fallthru
          _
        // Predicated region
        $region37: #{panoptic_forward.4} parent=31 // pred_check
          %p168 = pneg %p79
        $region38: #{panoptic_forward.4} parent=31 // pred_check_branch
          %170 = sbr.rel (%p168) target = $region40
        $region39: #{panoptic_forward.4} parent=31 // pred_region
          %171 = dma.done [#allocation5], 16
        $region40: #{panoptic_forward.4} parent=31 // pred_fallthru
          _
        %s172 = smul.u32 32, %s16
        %p173 = scmp.lt.s32.totalorder %s172, 63
        %s174 = scalar_select %p173, %s172, 63
        %s175 = smul.addr %s174, 4
        %s176 = scalar_lea.vmem %s0, %s175
        %p177 = pneg %p37
        %p178 = pneg %p34
        %p179 = pneg %p58
        %p180 = pneg %p55
        %p181 = pneg %p79
        %p182 = pneg %p76
        %p183 = pneg %p105
        %p184 = pneg %p102
        %s185 = smul.u32 32, %s16
        %p186 = scmp.lt.s32.totalorder %s185, 63
        %s187 = scalar_select %p186, %s185, 63
        %s188 = smul.addr %s187, 4
        %s189 = scalar_lea.vmem %s3, %s188
        %s190 = smul.u32 32, %s16
        %p191 = scmp.lt.s32.totalorder %s190, 63
        %s192 = scalar_select %p191, %s190, 63
        %s193 = smul.addr %s192, 4
        %s194 = scalar_lea.vmem %s0, %s193
        %s195 = smul.u32 32, %s16
        %s196 = smul.u32 32, %s16
        %p197 = scmp.lt.s32.totalorder %s196, 63
        %s198 = scalar_select %p197, %s196, 63
        %s199 = smul.addr %s198, 4
        %s200 = scalar_lea.vmem %s3, %s199
        %s201 = smul.u32 32, %s16
        %v203 = vld [vmem:[%s194] sm:$0xf]
        %v204 = vld [vmem:[%s194 + $0x4] sm:$0xf]
        %v205 = vld [vmem:[%s194 + $0x8] sm:$0xf]
        %v206 = vld [vmem:[%s194 + $0xc] sm:$0xf]
        %v207 = vld [vmem:[%s194 + $0x10] sm:$0xf]
        %v208 = vld [vmem:[%s194 + $0x14] sm:$0xf]
        %v209 = vld [vmem:[%s194 + $0x18] sm:$0xf]
        %v210 = vld [vmem:[%s194 + $0x1c] sm:$0xf]
        %v211 = vld [vmem:[%s194 + $0x20] sm:$0xf]
        %v212 = vld [vmem:[%s194 + $0x24] sm:$0xf]
        %v213 = vld [vmem:[%s194 + $0x28] sm:$0xf]
        %v214 = vld [vmem:[%s194 + $0x2c] sm:$0xf]
        %v215 = vld [vmem:[%s194 + $0x30] sm:$0xf]
        %v216 = vld [vmem:[%s194 + $0x34] sm:$0xf]
        %v217 = vld [vmem:[%s194 + $0x38] sm:$0xf]
        %v218 = vld [vmem:[%s194 + $0x3c] sm:$0xf]
        %v219 = vld [vmem:[%s194 + $0x40] sm:$0xf]
        %v220 = vld [vmem:[%s194 + $0x44] sm:$0xf]
        %v221 = vld [vmem:[%s194 + $0x48] sm:$0xf]
        %v222 = vld [vmem:[%s194 + $0x4c] sm:$0xf]
        %v223 = vld [vmem:[%s194 + $0x50] sm:$0xf]
        %v224 = vld [vmem:[%s194 + $0x54] sm:$0xf]
        %v225 = vld [vmem:[%s194 + $0x58] sm:$0xf]
        %v226 = vld [vmem:[%s194 + $0x5c] sm:$0xf]
        %v227 = vld [vmem:[%s194 + $0x60] sm:$0xf]
        %v228 = vld [vmem:[%s194 + $0x64] sm:$0xf]
        %v229 = vld [vmem:[%s194 + $0x68] sm:$0xf]
        %v230 = vld [vmem:[%s194 + $0x6c] sm:$0xf]
        %v231 = vld [vmem:[%s194 + $0x70] sm:$0xf]
        %v232 = vld [vmem:[%s194 + $0x74] sm:$0xf]
        %v233 = vld [vmem:[%s194 + $0x78] sm:$0xf]
        %v234 = vld [vmem:[%s194 + $0x7c] sm:$0xf]
        %v235 = vld [vmem:[#allocation2] sm:$0xf]
        %v236 = vld [vmem:[#allocation2 + $0x4] sm:$0xf]
        %v237 = vld [vmem:[#allocation2 + $0x8] sm:$0xf]
        %v238 = vld [vmem:[#allocation2 + $0xc] sm:$0xf]
        %v239 = vld [vmem:[#allocation4] sm:$0x1]
        %v241 = vlaneseq
        %v242 = vshrl.u32 %v241, 7
        %v243 = vsub.s32 0, %v242
        %v244 = vrot.slane %v239, %v243
        %v278 = vunpack.c.l.b16 %v203
        %v279 = vunpack.c.l.b16 %v204
        %v280 = vunpack.c.l.b16 %v205
        %v281 = vunpack.c.l.b16 %v206
        %v282 = vunpack.c.l.b16 %v207
        %v283 = vunpack.c.l.b16 %v208
        %v284 = vunpack.c.l.b16 %v209
        %v285 = vunpack.c.l.b16 %v210
        %v286 = vunpack.c.l.b16 %v211
        %v287 = vunpack.c.l.b16 %v212
        %v288 = vunpack.c.l.b16 %v213
        %v289 = vunpack.c.l.b16 %v214
        %v290 = vunpack.c.l.b16 %v215
        %v291 = vunpack.c.l.b16 %v216
        %v292 = vunpack.c.l.b16 %v217
        %v293 = vunpack.c.l.b16 %v218
        %v294 = vunpack.c.l.b16 %v219
        %v295 = vunpack.c.l.b16 %v220
        %v296 = vunpack.c.l.b16 %v221
        %v297 = vunpack.c.l.b16 %v222
        %v298 = vunpack.c.l.b16 %v223
        %v299 = vunpack.c.l.b16 %v224
        %v300 = vunpack.c.l.b16 %v225
        %v301 = vunpack.c.l.b16 %v226
        %v302 = vunpack.c.l.b16 %v227
        %v303 = vunpack.c.l.b16 %v228
        %v304 = vunpack.c.l.b16 %v229
        %v305 = vunpack.c.l.b16 %v230
        %v306 = vunpack.c.l.b16 %v231
        %v307 = vunpack.c.l.b16 %v232
        %v308 = vunpack.c.l.b16 %v233
        %v309 = vunpack.c.l.b16 %v234
        %v310 = vpack.c.b16 %v279, %v278
        %v311 = vpack.c.b16 %v281, %v280
        %v312 = vpack.c.b16 %v283, %v282
        %v313 = vpack.c.b16 %v285, %v284
        %v314 = vpack.c.b16 %v287, %v286
        %v315 = vpack.c.b16 %v289, %v288
        %v316 = vpack.c.b16 %v291, %v290
        %v317 = vpack.c.b16 %v293, %v292
        %v318 = vpack.c.b16 %v295, %v294
        %v319 = vpack.c.b16 %v297, %v296
        %v320 = vpack.c.b16 %v299, %v298
        %v321 = vpack.c.b16 %v301, %v300
        %v322 = vpack.c.b16 %v303, %v302
        %v323 = vpack.c.b16 %v305, %v304
        %v324 = vpack.c.b16 %v307, %v306
        %v325 = vpack.c.b16 %v309, %v308
        %v330 = vunpack.c.l.b16 %v235
        %v331 = vunpack.c.l.b16 %v236
        %v332 = vunpack.c.l.b16 %v237
        %v333 = vunpack.c.l.b16 %v238
        %v334 = vpack.c.b16 %v331, %v330
        %v335 = vpack.c.b16 %v333, %v332
        %vm338 = vcmask 261120
        %v340 = vsel %vm338, %v310, 0
        %v343 = vsel %vm338, %v311, 0
        %v346 = vsel %vm338, %v312, 0
        %v349 = vsel %vm338, %v313, 0
        %v352 = vsel %vm338, %v314, 0
        %v355 = vsel %vm338, %v315, 0
        %v358 = vsel %vm338, %v316, 0
        %v361 = vsel %vm338, %v317, 0
        %v364 = vsel %vm338, %v318, 0
        %v367 = vsel %vm338, %v319, 0
        %v370 = vsel %vm338, %v320, 0
        %v373 = vsel %vm338, %v321, 0
        %v376 = vsel %vm338, %v322, 0
        %v379 = vsel %vm338, %v323, 0
        %v382 = vsel %vm338, %v324, 0
        %v385 = vsel %vm338, %v325, 0
        %387 = vmatprep.subr.bf16.mxu0 0
        %388 = vmatpush1.bf16.msra.mxu0 %v334
        %389 = vmatprep.subr.bf16.mxu0 0
        %390 = vmatpush1.bf16.msra.mxu0 %v335
        %391 = vmatprep.subr.bf16.mxu0 0
        %392 = vmatpush1.bf16.msra.mxu0 0
        %393 = vmatprep.subr.bf16.mxu0 0
        %394 = vmatpush1.bf16.msra.mxu0 0
        %395 = vmatprep.subr.bf16.mxu0 0
        %396 = vmatpush1.bf16.msra.mxu0 0
        %397 = vmatprep.subr.bf16.mxu0 0
        %398 = vmatpush1.bf16.msra.mxu0 0
        %399 = vmatprep.subr.bf16.mxu0 0
        %400 = vmatpush1.bf16.msra.mxu0 0
        %401 = vmatprep.subr.bf16.mxu0 0
        %402 = vmatpush1.bf16.msra.mxu0 0
        %403 = vmatprep.subr.bf16.mxu0 0
        %404 = vmatpush1.bf16.msra.mxu0 0
        %405 = vmatprep.subr.bf16.mxu0 0
        %406 = vmatpush1.bf16.msra.mxu0 0
        %407 = vmatprep.subr.bf16.mxu0 0
        %408 = vmatpush1.bf16.msra.mxu0 0
        %409 = vmatprep.subr.bf16.mxu0 0
        %410 = vmatpush1.bf16.msra.mxu0 0
        %411 = vmatprep.subr.bf16.mxu0 0
        %412 = vmatpush1.bf16.msra.mxu0 0
        %413 = vmatprep.subr.bf16.mxu0 0
        %414 = vmatpush1.bf16.msra.mxu0 0
        %415 = vmatprep.subr.bf16.mxu0 0
        %416 = vmatpush1.bf16.msra.mxu0 0
        %417 = vmatprep.subr.bf16.mxu0 0
        %418 = vmatpush1.bf16.msra.mxu0 0
        %419 = vmatprep.mubr.bf16.mxu0 0
        %420 = vmatmul.mubr.bf16.gmra.mrb[0].mxu0 %v340
        %v421 = vpop.f32.mrb[0].mxu0
        %v422 = vadd.f32 %v244, %v421
        %v423 = vpop.f32.mrb[0].mxu0
        %v424 = vpop.f32.mrb[0].mxu0
        %v425 = vadd.f32 %v244, %v424
        %v426 = vpop.f32.mrb[0].mxu0
        %427 = vmatprep.mubr.bf16.mxu0 0
        %428 = vmatmul.mubr.bf16.gmra.mrb[0].mxu0 %v343
        %v429 = vpop.f32.mrb[0].mxu0
        %v430 = vadd.f32 %v244, %v429
        %v431 = vpop.f32.mrb[0].mxu0
        %v432 = vpop.f32.mrb[0].mxu0
        %v433 = vadd.f32 %v244, %v432
        %v434 = vpop.f32.mrb[0].mxu0
        %435 = vmatprep.mubr.bf16.mxu0 0
        %436 = vmatmul.mubr.bf16.gmra.mrb[0].mxu0 %v346
        %v437 = vpop.f32.mrb[0].mxu0
        %v438 = vadd.f32 %v244, %v437
        %v439 = vpop.f32.mrb[0].mxu0
        %v440 = vpop.f32.mrb[0].mxu0
        %v441 = vadd.f32 %v244, %v440
        %v442 = vpop.f32.mrb[0].mxu0
        %443 = vmatprep.mubr.bf16.mxu0 0
        %444 = vmatmul.mubr.bf16.gmra.mrb[0].mxu0 %v349
        %v445 = vpop.f32.mrb[0].mxu0
        %v446 = vadd.f32 %v244, %v445
        %v447 = vpop.f32.mrb[0].mxu0
        %v448 = vpop.f32.mrb[0].mxu0
        %v449 = vadd.f32 %v244, %v448
        %v450 = vpop.f32.mrb[0].mxu0
        %451 = vmatprep.mubr.bf16.mxu0 0
        %452 = vmatmul.mubr.bf16.gmra.mrb[0].mxu0 %v352
        %v453 = vpop.f32.mrb[0].mxu0
        %v454 = vadd.f32 %v244, %v453
        %v455 = vpop.f32.mrb[0].mxu0
        %v456 = vpop.f32.mrb[0].mxu0
        %v457 = vadd.f32 %v244, %v456
        %v458 = vpop.f32.mrb[0].mxu0
        %459 = vmatprep.mubr.bf16.mxu0 0
        %460 = vmatmul.mubr.bf16.gmra.mrb[0].mxu0 %v355
        %v461 = vpop.f32.mrb[0].mxu0
        %v462 = vadd.f32 %v244, %v461
        %v463 = vpop.f32.mrb[0].mxu0
        %v464 = vpop.f32.mrb[0].mxu0
        %v465 = vadd.f32 %v244, %v464
        %v466 = vpop.f32.mrb[0].mxu0
        %467 = vmatprep.mubr.bf16.mxu0 0
        %468 = vmatmul.mubr.bf16.gmra.mrb[0].mxu0 %v358
        %v469 = vpop.f32.mrb[0].mxu0
        %v470 = vadd.f32 %v244, %v469
        %v471 = vpop.f32.mrb[0].mxu0
        %v472 = vpop.f32.mrb[0].mxu0
        %v473 = vadd.f32 %v244, %v472
        %v474 = vpop.f32.mrb[0].mxu0
        %475 = vmatprep.mubr.bf16.mxu0 0
        %476 = vmatmul.mubr.bf16.gmra.mrb[0].mxu0 %v361
        %v477 = vpop.f32.mrb[0].mxu0
        %v478 = vadd.f32 %v244, %v477
        %v479 = vpop.f32.mrb[0].mxu0
        %v480 = vpop.f32.mrb[0].mxu0
        %v481 = vadd.f32 %v244, %v480
        %v482 = vpop.f32.mrb[0].mxu0
        %483 = vmatprep.mubr.bf16.mxu0 0
        %484 = vmatmul.mubr.bf16.gmra.mrb[0].mxu0 %v364
        %v485 = vpop.f32.mrb[0].mxu0
        %v486 = vadd.f32 %v244, %v485
        %v487 = vpop.f32.mrb[0].mxu0
        %v488 = vpop.f32.mrb[0].mxu0
        %v489 = vadd.f32 %v244, %v488
        %v490 = vpop.f32.mrb[0].mxu0
        %491 = vmatprep.mubr.bf16.mxu0 0
        %492 = vmatmul.mubr.bf16.gmra.mrb[0].mxu0 %v367
        %v493 = vpop.f32.mrb[0].mxu0
        %v494 = vadd.f32 %v244, %v493
        %v495 = vpop.f32.mrb[0].mxu0
        %v496 = vpop.f32.mrb[0].mxu0
        %v497 = vadd.f32 %v244, %v496
        %v498 = vpop.f32.mrb[0].mxu0
        %499 = vmatprep.mubr.bf16.mxu0 0
        %500 = vmatmul.mubr.bf16.gmra.mrb[0].mxu0 %v370
        %v501 = vpop.f32.mrb[0].mxu0
        %v502 = vadd.f32 %v244, %v501
        %v503 = vpop.f32.mrb[0].mxu0
        %v504 = vpop.f32.mrb[0].mxu0
        %v505 = vadd.f32 %v244, %v504
        %v506 = vpop.f32.mrb[0].mxu0
        %507 = vmatprep.mubr.bf16.mxu0 0
        %508 = vmatmul.mubr.bf16.gmra.mrb[0].mxu0 %v373
        %v509 = vpop.f32.mrb[0].mxu0
        %v510 = vadd.f32 %v244, %v509
        %v511 = vpop.f32.mrb[0].mxu0
        %v512 = vpop.f32.mrb[0].mxu0
        %v513 = vadd.f32 %v244, %v512
        %v514 = vpop.f32.mrb[0].mxu0
        %515 = vmatprep.mubr.bf16.mxu0 0
        %516 = vmatmul.mubr.bf16.gmra.mrb[0].mxu0 %v376
        %v517 = vpop.f32.mrb[0].mxu0
        %v518 = vadd.f32 %v244, %v517
        %v519 = vpop.f32.mrb[0].mxu0
        %v520 = vpop.f32.mrb[0].mxu0
        %v521 = vadd.f32 %v244, %v520
        %v522 = vpop.f32.mrb[0].mxu0
        %523 = vmatprep.mubr.bf16.mxu0 0
        %524 = vmatmul.mubr.bf16.gmra.mrb[0].mxu0 %v379
        %v525 = vpop.f32.mrb[0].mxu0
        %v526 = vadd.f32 %v244, %v525
        %v527 = vpop.f32.mrb[0].mxu0
        %v528 = vpop.f32.mrb[0].mxu0
        %v529 = vadd.f32 %v244, %v528
        %v530 = vpop.f32.mrb[0].mxu0
        %531 = vmatprep.mubr.bf16.mxu0 0
        %532 = vmatmul.mubr.bf16.gmra.mrb[0].mxu0 %v382
        %v533 = vpop.f32.mrb[0].mxu0
        %v534 = vadd.f32 %v244, %v533
        %v535 = vpop.f32.mrb[0].mxu0
        %v536 = vpop.f32.mrb[0].mxu0
        %v537 = vadd.f32 %v244, %v536
        %v538 = vpop.f32.mrb[0].mxu0
        %539 = vmatprep.mubr.bf16.mxu0 0
        %540 = vmatmul.mubr.bf16.gmra.mrb[0].mxu0 %v385
        %v541 = vpop.f32.mrb[0].mxu0
        %v542 = vadd.f32 %v244, %v541
        %v543 = vpop.f32.mrb[0].mxu0
        %v544 = vpop.f32.mrb[0].mxu0
        %v545 = vadd.f32 %v244, %v544
        %v546 = vpop.f32.mrb[0].mxu0
        %547 = vdwg.mxu0
        %v548 = vmax.f32 %v422, 0.0
        %v549 = vmax.f32 %v425, 0.0
        %v550 = vmax.f32 %v430, 0.0
        %v551 = vmax.f32 %v433, 0.0
        %v552 = vmax.f32 %v438, 0.0
        %v553 = vmax.f32 %v441, 0.0
        %v554 = vmax.f32 %v446, 0.0
        %v555 = vmax.f32 %v449, 0.0
        %v556 = vmax.f32 %v454, 0.0
        %v557 = vmax.f32 %v457, 0.0
        %v558 = vmax.f32 %v462, 0.0
        %v559 = vmax.f32 %v465, 0.0
        %v560 = vmax.f32 %v470, 0.0
        %v561 = vmax.f32 %v473, 0.0
        %v562 = vmax.f32 %v478, 0.0
        %v563 = vmax.f32 %v481, 0.0
        %v564 = vmax.f32 %v486, 0.0
        %v565 = vmax.f32 %v489, 0.0
        %v566 = vmax.f32 %v494, 0.0
        %v567 = vmax.f32 %v497, 0.0
        %v568 = vmax.f32 %v502, 0.0
        %v569 = vmax.f32 %v505, 0.0
        %v570 = vmax.f32 %v510, 0.0
        %v571 = vmax.f32 %v513, 0.0
        %v572 = vmax.f32 %v518, 0.0
        %v573 = vmax.f32 %v521, 0.0
        %v574 = vmax.f32 %v526, 0.0
        %v575 = vmax.f32 %v529, 0.0
        %v576 = vmax.f32 %v534, 0.0
        %v577 = vmax.f32 %v537, 0.0
        %v578 = vmax.f32 %v542, 0.0
        %v579 = vmax.f32 %v545, 0.0
        %v580 = vpack.c.bf16 %v549, %v548
        %v581 = vpack.c.bf16 %v551, %v550
        %v582 = vpack.c.bf16 %v553, %v552
        %v583 = vpack.c.bf16 %v555, %v554
        %v584 = vpack.c.bf16 %v557, %v556
        %v585 = vpack.c.bf16 %v559, %v558
        %v586 = vpack.c.bf16 %v561, %v560
        %v587 = vpack.c.bf16 %v563, %v562
        %v588 = vpack.c.bf16 %v565, %v564
        %v589 = vpack.c.bf16 %v567, %v566
        %v590 = vpack.c.bf16 %v569, %v568
        %v591 = vpack.c.bf16 %v571, %v570
        %v592 = vpack.c.bf16 %v573, %v572
        %v593 = vpack.c.bf16 %v575, %v574
        %v594 = vpack.c.bf16 %v577, %v576
        %v595 = vpack.c.bf16 %v579, %v578
        %v612 = vunpack.c.l.b16 %v580
        %v613 = vunpack.c.h.b16 %v580
        %v614 = vunpack.c.l.b16 %v581
        %v615 = vunpack.c.h.b16 %v581
        %v616 = vunpack.c.l.b16 %v582
        %v617 = vunpack.c.h.b16 %v582
        %v618 = vunpack.c.l.b16 %v583
        %v619 = vunpack.c.h.b16 %v583
        %v620 = vunpack.c.l.b16 %v584
        %v621 = vunpack.c.h.b16 %v584
        %v622 = vunpack.c.l.b16 %v585
        %v623 = vunpack.c.h.b16 %v585
        %v624 = vunpack.c.l.b16 %v586
        %v625 = vunpack.c.h.b16 %v586
        %v626 = vunpack.c.l.b16 %v587
        %v627 = vunpack.c.h.b16 %v587
        %v628 = vunpack.c.l.b16 %v588
        %v629 = vunpack.c.h.b16 %v588
        %v630 = vunpack.c.l.b16 %v589
        %v631 = vunpack.c.h.b16 %v589
        %v632 = vunpack.c.l.b16 %v590
        %v633 = vunpack.c.h.b16 %v590
        %v634 = vunpack.c.l.b16 %v591
        %v635 = vunpack.c.h.b16 %v591
        %v636 = vunpack.c.l.b16 %v592
        %v637 = vunpack.c.h.b16 %v592
        %v638 = vunpack.c.l.b16 %v593
        %v639 = vunpack.c.h.b16 %v593
        %v640 = vunpack.c.l.b16 %v594
        %v641 = vunpack.c.h.b16 %v594
        %v642 = vunpack.c.l.b16 %v595
        %v643 = vunpack.c.h.b16 %v595
        %v644 = vpack.c.b16 %v612, %v612
        %v645 = vpack.c.b16 %v613, %v613
        %v646 = vpack.c.b16 %v614, %v614
        %v647 = vpack.c.b16 %v615, %v615
        %v648 = vpack.c.b16 %v616, %v616
        %v649 = vpack.c.b16 %v617, %v617
        %v650 = vpack.c.b16 %v618, %v618
        %v651 = vpack.c.b16 %v619, %v619
        %v652 = vpack.c.b16 %v620, %v620
        %v653 = vpack.c.b16 %v621, %v621
        %v654 = vpack.c.b16 %v622, %v622
        %v655 = vpack.c.b16 %v623, %v623
        %v656 = vpack.c.b16 %v624, %v624
        %v657 = vpack.c.b16 %v625, %v625
        %v658 = vpack.c.b16 %v626, %v626
        %v659 = vpack.c.b16 %v627, %v627
        %v660 = vpack.c.b16 %v628, %v628
        %v661 = vpack.c.b16 %v629, %v629
        %v662 = vpack.c.b16 %v630, %v630
        %v663 = vpack.c.b16 %v631, %v631
        %v664 = vpack.c.b16 %v632, %v632
        %v665 = vpack.c.b16 %v633, %v633
        %v666 = vpack.c.b16 %v634, %v634
        %v667 = vpack.c.b16 %v635, %v635
        %v668 = vpack.c.b16 %v636, %v636
        %v669 = vpack.c.b16 %v637, %v637
        %v670 = vpack.c.b16 %v638, %v638
        %v671 = vpack.c.b16 %v639, %v639
        %v672 = vpack.c.b16 %v640, %v640
        %v673 = vpack.c.b16 %v641, %v641
        %v674 = vpack.c.b16 %v642, %v642
        %v675 = vpack.c.b16 %v643, %v643
        %708 = vst [vmem:[%s200] sm:$0xf] %v644
        %709 = vst [vmem:[%s200 + $0x4] sm:$0xf] %v645
        %710 = vst [vmem:[%s200 + $0x8] sm:$0xf] %v646
        %711 = vst [vmem:[%s200 + $0xc] sm:$0xf] %v647
        %712 = vst [vmem:[%s200 + $0x10] sm:$0xf] %v648
        %713 = vst [vmem:[%s200 + $0x14] sm:$0xf] %v649
        %714 = vst [vmem:[%s200 + $0x18] sm:$0xf] %v650
        %715 = vst [vmem:[%s200 + $0x1c] sm:$0xf] %v651
        %716 = vst [vmem:[%s200 + $0x20] sm:$0xf] %v652
        %717 = vst [vmem:[%s200 + $0x24] sm:$0xf] %v653
        %718 = vst [vmem:[%s200 + $0x28] sm:$0xf] %v654
        %719 = vst [vmem:[%s200 + $0x2c] sm:$0xf] %v655
        %720 = vst [vmem:[%s200 + $0x30] sm:$0xf] %v656
        %721 = vst [vmem:[%s200 + $0x34] sm:$0xf] %v657
        %722 = vst [vmem:[%s200 + $0x38] sm:$0xf] %v658
        %723 = vst [vmem:[%s200 + $0x3c] sm:$0xf] %v659
        %724 = vst [vmem:[%s200 + $0x40] sm:$0xf] %v660
        %725 = vst [vmem:[%s200 + $0x44] sm:$0xf] %v661
        %726 = vst [vmem:[%s200 + $0x48] sm:$0xf] %v662
        %727 = vst [vmem:[%s200 + $0x4c] sm:$0xf] %v663
        %728 = vst [vmem:[%s200 + $0x50] sm:$0xf] %v664
        %729 = vst [vmem:[%s200 + $0x54] sm:$0xf] %v665
        %730 = vst [vmem:[%s200 + $0x58] sm:$0xf] %v666
        %731 = vst [vmem:[%s200 + $0x5c] sm:$0xf] %v667
        %732 = vst [vmem:[%s200 + $0x60] sm:$0xf] %v668
        %733 = vst [vmem:[%s200 + $0x64] sm:$0xf] %v669
        %734 = vst [vmem:[%s200 + $0x68] sm:$0xf] %v670
        %735 = vst [vmem:[%s200 + $0x6c] sm:$0xf] %v671
        %736 = vst [vmem:[%s200 + $0x70] sm:$0xf] %v672
        %737 = vst [vmem:[%s200 + $0x74] sm:$0xf] %v673
        %738 = vst [vmem:[%s200 + $0x78] sm:$0xf] %v674
        %739 = vst [vmem:[%s200 + $0x7c] sm:$0xf] %v675
        %s740 = smul.u32 32, %s16
        %p741 = scmp.lt.s32.totalorder %s740, 63
        %s742 = scalar_select %p741, %s740, 63
        %s743 = smul.addr %s742, 4
        %s744 = scalar_lea.vmem %s3, %s743
        // Predicated region
        $region41: #{panoptic_forward.4} parent=31 // pred_check
          %p745 = pneg %p102
        $region42: #{panoptic_forward.4} parent=31 // pred_check_branch
          %747 = sbr.rel (%p745) target = $region44
        $region43: #{panoptic_forward.4} parent=31 // pred_region
          %s748 = smul.u32 32, %s16
        $region44: #{panoptic_forward.4} parent=31 // pred_fallthru
          _
      $region32: #{panoptic_forward.4} parent=5 // pred_fallthru
        _
      %p749 = scmp.le.s32.totalorder 2, %s11
      // Predicated region
      $region45: #{panoptic_forward.4} parent=5 // pred_check
        %p750 = pneg %p749
      $region46: #{panoptic_forward.4} parent=5 // pred_check_branch
        %752 = sbr.rel (%p750) target = $region48
      $region47: #{panoptic_forward.4} parent=5 // pred_region
        %s753 = ssub.s32 %s11, 2
        // Predicated region
        $region49: #{panoptic_forward.4} parent=47 // pred_check
          %p754 = pneg %p108
        $region50: #{panoptic_forward.4} parent=47 // pred_check_branch
          %756 = sbr.rel (%p754) target = $region52
        $region51: #{panoptic_forward.4} parent=47 // pred_region
          %s757 = smul.u32 32, %s17
          %p758 = scmp.lt.s32.totalorder %s757, 63
          %s759 = scalar_select %p758, %s757, 63
          %s760 = smul.addr %s759, 4
          %s761 = scalar_lea.vmem %s3, %s760
        $region52: #{panoptic_forward.4} parent=47 // pred_fallthru
          _
      $region48: #{panoptic_forward.4} parent=5 // pred_fallthru
        _
    $region6: #{panoptic_forward.4} parent=1 // loop_footer
      %s15 = sadd.s32 1, %s11
    $region7: #{panoptic_forward.4} parent=1 // loop_footer_branch
      %10 = sbr.rel target = $region3
    $region8: #{panoptic_forward.4} parent=1 // loop_exit
      _
    %762 = vsyncpa [#allocation3], 1
    %s763 = scalar_lea.sflag [#allocation3], 1
    %764 = vsyncpa %s763, 1
    %765 = vsyncpa [#allocation5], 1

// kernel: panoptic_forward.5
$region0: #{panoptic_forward.5}
  #allocation0 [shape = 'u32[]', space=smem, size = 0x4, offset = 0x4, fixed_abs, tag = 'smem constant byte address 0x4 - core index']
  #allocation1 [shape = 'u32[144,128]{1,0:T(1,128)}', space=vmem, size = 0x12000, scoped, tag = 'internal scratch']
  %s0 = inlined_call_operand.vmem [shape: bf16[128,144], index: 0, kind: input, shape index: {}]
  %s1 = inlined_call_operand.vmem [shape: bf16[144,128], index: 1, kind: input, shape index: {}]
  %s2 = inlined_call_operand.vmem [shape: f32[1,128], index: 2, kind: input, shape index: {}]
  %s3 = inlined_call_operand.vmem [shape: bf16[128,128], index: 3, kind: input, shape index: {}]
  %s4 = inlined_call_operand.vmem [shape: f32[1,128], index: 4, kind: input, shape index: {}]
  %s5 = inlined_call_operand.vmem [shape: bf16[128,128], index: 5, kind: output, shape index: {0}]
  %s6 = inlined_call_operand.vmem [shape: bf16[128,128], index: 6, kind: output, shape index: {1}]
  %s7 = inlined_call_operand.vmem [shape: f32[8,128], index: 7, kind: output, shape index: {2}]
  %8 = xla_tuple %s5, %s6, %s7
  %s9 = sld [smem:[#allocation0]]
  $region46: #{panoptic_forward.5} parent=0
    _
  %s11 = ssub.s32 1, %s9
  %s12 = scalar_select 0, %s11, %s9
  // Predicated region
  $region2: #{panoptic_forward.5} parent=0 // pred_check
    _
  $region3: #{panoptic_forward.5} parent=0 // pred_check_branch
    %14 = sbr.rel (0) target = $region5
  $region4: #{panoptic_forward.5} parent=0 // pred_region
    _
  $region5: #{panoptic_forward.5} parent=0 // pred_fallthru
    _
  // Predicated region
  $region6: #{panoptic_forward.5} parent=0 // pred_check
    _
  $region7: #{panoptic_forward.5} parent=0 // pred_check_branch
    %16 = sbr.rel (0) target = $region9
  $region8: #{panoptic_forward.5} parent=0 // pred_region
    _
  $region9: #{panoptic_forward.5} parent=0 // pred_fallthru
    _
  // Predicated region
  $region10: #{panoptic_forward.5} parent=0 // pred_check
    _
  $region11: #{panoptic_forward.5} parent=0 // pred_check_branch
    %18 = sbr.rel (0) target = $region13
  $region12: #{panoptic_forward.5} parent=0 // pred_region
    _
  $region13: #{panoptic_forward.5} parent=0 // pred_fallthru
    _
  // Predicated region
  $region14: #{panoptic_forward.5} parent=0 // pred_check
    _
  $region15: #{panoptic_forward.5} parent=0 // pred_check_branch
    %20 = sbr.rel (0) target = $region17
  $region16: #{panoptic_forward.5} parent=0 // pred_region
    _
  $region17: #{panoptic_forward.5} parent=0 // pred_fallthru
    _
  // Predicated region
  $region18: #{panoptic_forward.5} parent=0 // pred_check
    _
  $region19: #{panoptic_forward.5} parent=0 // pred_check_branch
    %22 = sbr.rel (0) target = $region21
  $region20: #{panoptic_forward.5} parent=0 // pred_region
    _
  $region21: #{panoptic_forward.5} parent=0 // pred_fallthru
    _
  %v24 = vld [vmem:[%s0] sm:$0xff]
  %v25 = vld [vmem:[%s0 + $0x8] sm:$0xff]
  %v26 = vld [vmem:[%s0 + $0x10] sm:$0xff]
  %v27 = vld [vmem:[%s0 + $0x18] sm:$0xff]
  %v28 = vld [vmem:[%s0 + $0x20] sm:$0xff]
  %v29 = vld [vmem:[%s0 + $0x28] sm:$0xff]
  %v30 = vld [vmem:[%s0 + $0x30] sm:$0xff]
  %v31 = vld [vmem:[%s0 + $0x38] sm:$0xff]
  %v32 = vld [vmem:[%s0 + $0x40] sm:$0xff]
  %v33 = vld [vmem:[%s0 + $0x48] sm:$0xff]
  %v34 = vld [vmem:[%s0 + $0x50] sm:$0xff]
  %v35 = vld [vmem:[%s0 + $0x58] sm:$0xff]
  %v36 = vld [vmem:[%s0 + $0x60] sm:$0xff]
  %v37 = vld [vmem:[%s0 + $0x68] sm:$0xff]
  %v38 = vld [vmem:[%s0 + $0x70] sm:$0xff]
  %v39 = vld [vmem:[%s0 + $0x78] sm:$0xff]
  %v40 = vld [vmem:[%s1] sm:$0xf]
  %v41 = vld [vmem:[%s1 + $0x4] sm:$0xf]
  %v42 = vld [vmem:[%s1 + $0x8] sm:$0xf]
  %v43 = vld [vmem:[%s1 + $0xc] sm:$0xf]
  %v44 = vld [vmem:[%s1 + $0x10] sm:$0xf]
  %v45 = vld [vmem:[%s1 + $0x14] sm:$0xf]
  %v46 = vld [vmem:[%s1 + $0x18] sm:$0xf]
  %v47 = vld [vmem:[%s1 + $0x1c] sm:$0xf]
  %v48 = vld [vmem:[%s1 + $0x20] sm:$0xf]
  %v49 = vld [vmem:[%s1 + $0x24] sm:$0xf]
  %v50 = vld [vmem:[%s1 + $0x28] sm:$0xf]
  %v51 = vld [vmem:[%s1 + $0x2c] sm:$0xf]
  %v52 = vld [vmem:[%s1 + $0x30] sm:$0xf]
  %v53 = vld [vmem:[%s1 + $0x34] sm:$0xf]
  %v54 = vld [vmem:[%s1 + $0x38] sm:$0xf]
  %v55 = vld [vmem:[%s1 + $0x3c] sm:$0xf]
  %v56 = vld [vmem:[%s1 + $0x40] sm:$0xf]
  %v57 = vld [vmem:[%s1 + $0x44] sm:$0xf]
  %v58 = vld [vmem:[%s2] sm:$0x1]
  %v60 = vlaneseq
  %v61 = vshrl.u32 %v60, 7
  %v62 = vsub.s32 0, %v61
  %v63 = vrot.slane %v58, %v62
  %v81 = vunpack.c.l.b16 %v24
  %v82 = vunpack.c.h.b16 %v24
  %v83 = vunpack.c.l.b16 %v25
  %v84 = vunpack.c.h.b16 %v25
  %v85 = vunpack.c.l.b16 %v26
  %v86 = vunpack.c.h.b16 %v26
  %v87 = vunpack.c.l.b16 %v27
  %v88 = vunpack.c.h.b16 %v27
  %v89 = vunpack.c.l.b16 %v28
  %v90 = vunpack.c.h.b16 %v28
  %v91 = vunpack.c.l.b16 %v29
  %v92 = vunpack.c.h.b16 %v29
  %v93 = vunpack.c.l.b16 %v30
  %v94 = vunpack.c.h.b16 %v30
  %v95 = vunpack.c.l.b16 %v31
  %v96 = vunpack.c.h.b16 %v31
  %v97 = vunpack.c.l.b16 %v32
  %v98 = vunpack.c.h.b16 %v32
  %v99 = vunpack.c.l.b16 %v33
  %v100 = vunpack.c.h.b16 %v33
  %v101 = vunpack.c.l.b16 %v34
  %v102 = vunpack.c.h.b16 %v34
  %v103 = vunpack.c.l.b16 %v35
  %v104 = vunpack.c.h.b16 %v35
  %v105 = vunpack.c.l.b16 %v36
  %v106 = vunpack.c.h.b16 %v36
  %v107 = vunpack.c.l.b16 %v37
  %v108 = vunpack.c.h.b16 %v37
  %v109 = vunpack.c.l.b16 %v38
  %v110 = vunpack.c.h.b16 %v38
  %v111 = vunpack.c.l.b16 %v39
  %v112 = vunpack.c.h.b16 %v39
  %v113 = vpack.c.b16 %v83, %v81
  %v114 = vpack.c.b16 %v84, %v82
  %v115 = vpack.c.b16 %v87, %v85
  %v116 = vpack.c.b16 %v88, %v86
  %v117 = vpack.c.b16 %v91, %v89
  %v118 = vpack.c.b16 %v92, %v90
  %v119 = vpack.c.b16 %v95, %v93
  %v120 = vpack.c.b16 %v96, %v94
  %v121 = vpack.c.b16 %v99, %v97
  %v122 = vpack.c.b16 %v100, %v98
  %v123 = vpack.c.b16 %v103, %v101
  %v124 = vpack.c.b16 %v104, %v102
  %v125 = vpack.c.b16 %v107, %v105
  %v126 = vpack.c.b16 %v108, %v106
  %v127 = vpack.c.b16 %v111, %v109
  %v128 = vpack.c.b16 %v112, %v110
  %v155 = vunpack.c.l.b16 %v40
  %v156 = vunpack.c.l.b16 %v41
  %v157 = vunpack.c.l.b16 %v42
  %v158 = vunpack.c.l.b16 %v43
  %v159 = vunpack.c.l.b16 %v44
  %v160 = vunpack.c.l.b16 %v45
  %v161 = vunpack.c.l.b16 %v46
  %v162 = vunpack.c.l.b16 %v47
  %v163 = vunpack.c.l.b16 %v48
  %v164 = vunpack.c.l.b16 %v49
  %v165 = vunpack.c.l.b16 %v50
  %v166 = vunpack.c.l.b16 %v51
  %v167 = vunpack.c.l.b16 %v52
  %v168 = vunpack.c.l.b16 %v53
  %v169 = vunpack.c.l.b16 %v54
  %v170 = vunpack.c.l.b16 %v55
  %v171 = vunpack.c.l.b16 %v56
  %v172 = vunpack.c.l.b16 %v57
  %v173 = vpack.c.b16 %v156, %v155
  %v174 = vpack.c.b16 %v158, %v157
  %v175 = vpack.c.b16 %v160, %v159
  %v176 = vpack.c.b16 %v162, %v161
  %v177 = vpack.c.b16 %v164, %v163
  %v178 = vpack.c.b16 %v166, %v165
  %v179 = vpack.c.b16 %v168, %v167
  %v180 = vpack.c.b16 %v170, %v169
  %v181 = vpack.c.b16 %v172, %v171
  %vm191 = vcmask 130048
  %v193 = vsel %vm191, %v114, 0
  %v196 = vsel %vm191, %v116, 0
  %v199 = vsel %vm191, %v118, 0
  %v202 = vsel %vm191, %v120, 0
  %v205 = vsel %vm191, %v122, 0
  %v208 = vsel %vm191, %v124, 0
  %v211 = vsel %vm191, %v126, 0
  %v214 = vsel %vm191, %v128, 0
  %216 = vmatprep.subr.bf16.mxu0 0
  %217 = vmatpush1.bf16.msra.mxu0 %v173
  %218 = vmatprep.subr.bf16.mxu0 0
  %219 = vmatpush1.bf16.msra.mxu0 %v174
  %220 = vmatprep.subr.bf16.mxu0 0
  %221 = vmatpush1.bf16.msra.mxu0 %v175
  %222 = vmatprep.subr.bf16.mxu0 0
  %223 = vmatpush1.bf16.msra.mxu0 %v176
  %224 = vmatprep.subr.bf16.mxu0 0
  %225 = vmatpush1.bf16.msra.mxu0 %v177
  %226 = vmatprep.subr.bf16.mxu0 0
  %227 = vmatpush1.bf16.msra.mxu0 %v178
  %228 = vmatprep.subr.bf16.mxu0 0
  %229 = vmatpush1.bf16.msra.mxu0 %v179
  %230 = vmatprep.subr.bf16.mxu0 0
  %231 = vmatpush1.bf16.msra.mxu0 %v180
  %232 = vmatprep.subr.bf16.mxu0 0
  %233 = vmatpush1.bf16.msra.mxu0 %v181
  %234 = vmatprep.subr.bf16.mxu0 0
  %235 = vmatpush1.bf16.msra.mxu0 0
  %236 = vmatprep.subr.bf16.mxu0 0
  %237 = vmatpush1.bf16.msra.mxu0 0
  %238 = vmatprep.subr.bf16.mxu0 0
  %239 = vmatpush1.bf16.msra.mxu0 0
  %240 = vmatprep.subr.bf16.mxu0 0
  %241 = vmatpush1.bf16.msra.mxu0 0
  %242 = vmatprep.subr.bf16.mxu0 0
  %243 = vmatpush1.bf16.msra.mxu0 0
  %244 = vmatprep.subr.bf16.mxu0 0
  %245 = vmatpush1.bf16.msra.mxu0 0
  %246 = vmatprep.subr.bf16.mxu0 0
  %247 = vmatpush1.bf16.msra.mxu0 0
  %248 = vmatprep.mubr.bf16.mxu0 %v193
  %249 = vmatmul.mubr.bf16.gmra.mrb[0].mxu0 %v113
  %v250 = vpop.f32.mrb[0].mxu0
  %v251 = vadd.f32 %v63, %v250
  %v252 = vpop.f32.mrb[0].mxu0
  %v253 = vpop.f32.mrb[0].mxu0
  %v254 = vadd.f32 %v63, %v253
  %v255 = vpop.f32.mrb[0].mxu0
  %256 = vmatprep.mubr.bf16.mxu0 %v196
  %257 = vmatmul.mubr.bf16.gmra.mrb[0].mxu0 %v115
  %v258 = vpop.f32.mrb[0].mxu0
  %v259 = vadd.f32 %v63, %v258
  %v260 = vpop.f32.mrb[0].mxu0
  %v261 = vpop.f32.mrb[0].mxu0
  %v262 = vadd.f32 %v63, %v261
  %v263 = vpop.f32.mrb[0].mxu0
  %264 = vmatprep.mubr.bf16.mxu0 %v199
  %265 = vmatmul.mubr.bf16.gmra.mrb[0].mxu0 %v117
  %v266 = vpop.f32.mrb[0].mxu0
  %v267 = vadd.f32 %v63, %v266
  %v268 = vpop.f32.mrb[0].mxu0
  %v269 = vpop.f32.mrb[0].mxu0
  %v270 = vadd.f32 %v63, %v269
  %v271 = vpop.f32.mrb[0].mxu0
  %272 = vmatprep.mubr.bf16.mxu0 %v202
  %273 = vmatmul.mubr.bf16.gmra.mrb[0].mxu0 %v119
  %v274 = vpop.f32.mrb[0].mxu0
  %v275 = vadd.f32 %v63, %v274
  %v276 = vpop.f32.mrb[0].mxu0
  %v277 = vpop.f32.mrb[0].mxu0
  %v278 = vadd.f32 %v63, %v277
  %v279 = vpop.f32.mrb[0].mxu0
  %280 = vmatprep.mubr.bf16.mxu0 %v205
  %281 = vmatmul.mubr.bf16.gmra.mrb[0].mxu0 %v121
  %v282 = vpop.f32.mrb[0].mxu0
  %v283 = vadd.f32 %v63, %v282
  %v284 = vpop.f32.mrb[0].mxu0
  %v285 = vpop.f32.mrb[0].mxu0
  %v286 = vadd.f32 %v63, %v285
  %v287 = vpop.f32.mrb[0].mxu0
  %288 = vmatprep.mubr.bf16.mxu0 %v208
  %289 = vmatmul.mubr.bf16.gmra.mrb[0].mxu0 %v123
  %v290 = vpop.f32.mrb[0].mxu0
  %v291 = vadd.f32 %v63, %v290
  %v292 = vpop.f32.mrb[0].mxu0
  %v293 = vpop.f32.mrb[0].mxu0
  %v294 = vadd.f32 %v63, %v293
  %v295 = vpop.f32.mrb[0].mxu0
  %296 = vmatprep.mubr.bf16.mxu0 %v211
  %297 = vmatmul.mubr.bf16.gmra.mrb[0].mxu0 %v125
  %v298 = vpop.f32.mrb[0].mxu0
  %v299 = vadd.f32 %v63, %v298
  %v300 = vpop.f32.mrb[0].mxu0
  %v301 = vpop.f32.mrb[0].mxu0
  %v302 = vadd.f32 %v63, %v301
  %v303 = vpop.f32.mrb[0].mxu0
  %304 = vmatprep.mubr.bf16.mxu0 %v214
  %305 = vmatmul.mubr.bf16.gmra.mrb[0].mxu0 %v127
  %v306 = vpop.f32.mrb[0].mxu0
  %v307 = vadd.f32 %v63, %v306
  %v308 = vpop.f32.mrb[0].mxu0
  %v309 = vpop.f32.mrb[0].mxu0
  %v310 = vadd.f32 %v63, %v309
  %v311 = vpop.f32.mrb[0].mxu0
  %312 = vdwg.mxu0
  %v313 = vmax.f32 %v251, 0.0
  %v314 = vmax.f32 %v254, 0.0
  %v315 = vmax.f32 %v259, 0.0
  %v316 = vmax.f32 %v262, 0.0
  %v317 = vmax.f32 %v267, 0.0
  %v318 = vmax.f32 %v270, 0.0
  %v319 = vmax.f32 %v275, 0.0
  %v320 = vmax.f32 %v278, 0.0
  %v321 = vmax.f32 %v283, 0.0
  %v322 = vmax.f32 %v286, 0.0
  %v323 = vmax.f32 %v291, 0.0
  %v324 = vmax.f32 %v294, 0.0
  %v325 = vmax.f32 %v299, 0.0
  %v326 = vmax.f32 %v302, 0.0
  %v327 = vmax.f32 %v307, 0.0
  %v328 = vmax.f32 %v310, 0.0
  %v329 = vpack.c.bf16 %v314, %v313
  %v330 = vpack.c.bf16 %v316, %v315
  %v331 = vpack.c.bf16 %v318, %v317
  %v332 = vpack.c.bf16 %v320, %v319
  %v333 = vpack.c.bf16 %v322, %v321
  %v334 = vpack.c.bf16 %v324, %v323
  %v335 = vpack.c.bf16 %v326, %v325
  %v336 = vpack.c.bf16 %v328, %v327
  %v345 = vunpack.c.l.b16 %v329
  %v346 = vunpack.c.h.b16 %v329
  %v347 = vunpack.c.l.b16 %v330
  %v348 = vunpack.c.h.b16 %v330
  %v349 = vunpack.c.l.b16 %v331
  %v350 = vunpack.c.h.b16 %v331
  %v351 = vunpack.c.l.b16 %v332
  %v352 = vunpack.c.h.b16 %v332
  %v353 = vunpack.c.l.b16 %v333
  %v354 = vunpack.c.h.b16 %v333
  %v355 = vunpack.c.l.b16 %v334
  %v356 = vunpack.c.h.b16 %v334
  %v357 = vunpack.c.l.b16 %v335
  %v358 = vunpack.c.h.b16 %v335
  %v359 = vunpack.c.l.b16 %v336
  %v360 = vunpack.c.h.b16 %v336
  %v361 = vpack.c.b16 %v345, %v345
  %v362 = vpack.c.b16 %v346, %v346
  %v363 = vpack.c.b16 %v347, %v347
  %v364 = vpack.c.b16 %v348, %v348
  %v365 = vpack.c.b16 %v349, %v349
  %v366 = vpack.c.b16 %v350, %v350
  %v367 = vpack.c.b16 %v351, %v351
  %v368 = vpack.c.b16 %v352, %v352
  %v369 = vpack.c.b16 %v353, %v353
  %v370 = vpack.c.b16 %v354, %v354
  %v371 = vpack.c.b16 %v355, %v355
  %v372 = vpack.c.b16 %v356, %v356
  %v373 = vpack.c.b16 %v357, %v357
  %v374 = vpack.c.b16 %v358, %v358
  %v375 = vpack.c.b16 %v359, %v359
  %v376 = vpack.c.b16 %v360, %v360
  %393 = vst [vmem:[%s5] sm:$0xf] %v361
  %394 = vst [vmem:[%s5 + $0x4] sm:$0xf] %v362
  %395 = vst [vmem:[%s5 + $0x8] sm:$0xf] %v363
  %396 = vst [vmem:[%s5 + $0xc] sm:$0xf] %v364
  %397 = vst [vmem:[%s5 + $0x10] sm:$0xf] %v365
  %398 = vst [vmem:[%s5 + $0x14] sm:$0xf] %v366
  %399 = vst [vmem:[%s5 + $0x18] sm:$0xf] %v367
  %400 = vst [vmem:[%s5 + $0x1c] sm:$0xf] %v368
  %401 = vst [vmem:[%s5 + $0x20] sm:$0xf] %v369
  %402 = vst [vmem:[%s5 + $0x24] sm:$0xf] %v370
  %403 = vst [vmem:[%s5 + $0x28] sm:$0xf] %v371
  %404 = vst [vmem:[%s5 + $0x2c] sm:$0xf] %v372
  %405 = vst [vmem:[%s5 + $0x30] sm:$0xf] %v373
  %406 = vst [vmem:[%s5 + $0x34] sm:$0xf] %v374
  %407 = vst [vmem:[%s5 + $0x38] sm:$0xf] %v375
  %408 = vst [vmem:[%s5 + $0x3c] sm:$0xf] %v376
  %v409 = vld [vmem:[%s3] sm:$0xf]
  %v410 = vld [vmem:[%s3 + $0x4] sm:$0xf]
  %v411 = vld [vmem:[%s3 + $0x8] sm:$0xf]
  %v412 = vld [vmem:[%s3 + $0xc] sm:$0xf]
  %v413 = vld [vmem:[%s3 + $0x10] sm:$0xf]
  %v414 = vld [vmem:[%s3 + $0x14] sm:$0xf]
  %v415 = vld [vmem:[%s3 + $0x18] sm:$0xf]
  %v416 = vld [vmem:[%s3 + $0x1c] sm:$0xf]
  %v417 = vld [vmem:[%s3 + $0x20] sm:$0xf]
  %v418 = vld [vmem:[%s3 + $0x24] sm:$0xf]
  %v419 = vld [vmem:[%s3 + $0x28] sm:$0xf]
  %v420 = vld [vmem:[%s3 + $0x2c] sm:$0xf]
  %v421 = vld [vmem:[%s3 + $0x30] sm:$0xf]
  %v422 = vld [vmem:[%s3 + $0x34] sm:$0xf]
  %v423 = vld [vmem:[%s3 + $0x38] sm:$0xf]
  %v424 = vld [vmem:[%s3 + $0x3c] sm:$0xf]
  %v425 = vld [vmem:[%s4] sm:$0x1]
  %v427 = vlaneseq
  %v428 = vshrl.u32 %v427, 7
  %v429 = vsub.s32 0, %v428
  %v430 = vrot.slane %v425, %v429
  %v448 = vunpack.c.l.b16 %v409
  %v449 = vunpack.c.l.b16 %v410
  %v450 = vunpack.c.l.b16 %v411
  %v451 = vunpack.c.l.b16 %v412
  %v452 = vunpack.c.l.b16 %v413
  %v453 = vunpack.c.l.b16 %v414
  %v454 = vunpack.c.l.b16 %v415
  %v455 = vunpack.c.l.b16 %v416
  %v456 = vunpack.c.l.b16 %v417
  %v457 = vunpack.c.l.b16 %v418
  %v458 = vunpack.c.l.b16 %v419
  %v459 = vunpack.c.l.b16 %v420
  %v460 = vunpack.c.l.b16 %v421
  %v461 = vunpack.c.l.b16 %v422
  %v462 = vunpack.c.l.b16 %v423
  %v463 = vunpack.c.l.b16 %v424
  %v464 = vpack.c.b16 %v449, %v448
  %v465 = vpack.c.b16 %v451, %v450
  %v466 = vpack.c.b16 %v453, %v452
  %v467 = vpack.c.b16 %v455, %v454
  %v468 = vpack.c.b16 %v457, %v456
  %v469 = vpack.c.b16 %v459, %v458
  %v470 = vpack.c.b16 %v461, %v460
  %v471 = vpack.c.b16 %v463, %v462
  %480 = vmatprep.subr.bf16.mxu0 0
  %481 = vmatpush1.bf16.msra.mxu0 %v464
  %482 = vmatprep.subr.bf16.mxu0 0
  %483 = vmatpush1.bf16.msra.mxu0 %v465
  %484 = vmatprep.subr.bf16.mxu0 0
  %485 = vmatpush1.bf16.msra.mxu0 %v466
  %486 = vmatprep.subr.bf16.mxu0 0
  %487 = vmatpush1.bf16.msra.mxu0 %v467
  %488 = vmatprep.subr.bf16.mxu0 0
  %489 = vmatpush1.bf16.msra.mxu0 %v468
  %490 = vmatprep.subr.bf16.mxu0 0
  %491 = vmatpush1.bf16.msra.mxu0 %v469
  %492 = vmatprep.subr.bf16.mxu0 0
  %493 = vmatpush1.bf16.msra.mxu0 %v470
  %494 = vmatprep.subr.bf16.mxu0 0
  %495 = vmatpush1.bf16.msra.mxu0 %v471
  %496 = vmatprep.subr.bf16.mxu0 0
  %497 = vmatpush1.bf16.msra.mxu0 0
  %498 = vmatprep.subr.bf16.mxu0 0
  %499 = vmatpush1.bf16.msra.mxu0 0
  %500 = vmatprep.subr.bf16.mxu0 0
  %501 = vmatpush1.bf16.msra.mxu0 0
  %502 = vmatprep.subr.bf16.mxu0 0
  %503 = vmatpush1.bf16.msra.mxu0 0
  %504 = vmatprep.subr.bf16.mxu0 0
  %505 = vmatpush1.bf16.msra.mxu0 0
  %506 = vmatprep.subr.bf16.mxu0 0
  %507 = vmatpush1.bf16.msra.mxu0 0
  %508 = vmatprep.subr.bf16.mxu0 0
  %509 = vmatpush1.bf16.msra.mxu0 0
  %510 = vmatprep.subr.bf16.mxu0 0
  %511 = vmatpush1.bf16.msra.mxu0 0
  %512 = vmatprep.mubr.bf16.mxu0 0
  %513 = vmatmul.mubr.bf16.gmra.mrb[0].mxu0 %v329
  %v514 = vpop.f32.mrb[0].mxu0
  %v515 = vadd.f32 %v430, %v514
  %v516 = vpop.f32.mrb[0].mxu0
  %v517 = vpop.f32.mrb[0].mxu0
  %v518 = vadd.f32 %v430, %v517
  %v519 = vpop.f32.mrb[0].mxu0
  %520 = vmatprep.mubr.bf16.mxu0 0
  %521 = vmatmul.mubr.bf16.gmra.mrb[0].mxu0 %v330
  %v522 = vpop.f32.mrb[0].mxu0
  %v523 = vadd.f32 %v430, %v522
  %v524 = vpop.f32.mrb[0].mxu0
  %v525 = vpop.f32.mrb[0].mxu0
  %v526 = vadd.f32 %v430, %v525
  %v527 = vpop.f32.mrb[0].mxu0
  %528 = vmatprep.mubr.bf16.mxu0 0
  %529 = vmatmul.mubr.bf16.gmra.mrb[0].mxu0 %v331
  %v530 = vpop.f32.mrb[0].mxu0
  %v531 = vadd.f32 %v430, %v530
  %v532 = vpop.f32.mrb[0].mxu0
  %v533 = vpop.f32.mrb[0].mxu0
  %v534 = vadd.f32 %v430, %v533
  %v535 = vpop.f32.mrb[0].mxu0
  %536 = vmatprep.mubr.bf16.mxu0 0
  %537 = vmatmul.mubr.bf16.gmra.mrb[0].mxu0 %v332
  %v538 = vpop.f32.mrb[0].mxu0
  %v539 = vadd.f32 %v430, %v538
  %v540 = vpop.f32.mrb[0].mxu0
  %v541 = vpop.f32.mrb[0].mxu0
  %v542 = vadd.f32 %v430, %v541
  %v543 = vpop.f32.mrb[0].mxu0
  %544 = vmatprep.mubr.bf16.mxu0 0
  %545 = vmatmul.mubr.bf16.gmra.mrb[0].mxu0 %v333
  %v546 = vpop.f32.mrb[0].mxu0
  %v547 = vadd.f32 %v430, %v546
  %v548 = vpop.f32.mrb[0].mxu0
  %v549 = vpop.f32.mrb[0].mxu0
  %v550 = vadd.f32 %v430, %v549
  %v551 = vpop.f32.mrb[0].mxu0
  %552 = vmatprep.mubr.bf16.mxu0 0
  %553 = vmatmul.mubr.bf16.gmra.mrb[0].mxu0 %v334
  %v554 = vpop.f32.mrb[0].mxu0
  %v555 = vadd.f32 %v430, %v554
  %v556 = vpop.f32.mrb[0].mxu0
  %v557 = vpop.f32.mrb[0].mxu0
  %v558 = vadd.f32 %v430, %v557
  %v559 = vpop.f32.mrb[0].mxu0
  %560 = vmatprep.mubr.bf16.mxu0 0
  %561 = vmatmul.mubr.bf16.gmra.mrb[0].mxu0 %v335
  %v562 = vpop.f32.mrb[0].mxu0
  %v563 = vadd.f32 %v430, %v562
  %v564 = vpop.f32.mrb[0].mxu0
  %v565 = vpop.f32.mrb[0].mxu0
  %v566 = vadd.f32 %v430, %v565
  %v567 = vpop.f32.mrb[0].mxu0
  %568 = vmatprep.mubr.bf16.mxu0 0
  %569 = vmatmul.mubr.bf16.gmra.mrb[0].mxu0 %v336
  %v570 = vpop.f32.mrb[0].mxu0
  %v571 = vadd.f32 %v430, %v570
  %v572 = vpop.f32.mrb[0].mxu0
  %v573 = vpop.f32.mrb[0].mxu0
  %v574 = vadd.f32 %v430, %v573
  %v575 = vpop.f32.mrb[0].mxu0
  %576 = vdwg.mxu0
  %v577 = vpack.c.bf16 %v518, %v515
  %v578 = vpack.c.bf16 %v526, %v523
  %v579 = vpack.c.bf16 %v534, %v531
  %v580 = vpack.c.bf16 %v542, %v539
  %v581 = vpack.c.bf16 %v550, %v547
  %v582 = vpack.c.bf16 %v558, %v555
  %v583 = vpack.c.bf16 %v566, %v563
  %v584 = vpack.c.bf16 %v574, %v571
  %v593 = vunpack.c.l.b16 %v577
  %v594 = vunpack.c.h.b16 %v577
  %v595 = vunpack.c.l.b16 %v578
  %v596 = vunpack.c.h.b16 %v578
  %v597 = vunpack.c.l.b16 %v579
  %v598 = vunpack.c.h.b16 %v579
  %v599 = vunpack.c.l.b16 %v580
  %v600 = vunpack.c.h.b16 %v580
  %v601 = vunpack.c.l.b16 %v581
  %v602 = vunpack.c.h.b16 %v581
  %v603 = vunpack.c.l.b16 %v582
  %v604 = vunpack.c.h.b16 %v582
  %v605 = vunpack.c.l.b16 %v583
  %v606 = vunpack.c.h.b16 %v583
  %v607 = vunpack.c.l.b16 %v584
  %v608 = vunpack.c.h.b16 %v584
  %v609 = vpack.c.b16 %v593, %v593
  %v610 = vpack.c.b16 %v594, %v594
  %v611 = vpack.c.b16 %v595, %v595
  %v612 = vpack.c.b16 %v596, %v596
  %v613 = vpack.c.b16 %v597, %v597
  %v614 = vpack.c.b16 %v598, %v598
  %v615 = vpack.c.b16 %v599, %v599
  %v616 = vpack.c.b16 %v600, %v600
  %v617 = vpack.c.b16 %v601, %v601
  %v618 = vpack.c.b16 %v602, %v602
  %v619 = vpack.c.b16 %v603, %v603
  %v620 = vpack.c.b16 %v604, %v604
  %v621 = vpack.c.b16 %v605, %v605
  %v622 = vpack.c.b16 %v606, %v606
  %v623 = vpack.c.b16 %v607, %v607
  %v624 = vpack.c.b16 %v608, %v608
  %641 = vst [vmem:[%s6] sm:$0xf] %v609
  %642 = vst [vmem:[%s6 + $0x4] sm:$0xf] %v610
  %643 = vst [vmem:[%s6 + $0x8] sm:$0xf] %v611
  %644 = vst [vmem:[%s6 + $0xc] sm:$0xf] %v612
  %645 = vst [vmem:[%s6 + $0x10] sm:$0xf] %v613
  %646 = vst [vmem:[%s6 + $0x14] sm:$0xf] %v614
  %647 = vst [vmem:[%s6 + $0x18] sm:$0xf] %v615
  %648 = vst [vmem:[%s6 + $0x1c] sm:$0xf] %v616
  %649 = vst [vmem:[%s6 + $0x20] sm:$0xf] %v617
  %650 = vst [vmem:[%s6 + $0x24] sm:$0xf] %v618
  %651 = vst [vmem:[%s6 + $0x28] sm:$0xf] %v619
  %652 = vst [vmem:[%s6 + $0x2c] sm:$0xf] %v620
  %653 = vst [vmem:[%s6 + $0x30] sm:$0xf] %v621
  %654 = vst [vmem:[%s6 + $0x34] sm:$0xf] %v622
  %655 = vst [vmem:[%s6 + $0x38] sm:$0xf] %v623
  %656 = vst [vmem:[%s6 + $0x3c] sm:$0xf] %v624
  %v657 = vlaneseq
  %v658 = vshrl.u32 %v657, 7
  %v659 = vadd.s32 %v658, 8
  %v660 = vadd.s32 %v658, 16
  %v661 = vadd.s32 %v658, 24
  %v662 = vadd.s32 %v658, 32
  %v663 = vadd.s32 %v658, 40
  %v664 = vadd.s32 %v658, 48
  %v665 = vadd.s32 %v658, 56
  %v666 = vadd.s32 %v658, 64
  %v667 = vadd.s32 %v658, 72
  %v668 = vadd.s32 %v658, 80
  %v669 = vadd.s32 %v658, 88
  %v670 = vadd.s32 %v658, 96
  %v671 = vadd.s32 %v658, 104
  %v672 = vadd.s32 %v658, 112
  %v673 = vadd.s32 %v658, 120
  %s674 = smul.u32 0, 128
  %v675 = vstv %s674
  %v676 = vadd.s32 %v658, %v675
  %v677 = vadd.s32 %v659, %v675
  %v678 = vadd.s32 %v660, %v675
  %v679 = vadd.s32 %v661, %v675
  %v680 = vadd.s32 %v662, %v675
  %v681 = vadd.s32 %v663, %v675
  %v682 = vadd.s32 %v664, %v675
  %v683 = vadd.s32 %v665, %v675
  %v684 = vadd.s32 %v666, %v675
  %v685 = vadd.s32 %v667, %v675
  %v686 = vadd.s32 %v668, %v675
  %v687 = vadd.s32 %v669, %v675
  %v688 = vadd.s32 %v670, %v675
  %v689 = vadd.s32 %v671, %v675
  %v690 = vadd.s32 %v672, %v675
  %v691 = vadd.s32 %v673, %v675
  %vm692 = vcmp.lt.s32.totalorder %v676, 128
  %vm693 = vcmp.lt.s32.totalorder %v677, 128
  %vm694 = vcmp.lt.s32.totalorder %v678, 128
  %vm695 = vcmp.lt.s32.totalorder %v679, 128
  %vm696 = vcmp.lt.s32.totalorder %v680, 128
  %vm697 = vcmp.lt.s32.totalorder %v681, 128
  %vm698 = vcmp.lt.s32.totalorder %v682, 128
  %vm699 = vcmp.lt.s32.totalorder %v683, 128
  %vm700 = vcmp.lt.s32.totalorder %v684, 128
  %vm701 = vcmp.lt.s32.totalorder %v685, 128
  %vm702 = vcmp.lt.s32.totalorder %v686, 128
  %vm703 = vcmp.lt.s32.totalorder %v687, 128
  %vm704 = vcmp.lt.s32.totalorder %v688, 128
  %vm705 = vcmp.lt.s32.totalorder %v689, 128
  %vm706 = vcmp.lt.s32.totalorder %v690, 128
  %vm707 = vcmp.lt.s32.totalorder %v691, 128
  %v708 = vmul.f32 %v515, %v515
  %v709 = vmul.f32 %v518, %v518
  %v710 = vmul.f32 %v523, %v523
  %v711 = vmul.f32 %v526, %v526
  %v712 = vmul.f32 %v531, %v531
  %v713 = vmul.f32 %v534, %v534
  %v714 = vmul.f32 %v539, %v539
  %v715 = vmul.f32 %v542, %v542
  %v716 = vmul.f32 %v547, %v547
  %v717 = vmul.f32 %v550, %v550
  %v718 = vmul.f32 %v555, %v555
  %v719 = vmul.f32 %v558, %v558
  %v720 = vmul.f32 %v563, %v563
  %v721 = vmul.f32 %v566, %v566
  %v722 = vmul.f32 %v571, %v571
  %v723 = vmul.f32 %v574, %v574
  %v724 = vsel %vm692, %v708, 0.0
  %v725 = vsel %vm693, %v709, 0.0
  %v726 = vsel %vm694, %v710, 0.0
  %v727 = vsel %vm695, %v711, 0.0
  %v728 = vsel %vm696, %v712, 0.0
  %v729 = vsel %vm697, %v713, 0.0
  %v730 = vsel %vm698, %v714, 0.0
  %v731 = vsel %vm699, %v715, 0.0
  %v732 = vsel %vm700, %v716, 0.0
  %v733 = vsel %vm701, %v717, 0.0
  %v734 = vsel %vm702, %v718, 0.0
  %v735 = vsel %vm703, %v719, 0.0
  %v736 = vsel %vm704, %v720, 0.0
  %v737 = vsel %vm705, %v721, 0.0
  %v738 = vsel %vm706, %v722, 0.0
  %v739 = vsel %vm707, %v723, 0.0
  %v740 = vadd.f32 %v724, %v725
  %v741 = vadd.f32 %v740, %v726
  %v742 = vadd.f32 %v741, %v727
  %v743 = vadd.f32 %v742, %v728
  %v744 = vadd.f32 %v743, %v729
  %v745 = vadd.f32 %v744, %v730
  %v746 = vadd.f32 %v745, %v731
  %v747 = vadd.f32 %v746, %v732
  %v748 = vadd.f32 %v747, %v733
  %v749 = vadd.f32 %v748, %v734
  %v750 = vadd.f32 %v749, %v735
  %v751 = vadd.f32 %v750, %v736
  %v752 = vadd.f32 %v751, %v737
  %v753 = vadd.f32 %v752, %v738
  %v754 = vadd.f32 %v753, %v739
  %755 = vadd.xlane.f32.xlu0 %v754
  %v756 = vpop.xlane.xlu0 %755
  %v757 = vrot.slane %v756, 4
  %v758 = vadd.f32 %v756, %v757
  %v759 = vrot.slane %v758, 2
  %v760 = vadd.f32 %v758, %v759
  %v761 = vrot.slane %v760, 1
  %v762 = vadd.f32 %v760, %v761
  %s763 = vtos %v762
  %v764 = vlaneseq
  %v765 = vand.u32 %v764, 127
  %vm766 = vcmp.eq.s32.totalorder %v658, 0
  %vm767 = vcmp.eq.s32.totalorder %v765, 0
  %vm768 = vmand %vm766, %vm767
  %v769 = vstv %s763
  %v770 = vsel %vm768, %v769, 0.0
  %771 = vst [vmem:[%s7] sm:$0xff] %v770
  // Predicated region
  $region22: #{panoptic_forward.5} parent=0 // pred_check
    _
  $region23: #{panoptic_forward.5} parent=0 // pred_check_branch
    %773 = sbr.rel (0) target = $region25
  $region24: #{panoptic_forward.5} parent=0 // pred_region
    _
  $region25: #{panoptic_forward.5} parent=0 // pred_fallthru
    _
  // Predicated region
  $region26: #{panoptic_forward.5} parent=0 // pred_check
    _
  $region27: #{panoptic_forward.5} parent=0 // pred_check_branch
    %775 = sbr.rel (0) target = $region29
  $region28: #{panoptic_forward.5} parent=0 // pred_region
    _
  $region29: #{panoptic_forward.5} parent=0 // pred_fallthru
    _
  // Predicated region
  $region30: #{panoptic_forward.5} parent=0 // pred_check
    _
  $region31: #{panoptic_forward.5} parent=0 // pred_check_branch
    %777 = sbr.rel (0) target = $region33
  $region32: #{panoptic_forward.5} parent=0 // pred_region
    _
  $region33: #{panoptic_forward.5} parent=0 // pred_fallthru
    _
  // Predicated region
  $region34: #{panoptic_forward.5} parent=0 // pred_check
    _
  $region35: #{panoptic_forward.5} parent=0 // pred_check_branch
    %779 = sbr.rel (0) target = $region37
  $region36: #{panoptic_forward.5} parent=0 // pred_region
    _
  $region37: #{panoptic_forward.5} parent=0 // pred_fallthru
    _
  // Predicated region
  $region38: #{panoptic_forward.5} parent=0 // pred_check
    _
  $region39: #{panoptic_forward.5} parent=0 // pred_check_branch
    %781 = sbr.rel (0) target = $region41
  $region40: #{panoptic_forward.5} parent=0 // pred_region
    _
  $region41: #{panoptic_forward.5} parent=0 // pred_fallthru
    _
  // Predicated region
  $region42: #{panoptic_forward.5} parent=0 // pred_check
    _
  $region43: #{panoptic_forward.5} parent=0 // pred_check_branch
    %783 = sbr.rel (0) target = $region45
  $region44: #{panoptic_forward.5} parent=0 // pred_region
    _
  $region45: #{panoptic_forward.5} parent=0 // pred_fallthru
    _

// kernel: panoptic_forward.6
$region0: #{panoptic_forward.6}
  #allocation0 [shape = 'u32[]', space=smem, size = 0x4, offset = 0x4, fixed_abs, tag = 'smem constant byte address 0x4 - core index']
  #allocation1 [shape = 'u32[144,128]{1,0:T(1,128)}', space=vmem, size = 0x12000, scoped, tag = 'internal scratch']
  %s0 = inlined_call_operand.vmem [shape: bf16[32,288], index: 0, kind: input, shape index: {}]
  %s1 = inlined_call_operand.vmem [shape: bf16[288,128], index: 1, kind: input, shape index: {}]
  %s2 = inlined_call_operand.vmem [shape: f32[1,128], index: 2, kind: input, shape index: {}]
  %s3 = inlined_call_operand.hbm [shape: bf16[32,128], index: 3, kind: output, shape index: {}]
  %s4 = sld [smem:[#allocation0]]
  $region22: #{panoptic_forward.6} parent=0
    _
  %s6 = ssub.s32 1, %s4
  %s7 = scalar_select 0, %s6, %s4
  $region1: #{panoptic_forward.6} parent=0
    #allocation2 [shape = 'u8[8192]{0}', space=vmem, size = 0x2000, scoped, tag = 'output window, operand 0, single buffered']
    #allocation3 [shape = 's32[1]{0}', space=sflag, size = 0x4, scoped, tag = 'scoped memory for panoptic_forward.6']
    %8 = vsyncpa [#allocation3], 0
    // Predicated region
    $region2: #{panoptic_forward.6} parent=1 // pred_check
      _
    $region3: #{panoptic_forward.6} parent=1 // pred_check_branch
      %10 = sbr.rel (0) target = $region5
    $region4: #{panoptic_forward.6} parent=1 // pred_region
      _
    $region5: #{panoptic_forward.6} parent=1 // pred_fallthru
      _
    // Predicated region
    $region6: #{panoptic_forward.6} parent=1 // pred_check
      _
    $region7: #{panoptic_forward.6} parent=1 // pred_check_branch
      %12 = sbr.rel (0) target = $region9
    $region8: #{panoptic_forward.6} parent=1 // pred_region
      _
    $region9: #{panoptic_forward.6} parent=1 // pred_fallthru
      _
    // Predicated region
    $region10: #{panoptic_forward.6} parent=1 // pred_check
      _
    $region11: #{panoptic_forward.6} parent=1 // pred_check_branch
      %14 = sbr.rel (0) target = $region13
    $region12: #{panoptic_forward.6} parent=1 // pred_region
      _
    $region13: #{panoptic_forward.6} parent=1 // pred_fallthru
      _
    %v16 = vld [vmem:[%s0] sm:$0xff]
    %v17 = vld [vmem:[%s0 + $0x8] sm:$0xf]
    %v18 = vld [vmem:[%s0 + $0xc] sm:$0xff]
    %v19 = vld [vmem:[%s0 + $0x14] sm:$0xf]
    %v20 = vld [vmem:[%s0 + $0x18] sm:$0xff]
    %v21 = vld [vmem:[%s0 + $0x20] sm:$0xf]
    %v22 = vld [vmem:[%s0 + $0x24] sm:$0xff]
    %v23 = vld [vmem:[%s0 + $0x2c] sm:$0xf]
    %v24 = vld [vmem:[%s1] sm:$0xf]
    %v25 = vld [vmem:[%s1 + $0x4] sm:$0xf]
    %v26 = vld [vmem:[%s1 + $0x8] sm:$0xf]
    %v27 = vld [vmem:[%s1 + $0xc] sm:$0xf]
    %v28 = vld [vmem:[%s1 + $0x10] sm:$0xf]
    %v29 = vld [vmem:[%s1 + $0x14] sm:$0xf]
    %v30 = vld [vmem:[%s1 + $0x18] sm:$0xf]
    %v31 = vld [vmem:[%s1 + $0x1c] sm:$0xf]
    %v32 = vld [vmem:[%s1 + $0x20] sm:$0xf]
    %v33 = vld [vmem:[%s1 + $0x24] sm:$0xf]
    %v34 = vld [vmem:[%s1 + $0x28] sm:$0xf]
    %v35 = vld [vmem:[%s1 + $0x2c] sm:$0xf]
    %v36 = vld [vmem:[%s1 + $0x30] sm:$0xf]
    %v37 = vld [vmem:[%s1 + $0x34] sm:$0xf]
    %v38 = vld [vmem:[%s1 + $0x38] sm:$0xf]
    %v39 = vld [vmem:[%s1 + $0x3c] sm:$0xf]
    %v40 = vld [vmem:[%s1 + $0x40] sm:$0xf]
    %v41 = vld [vmem:[%s1 + $0x44] sm:$0xf]
    %v42 = vld [vmem:[%s1 + $0x48] sm:$0xf]
    %v43 = vld [vmem:[%s1 + $0x4c] sm:$0xf]
    %v44 = vld [vmem:[%s1 + $0x50] sm:$0xf]
    %v45 = vld [vmem:[%s1 + $0x54] sm:$0xf]
    %v46 = vld [vmem:[%s1 + $0x58] sm:$0xf]
    %v47 = vld [vmem:[%s1 + $0x5c] sm:$0xf]
    %v48 = vld [vmem:[%s1 + $0x60] sm:$0xf]
    %v49 = vld [vmem:[%s1 + $0x64] sm:$0xf]
    %v50 = vld [vmem:[%s1 + $0x68] sm:$0xf]
    %v51 = vld [vmem:[%s1 + $0x6c] sm:$0xf]
    %v52 = vld [vmem:[%s1 + $0x70] sm:$0xf]
    %v53 = vld [vmem:[%s1 + $0x74] sm:$0xf]
    %v54 = vld [vmem:[%s1 + $0x78] sm:$0xf]
    %v55 = vld [vmem:[%s1 + $0x7c] sm:$0xf]
    %v56 = vld [vmem:[%s1 + $0x80] sm:$0xf]
    %v57 = vld [vmem:[%s1 + $0x84] sm:$0xf]
    %v58 = vld [vmem:[%s1 + $0x88] sm:$0xf]
    %v59 = vld [vmem:[%s1 + $0x8c] sm:$0xf]
    %v60 = vld [vmem:[%s2] sm:$0x1]
    %v62 = vlaneseq
    %v63 = vshrl.u32 %v62, 7
    %v64 = vsub.s32 0, %v63
    %v65 = vrot.slane %v60, %v64
    %v75 = vunpack.c.l.b16 %v16
    %v76 = vunpack.c.h.b16 %v16
    %v77 = vunpack.c.l.b16 %v17
    %v78 = vunpack.c.l.b16 %v18
    %v79 = vunpack.c.h.b16 %v18
    %v80 = vunpack.c.l.b16 %v19
    %v81 = vunpack.c.l.b16 %v20
    %v82 = vunpack.c.h.b16 %v20
    %v83 = vunpack.c.l.b16 %v21
    %v84 = vunpack.c.l.b16 %v22
    %v85 = vunpack.c.h.b16 %v22
    %v86 = vunpack.c.l.b16 %v23
    %v87 = vpack.c.b16 %v78, %v75
    %v88 = vpack.c.b16 %v79, %v76
    %v89 = vpack.c.b16 %v80, %v77
    %v90 = vpack.c.b16 %v84, %v81
    %v91 = vpack.c.b16 %v85, %v82
    %v92 = vpack.c.b16 %v86, %v83
    %v133 = vunpack.c.l.b16 %v24
    %v134 = vunpack.c.l.b16 %v25
    %v135 = vunpack.c.l.b16 %v26
    %v136 = vunpack.c.l.b16 %v27
    %v137 = vunpack.c.l.b16 %v28
    %v138 = vunpack.c.l.b16 %v29
    %v139 = vunpack.c.l.b16 %v30
    %v140 = vunpack.c.l.b16 %v31
    %v141 = vunpack.c.l.b16 %v32
    %v142 = vunpack.c.l.b16 %v33
    %v143 = vunpack.c.l.b16 %v34
    %v144 = vunpack.c.l.b16 %v35
    %v145 = vunpack.c.l.b16 %v36
    %v146 = vunpack.c.l.b16 %v37
    %v147 = vunpack.c.l.b16 %v38
    %v148 = vunpack.c.l.b16 %v39
    %v149 = vunpack.c.l.b16 %v40
    %v150 = vunpack.c.l.b16 %v41
    %v151 = vunpack.c.l.b16 %v42
    %v152 = vunpack.c.l.b16 %v43
    %v153 = vunpack.c.l.b16 %v44
    %v154 = vunpack.c.l.b16 %v45
    %v155 = vunpack.c.l.b16 %v46
    %v156 = vunpack.c.l.b16 %v47
    %v157 = vunpack.c.l.b16 %v48
    %v158 = vunpack.c.l.b16 %v49
    %v159 = vunpack.c.l.b16 %v50
    %v160 = vunpack.c.l.b16 %v51
    %v161 = vunpack.c.l.b16 %v52
    %v162 = vunpack.c.l.b16 %v53
    %v163 = vunpack.c.l.b16 %v54
    %v164 = vunpack.c.l.b16 %v55
    %v165 = vunpack.c.l.b16 %v56
    %v166 = vunpack.c.l.b16 %v57
    %v167 = vunpack.c.l.b16 %v58
    %v168 = vunpack.c.l.b16 %v59
    %v169 = vpack.c.b16 %v134, %v133
    %v170 = vpack.c.b16 %v136, %v135
    %v171 = vpack.c.b16 %v138, %v137
    %v172 = vpack.c.b16 %v140, %v139
    %v173 = vpack.c.b16 %v142, %v141
    %v174 = vpack.c.b16 %v144, %v143
    %v175 = vpack.c.b16 %v146, %v145
    %v176 = vpack.c.b16 %v148, %v147
    %v177 = vpack.c.b16 %v150, %v149
    %v178 = vpack.c.b16 %v152, %v151
    %v179 = vpack.c.b16 %v154, %v153
    %v180 = vpack.c.b16 %v156, %v155
    %v181 = vpack.c.b16 %v158, %v157
    %v182 = vpack.c.b16 %v160, %v159
    %v183 = vpack.c.b16 %v162, %v161
    %v184 = vpack.c.b16 %v164, %v163
    %v185 = vpack.c.b16 %v166, %v165
    %v186 = vpack.c.b16 %v168, %v167
    %vm205 = vcmask 261120
    %v207 = vsel %vm205, %v89, 0
    %v210 = vsel %vm205, %v92, 0
    %212 = vmatprep.subr.bf16.mxu0 0
    %213 = vmatpush1.bf16.msra.mxu0 %v169
    %214 = vmatprep.subr.bf16.mxu0 0
    %215 = vmatpush1.bf16.msra.mxu0 %v170
    %216 = vmatprep.subr.bf16.mxu0 0
    %217 = vmatpush1.bf16.msra.mxu0 %v171
    %218 = vmatprep.subr.bf16.mxu0 0
    %219 = vmatpush1.bf16.msra.mxu0 %v172
    %220 = vmatprep.subr.bf16.mxu0 0
    %221 = vmatpush1.bf16.msra.mxu0 %v173
    %222 = vmatprep.subr.bf16.mxu0 0
    %223 = vmatpush1.bf16.msra.mxu0 %v174
    %224 = vmatprep.subr.bf16.mxu0 0
    %225 = vmatpush1.bf16.msra.mxu0 %v175
    %226 = vmatprep.subr.bf16.mxu0 0
    %227 = vmatpush1.bf16.msra.mxu0 %v176
    %228 = vmatprep.subr.bf16.mxu0 0
    %229 = vmatpush1.bf16.msra.mxu0 %v177
    %230 = vmatprep.subr.bf16.mxu0 0
    %231 = vmatpush1.bf16.msra.mxu0 %v178
    %232 = vmatprep.subr.bf16.mxu0 0
    %233 = vmatpush1.bf16.msra.mxu0 %v179
    %234 = vmatprep.subr.bf16.mxu0 0
    %235 = vmatpush1.bf16.msra.mxu0 %v180
    %236 = vmatprep.subr.bf16.mxu0 0
    %237 = vmatpush1.bf16.msra.mxu0 %v181
    %238 = vmatprep.subr.bf16.mxu0 0
    %239 = vmatpush1.bf16.msra.mxu0 %v182
    %240 = vmatprep.subr.bf16.mxu0 0
    %241 = vmatpush1.bf16.msra.mxu0 %v183
    %242 = vmatprep.subr.bf16.mxu0 0
    %243 = vmatpush1.bf16.msra.mxu0 %v184
    %244 = vmatprep.mubr.bf16.mxu0 %v88
    %245 = vmatmul.mubr.bf16.gmra.mrb[0].mxu0 %v87
    %v246 = vpop.f32.mrb[0].mxu0
    %v247 = vadd.f32 %v65, %v246
    %v248 = vpop.f32.mrb[0].mxu0
    %v249 = vpop.f32.mrb[0].mxu0
    %v250 = vadd.f32 %v65, %v249
    %v251 = vpop.f32.mrb[0].mxu0
    %252 = vmatprep.mubr.bf16.mxu0 %v91
    %253 = vmatmul.mubr.bf16.gmra.mrb[0].mxu0 %v90
    %v254 = vpop.f32.mrb[0].mxu0
    %v255 = vadd.f32 %v65, %v254
    %v256 = vpop.f32.mrb[0].mxu0
    %v257 = vpop.f32.mrb[0].mxu0
    %v258 = vadd.f32 %v65, %v257
    %v259 = vpop.f32.mrb[0].mxu0
    %260 = vdwg.mxu0
    %261 = vmatprep.subr.bf16.mxu0 0
    %262 = vmatpush1.bf16.msra.mxu0 %v185
    %263 = vmatprep.subr.bf16.mxu0 0
    %264 = vmatpush1.bf16.msra.mxu0 %v186
    %265 = vmatprep.subr.bf16.mxu0 0
    %266 = vmatpush1.bf16.msra.mxu0 0
    %267 = vmatprep.subr.bf16.mxu0 0
    %268 = vmatpush1.bf16.msra.mxu0 0
    %269 = vmatprep.subr.bf16.mxu0 0
    %270 = vmatpush1.bf16.msra.mxu0 0
    %271 = vmatprep.subr.bf16.mxu0 0
    %272 = vmatpush1.bf16.msra.mxu0 0
    %273 = vmatprep.subr.bf16.mxu0 0
    %274 = vmatpush1.bf16.msra.mxu0 0
    %275 = vmatprep.subr.bf16.mxu0 0
    %276 = vmatpush1.bf16.msra.mxu0 0
    %277 = vmatprep.subr.bf16.mxu0 0
    %278 = vmatpush1.bf16.msra.mxu0 0
    %279 = vmatprep.subr.bf16.mxu0 0
    %280 = vmatpush1.bf16.msra.mxu0 0
    %281 = vmatprep.subr.bf16.mxu0 0
    %282 = vmatpush1.bf16.msra.mxu0 0
    %283 = vmatprep.subr.bf16.mxu0 0
    %284 = vmatpush1.bf16.msra.mxu0 0
    %285 = vmatprep.subr.bf16.mxu0 0
    %286 = vmatpush1.bf16.msra.mxu0 0
    %287 = vmatprep.subr.bf16.mxu0 0
    %288 = vmatpush1.bf16.msra.mxu0 0
    %289 = vmatprep.subr.bf16.mxu0 0
    %290 = vmatpush1.bf16.msra.mxu0 0
    %291 = vmatprep.subr.bf16.mxu0 0
    %292 = vmatpush1.bf16.msra.mxu0 0
    %293 = vmatprep.mubr.bf16.mxu0 0
    %294 = vmatmul.mubr.bf16.gmra.mrb[0].mxu0 %v207
    %v295 = vpop.f32.mrb[0].mxu0
    %v296 = vadd.f32 %v247, %v295
    %v297 = vpop.f32.mrb[0].mxu0
    %v298 = vpop.f32.mrb[0].mxu0
    %v299 = vadd.f32 %v250, %v298
    %v300 = vpop.f32.mrb[0].mxu0
    %301 = vmatprep.mubr.bf16.mxu0 0
    %302 = vmatmul.mubr.bf16.gmra.mrb[0].mxu0 %v210
    %v303 = vpop.f32.mrb[0].mxu0
    %v304 = vadd.f32 %v255, %v303
    %v305 = vpop.f32.mrb[0].mxu0
    %v306 = vpop.f32.mrb[0].mxu0
    %v307 = vadd.f32 %v258, %v306
    %v308 = vpop.f32.mrb[0].mxu0
    %309 = vdwg.mxu0
    %v310 = vmax.f32 %v296, 0.0
    %v311 = vmax.f32 %v299, 0.0
    %v312 = vmax.f32 %v304, 0.0
    %v313 = vmax.f32 %v307, 0.0
    %v314 = vpack.c.bf16 %v311, %v310
    %v315 = vpack.c.bf16 %v313, %v312
    %v318 = vunpack.c.l.b16 %v314
    %v319 = vunpack.c.h.b16 %v314
    %v320 = vunpack.c.l.b16 %v315
    %v321 = vunpack.c.h.b16 %v315
    %v322 = vpack.c.b16 %v318, %v318
    %v323 = vpack.c.b16 %v319, %v319
    %v324 = vpack.c.b16 %v320, %v320
    %v325 = vpack.c.b16 %v321, %v321
    %330 = vst [vmem:[#allocation2] sm:$0xf] %v322
    %331 = vst [vmem:[#allocation2 + $0x4] sm:$0xf] %v323
    %332 = vst [vmem:[#allocation2 + $0x8] sm:$0xf] %v324
    %333 = vst [vmem:[#allocation2 + $0xc] sm:$0xf] %v325
    // Predicated region
    $region14: #{panoptic_forward.6} parent=1 // pred_check
      _
    $region15: #{panoptic_forward.6} parent=1 // pred_check_branch
      %335 = sbr.rel (0) target = $region17
    $region16: #{panoptic_forward.6} parent=1 // pred_region
      %s337 = ssub.s32 256, 256
      %338 = vsyncadd [#allocation3], %s337
      %s339 = sshll.u32 [#allocation2], 4
      %s340 = int_to_ptr.vmem [resolvable:$true] %s339
      %345 = dma.vmem_to_hbm [thread:$0]  %s340, 256, %s3, [#allocation3], 64, 64, 4
    $region17: #{panoptic_forward.6} parent=1 // pred_fallthru
      _
    // Predicated region
    $region18: #{panoptic_forward.6} parent=1 // pred_check
      _
    $region19: #{panoptic_forward.6} parent=1 // pred_check_branch
      %347 = sbr.rel (0) target = $region21
    $region20: #{panoptic_forward.6} parent=1 // pred_region
      %348 = dma.done [#allocation3], 256
    $region21: #{panoptic_forward.6} parent=1 // pred_fallthru
      _
    %349 = vsyncpa [#allocation3], 1

// kernel: panoptic_forward.7
$region0: #{panoptic_forward.7}
  #allocation0 [shape = 'u32[]', space=smem, size = 0x4, offset = 0x4, fixed_abs, tag = 'smem constant byte address 0x4 - core index']
  #allocation1 [shape = 'u32[144,128]{1,0:T(1,128)}', space=vmem, size = 0x12000, scoped, tag = 'internal scratch']
  %s0 = inlined_call_operand.vmem [shape: bf16[512,128], index: 0, kind: input, shape index: {}]
  %s1 = inlined_call_operand.vmem [shape: f32[512,1], index: 1, kind: input, shape index: {}]
  %s2 = inlined_call_operand.vmem [shape: bf16[128,128], index: 2, kind: input, shape index: {}]
  %s3 = inlined_call_operand.vmem [shape: f32[1,128], index: 3, kind: input, shape index: {}]
  %s4 = inlined_call_operand.vmem [shape: bf16[128,128], index: 4, kind: input, shape index: {}]
  %s5 = inlined_call_operand.vmem [shape: f32[1,128], index: 5, kind: input, shape index: {}]
  %s6 = inlined_call_operand.vmem [shape: bf16[128,128], index: 6, kind: input, shape index: {}]
  %s7 = inlined_call_operand.vmem [shape: f32[1,128], index: 7, kind: input, shape index: {}]
  %s8 = inlined_call_operand.vmem [shape: bf16[128,128], index: 8, kind: input, shape index: {}]
  %s9 = inlined_call_operand.vmem [shape: f32[1,128], index: 9, kind: input, shape index: {}]
  %s10 = inlined_call_operand.vmem [shape: bf16[512,128], index: 10, kind: output, shape index: {0}]
  %s11 = inlined_call_operand.vmem [shape: f32[16,128], index: 11, kind: output, shape index: {1}]
  %12 = xla_tuple %s10, %s11
  %s13 = sld [smem:[#allocation0]]
  $region81: #{panoptic_forward.7} parent=0
    _
  %s15 = ssub.s32 1, %s13
  %s16 = scalar_select 0, %s15, %s13
  loop: start=0, step=1, limit=4
  $region2: #{panoptic_forward.7} parent=0 // loop_pre_header
    _
  $region3: #{panoptic_forward.7} parent=0 // loop_header
    %s18 = sphi 0, %s22
    %p19 = scmp.ge.s32.totalorder %s18, 4
    %s28 = sphi 0, %s30
    %s31 = sphi 0, %s28
    %s32 = sphi 0, %s31
    %s48 = sphi 0, %s32
    %s54 = sphi 0, %s56
    %s57 = sphi 0, %s54
    %s58 = sphi 0, %s57
    %s74 = sphi 0, %s58
    %s78 = sphi 0, %s78
    %s80 = sphi 0, %s78
    %s81 = sphi 0, %s80
    %s95 = sphi 0, %s81
    %s99 = sphi 0, %s99
    %s101 = sphi 0, %s99
    %s102 = sphi 0, %s101
    %s116 = sphi 0, %s102
    %s120 = sphi 0, %s120
    %s122 = sphi 0, %s120
    %s123 = sphi 0, %s122
    %s137 = sphi 0, %s123
    %s141 = sphi 0, %s141
    %s143 = sphi 0, %s141
    %s144 = sphi 0, %s143
    %s158 = sphi 0, %s144
    %s162 = sphi 0, %s162
    %s164 = sphi 0, %s162
    %s165 = sphi 0, %s164
    %s179 = sphi 0, %s165
    %s183 = sphi 0, %s183
    %s185 = sphi 0, %s183
    %s186 = sphi 0, %s185
    %s200 = sphi 0, %s186
    %s204 = sphi 0, %s204
    %s206 = sphi 0, %s204
    %s207 = sphi 0, %s206
    %s221 = sphi 0, %s207
    %s225 = sphi 0, %s225
    %s227 = sphi 0, %s225
    %s228 = sphi 0, %s227
    %s242 = sphi 0, %s228
    %s248 = sphi 0, %s250
    %s251 = sphi 0, %s248
    %s252 = sphi 0, %s251
    %s268 = sphi 0, %s252
    %s274 = sphi 0, %s276
    %s277 = sphi 0, %s274
    %s278 = sphi 0, %s277
    %s294 = sphi 0, %s278
  $region4: #{panoptic_forward.7} parent=0 // loop_header_branch
    %21 = sbr.rel (%p19) target = $region8
  $region5: #{panoptic_forward.7} parent=0 // loop_body
    %s23 = ssub.s32 %s18, 1
    %s24 = ssub.s32 %s18, 2
    %s25 = sadd.s32 %s18, 1
    %s26 = ssub.s32 %s18, %s25
    %p27 = scmp.eq.s32.totalorder %s26, 0
    %s29 = sadd.s32 %s28, 1
    %s30 = scalar_select %p27, %s28, %s29
    %p33 = pneg %p27
    %p34 = scmp.eq.s32.totalorder %s18, 1
    %p35 = por %p33, %p34
    %p36 = scmp.ne.s32.totalorder %s28, %s31
    %p37 = scmp.eq.s32.totalorder %s18, 0
    %p38 = por %p36, %p37
    %p39 = scmp.ne.s32.totalorder %s28, %s31
    %p40 = scmp.eq.s32.totalorder %s23, 1
    %p41 = por %p39, %p40
    %p42 = scmp.ne.s32.totalorder %s31, %s32
    %p43 = scmp.eq.s32.totalorder %s23, 0
    %p44 = por %p42, %p43
    %p45 = scmp.ne.s32.totalorder %s31, %s32
    %p46 = scmp.eq.s32.totalorder %s24, 1
    %p47 = por %p45, %p46
    %p49 = scmp.ne.s32.totalorder %s32, %s48
    %p50 = scmp.eq.s32.totalorder %s24, 0
    %p51 = por %p49, %p50
    %s52 = ssub.s32 %s18, %s25
    %p53 = scmp.eq.s32.totalorder %s52, 0
    %s55 = sadd.s32 %s54, 1
    %s56 = scalar_select %p53, %s54, %s55
    %p59 = pneg %p53
    %p60 = scmp.eq.s32.totalorder %s18, 1
    %p61 = por %p59, %p60
    %p62 = scmp.ne.s32.totalorder %s54, %s57
    %p63 = scmp.eq.s32.totalorder %s18, 0
    %p64 = por %p62, %p63
    %p65 = scmp.ne.s32.totalorder %s54, %s57
    %p66 = scmp.eq.s32.totalorder %s23, 1
    %p67 = por %p65, %p66
    %p68 = scmp.ne.s32.totalorder %s57, %s58
    %p69 = scmp.eq.s32.totalorder %s23, 0
    %p70 = por %p68, %p69
    %p71 = scmp.ne.s32.totalorder %s57, %s58
    %p72 = scmp.eq.s32.totalorder %s24, 1
    %p73 = por %p71, %p72
    %p75 = scmp.ne.s32.totalorder %s58, %s74
    %p76 = scmp.eq.s32.totalorder %s24, 0
    %p77 = por %p75, %p76
    %s79 = sadd.s32 %s78, 1
    %p82 = scmp.eq.s32.totalorder %s18, 1
    %p83 = scmp.ne.s32.totalorder %s78, %s80
    %p84 = scmp.eq.s32.totalorder %s18, 0
    %p85 = por %p83, %p84
    %p86 = scmp.ne.s32.totalorder %s78, %s80
    %p87 = scmp.eq.s32.totalorder %s23, 1
    %p88 = por %p86, %p87
    %p89 = scmp.ne.s32.totalorder %s80, %s81
    %p90 = scmp.eq.s32.totalorder %s23, 0
    %p91 = por %p89, %p90
    %p92 = scmp.ne.s32.totalorder %s80, %s81
    %p93 = scmp.eq.s32.totalorder %s24, 1
    %p94 = por %p92, %p93
    %p96 = scmp.ne.s32.totalorder %s81, %s95
    %p97 = scmp.eq.s32.totalorder %s24, 0
    %p98 = por %p96, %p97
    %s100 = sadd.s32 %s99, 1
    %p103 = scmp.eq.s32.totalorder %s18, 1
    %p104 = scmp.ne.s32.totalorder %s99, %s101
    %p105 = scmp.eq.s32.totalorder %s18, 0
    %p106 = por %p104, %p105
    %p107 = scmp.ne.s32.totalorder %s99, %s101
    %p108 = scmp.eq.s32.totalorder %s23, 1
    %p109 = por %p107, %p108
    %p110 = scmp.ne.s32.totalorder %s101, %s102
    %p111 = scmp.eq.s32.totalorder %s23, 0
    %p112 = por %p110, %p111
    %p113 = scmp.ne.s32.totalorder %s101, %s102
    %p114 = scmp.eq.s32.totalorder %s24, 1
    %p115 = por %p113, %p114
    %p117 = scmp.ne.s32.totalorder %s102, %s116
    %p118 = scmp.eq.s32.totalorder %s24, 0
    %p119 = por %p117, %p118
    %s121 = sadd.s32 %s120, 1
    %p124 = scmp.eq.s32.totalorder %s18, 1
    %p125 = scmp.ne.s32.totalorder %s120, %s122
    %p126 = scmp.eq.s32.totalorder %s18, 0
    %p127 = por %p125, %p126
    %p128 = scmp.ne.s32.totalorder %s120, %s122
    %p129 = scmp.eq.s32.totalorder %s23, 1
    %p130 = por %p128, %p129
    %p131 = scmp.ne.s32.totalorder %s122, %s123
    %p132 = scmp.eq.s32.totalorder %s23, 0
    %p133 = por %p131, %p132
    %p134 = scmp.ne.s32.totalorder %s122, %s123
    %p135 = scmp.eq.s32.totalorder %s24, 1
    %p136 = por %p134, %p135
    %p138 = scmp.ne.s32.totalorder %s123, %s137
    %p139 = scmp.eq.s32.totalorder %s24, 0
    %p140 = por %p138, %p139
    %s142 = sadd.s32 %s141, 1
    %p145 = scmp.eq.s32.totalorder %s18, 1
    %p146 = scmp.ne.s32.totalorder %s141, %s143
    %p147 = scmp.eq.s32.totalorder %s18, 0
    %p148 = por %p146, %p147
    %p149 = scmp.ne.s32.totalorder %s141, %s143
    %p150 = scmp.eq.s32.totalorder %s23, 1
    %p151 = por %p149, %p150
    %p152 = scmp.ne.s32.totalorder %s143, %s144
    %p153 = scmp.eq.s32.totalorder %s23, 0
    %p154 = por %p152, %p153
    %p155 = scmp.ne.s32.totalorder %s143, %s144
    %p156 = scmp.eq.s32.totalorder %s24, 1
    %p157 = por %p155, %p156
    %p159 = scmp.ne.s32.totalorder %s144, %s158
    %p160 = scmp.eq.s32.totalorder %s24, 0
    %p161 = por %p159, %p160
    %s163 = sadd.s32 %s162, 1
    %p166 = scmp.eq.s32.totalorder %s18, 1
    %p167 = scmp.ne.s32.totalorder %s162, %s164
    %p168 = scmp.eq.s32.totalorder %s18, 0
    %p169 = por %p167, %p168
    %p170 = scmp.ne.s32.totalorder %s162, %s164
    %p171 = scmp.eq.s32.totalorder %s23, 1
    %p172 = por %p170, %p171
    %p173 = scmp.ne.s32.totalorder %s164, %s165
    %p174 = scmp.eq.s32.totalorder %s23, 0
    %p175 = por %p173, %p174
    %p176 = scmp.ne.s32.totalorder %s164, %s165
    %p177 = scmp.eq.s32.totalorder %s24, 1
    %p178 = por %p176, %p177
    %p180 = scmp.ne.s32.totalorder %s165, %s179
    %p181 = scmp.eq.s32.totalorder %s24, 0
    %p182 = por %p180, %p181
    %s184 = sadd.s32 %s183, 1
    %p187 = scmp.eq.s32.totalorder %s18, 1
    %p188 = scmp.ne.s32.totalorder %s183, %s185
    %p189 = scmp.eq.s32.totalorder %s18, 0
    %p190 = por %p188, %p189
    %p191 = scmp.ne.s32.totalorder %s183, %s185
    %p192 = scmp.eq.s32.totalorder %s23, 1
    %p193 = por %p191, %p192
    %p194 = scmp.ne.s32.totalorder %s185, %s186
    %p195 = scmp.eq.s32.totalorder %s23, 0
    %p196 = por %p194, %p195
    %p197 = scmp.ne.s32.totalorder %s185, %s186
    %p198 = scmp.eq.s32.totalorder %s24, 1
    %p199 = por %p197, %p198
    %p201 = scmp.ne.s32.totalorder %s186, %s200
    %p202 = scmp.eq.s32.totalorder %s24, 0
    %p203 = por %p201, %p202
    %s205 = sadd.s32 %s204, 1
    %p208 = scmp.eq.s32.totalorder %s18, 1
    %p209 = scmp.ne.s32.totalorder %s204, %s206
    %p210 = scmp.eq.s32.totalorder %s18, 0
    %p211 = por %p209, %p210
    %p212 = scmp.ne.s32.totalorder %s204, %s206
    %p213 = scmp.eq.s32.totalorder %s23, 1
    %p214 = por %p212, %p213
    %p215 = scmp.ne.s32.totalorder %s206, %s207
    %p216 = scmp.eq.s32.totalorder %s23, 0
    %p217 = por %p215, %p216
    %p218 = scmp.ne.s32.totalorder %s206, %s207
    %p219 = scmp.eq.s32.totalorder %s24, 1
    %p220 = por %p218, %p219
    %p222 = scmp.ne.s32.totalorder %s207, %s221
    %p223 = scmp.eq.s32.totalorder %s24, 0
    %p224 = por %p222, %p223
    %s226 = sadd.s32 %s225, 1
    %p229 = scmp.eq.s32.totalorder %s18, 1
    %p230 = scmp.ne.s32.totalorder %s225, %s227
    %p231 = scmp.eq.s32.totalorder %s18, 0
    %p232 = por %p230, %p231
    %p233 = scmp.ne.s32.totalorder %s225, %s227
    %p234 = scmp.eq.s32.totalorder %s23, 1
    %p235 = por %p233, %p234
    %p236 = scmp.ne.s32.totalorder %s227, %s228
    %p237 = scmp.eq.s32.totalorder %s23, 0
    %p238 = por %p236, %p237
    %p239 = scmp.ne.s32.totalorder %s227, %s228
    %p240 = scmp.eq.s32.totalorder %s24, 1
    %p241 = por %p239, %p240
    %p243 = scmp.ne.s32.totalorder %s228, %s242
    %p244 = scmp.eq.s32.totalorder %s24, 0
    %p245 = por %p243, %p244
    %s246 = ssub.s32 %s18, %s25
    %p247 = scmp.eq.s32.totalorder %s246, 0
    %s249 = sadd.s32 %s248, 1
    %s250 = scalar_select %p247, %s248, %s249
    %p253 = pneg %p247
    %p254 = scmp.eq.s32.totalorder %s18, 1
    %p255 = por %p253, %p254
    %p256 = scmp.ne.s32.totalorder %s248, %s251
    %p257 = scmp.eq.s32.totalorder %s18, 0
    %p258 = por %p256, %p257
    %p259 = scmp.ne.s32.totalorder %s248, %s251
    %p260 = scmp.eq.s32.totalorder %s23, 1
    %p261 = por %p259, %p260
    %p262 = scmp.ne.s32.totalorder %s251, %s252
    %p263 = scmp.eq.s32.totalorder %s23, 0
    %p264 = por %p262, %p263
    %p265 = scmp.ne.s32.totalorder %s251, %s252
    %p266 = scmp.eq.s32.totalorder %s24, 1
    %p267 = por %p265, %p266
    %p269 = scmp.ne.s32.totalorder %s252, %s268
    %p270 = scmp.eq.s32.totalorder %s24, 0
    %p271 = por %p269, %p270
    %s272 = ssub.s32 %s18, %s25
    %p273 = scmp.eq.s32.totalorder %s272, 0
    %s275 = sadd.s32 %s274, 1
    %s276 = scalar_select %p273, %s274, %s275
    %p279 = pneg %p273
    %p280 = scmp.eq.s32.totalorder %s18, 1
    %p281 = por %p279, %p280
    %p282 = scmp.ne.s32.totalorder %s274, %s277
    %p283 = scmp.eq.s32.totalorder %s18, 0
    %p284 = por %p282, %p283
    %p285 = scmp.ne.s32.totalorder %s274, %s277
    %p286 = scmp.eq.s32.totalorder %s23, 1
    %p287 = por %p285, %p286
    %p288 = scmp.ne.s32.totalorder %s277, %s278
    %p289 = scmp.eq.s32.totalorder %s23, 0
    %p290 = por %p288, %p289
    %p291 = scmp.ne.s32.totalorder %s277, %s278
    %p292 = scmp.eq.s32.totalorder %s24, 1
    %p293 = por %p291, %p292
    %p295 = scmp.ne.s32.totalorder %s278, %s294
    %p296 = scmp.eq.s32.totalorder %s24, 0
    %p297 = por %p295, %p296
    %p298 = scmp.le.s32.totalorder 1, %s18
    %p299 = scmp.lt.s32.totalorder %s18, 3
    %p300 = pnand %p298, %p299
    %p301 = pneg %p300
    // Predicated region
    $region9: #{panoptic_forward.7} parent=5 // pred_check
      _
    $region10: #{panoptic_forward.7} parent=5 // pred_check_branch
      %303 = sbr.rel (%p300) target = $region12
    $region11: #{panoptic_forward.7} parent=5 // pred_region
      %s304 = ssub.s32 %s18, 1
      // Predicated region
      $region13: #{panoptic_forward.7} parent=11 // pred_check
        %p305 = pneg %p91
      $region14: #{panoptic_forward.7} parent=11 // pred_check_branch
        %307 = sbr.rel (%p305) target = $region16
      $region15: #{panoptic_forward.7} parent=11 // pred_region
        _
      $region16: #{panoptic_forward.7} parent=11 // pred_fallthru
        _
      // Predicated region
      $region17: #{panoptic_forward.7} parent=11 // pred_check
        %p308 = pneg %p112
      $region18: #{panoptic_forward.7} parent=11 // pred_check_branch
        %310 = sbr.rel (%p308) target = $region20
      $region19: #{panoptic_forward.7} parent=11 // pred_region
        _
      $region20: #{panoptic_forward.7} parent=11 // pred_fallthru
        _
      // Predicated region
      $region21: #{panoptic_forward.7} parent=11 // pred_check
        %p311 = pneg %p133
      $region22: #{panoptic_forward.7} parent=11 // pred_check_branch
        %313 = sbr.rel (%p311) target = $region24
      $region23: #{panoptic_forward.7} parent=11 // pred_region
        _
      $region24: #{panoptic_forward.7} parent=11 // pred_fallthru
        _
      // Predicated region
      $region25: #{panoptic_forward.7} parent=11 // pred_check
        %p314 = pneg %p154
      $region26: #{panoptic_forward.7} parent=11 // pred_check_branch
        %316 = sbr.rel (%p314) target = $region28
      $region27: #{panoptic_forward.7} parent=11 // pred_region
        _
      $region28: #{panoptic_forward.7} parent=11 // pred_fallthru
        _
      // Predicated region
      $region29: #{panoptic_forward.7} parent=11 // pred_check
        %p317 = pneg %p175
      $region30: #{panoptic_forward.7} parent=11 // pred_check_branch
        %319 = sbr.rel (%p317) target = $region32
      $region31: #{panoptic_forward.7} parent=11 // pred_region
        _
      $region32: #{panoptic_forward.7} parent=11 // pred_fallthru
        _
      // Predicated region
      $region33: #{panoptic_forward.7} parent=11 // pred_check
        %p320 = pneg %p196
      $region34: #{panoptic_forward.7} parent=11 // pred_check_branch
        %322 = sbr.rel (%p320) target = $region36
      $region35: #{panoptic_forward.7} parent=11 // pred_region
        _
      $region36: #{panoptic_forward.7} parent=11 // pred_fallthru
        _
      // Predicated region
      $region37: #{panoptic_forward.7} parent=11 // pred_check
        %p323 = pneg %p217
      $region38: #{panoptic_forward.7} parent=11 // pred_check_branch
        %325 = sbr.rel (%p323) target = $region40
      $region39: #{panoptic_forward.7} parent=11 // pred_region
        _
      $region40: #{panoptic_forward.7} parent=11 // pred_fallthru
        _
      // Predicated region
      $region41: #{panoptic_forward.7} parent=11 // pred_check
        %p326 = pneg %p238
      $region42: #{panoptic_forward.7} parent=11 // pred_check_branch
        %328 = sbr.rel (%p326) target = $region44
      $region43: #{panoptic_forward.7} parent=11 // pred_region
        _
      $region44: #{panoptic_forward.7} parent=11 // pred_fallthru
        _
    $region12: #{panoptic_forward.7} parent=5 // pred_fallthru
      _
    %p329 = scmp.lt.s32.totalorder %s18, 2
    // Predicated region
    $region45: #{panoptic_forward.7} parent=5 // pred_check
      %p330 = pneg %p329
    $region46: #{panoptic_forward.7} parent=5 // pred_check_branch
      %332 = sbr.rel (%p330) target = $region48
    $region47: #{panoptic_forward.7} parent=5 // pred_region
      // Predicated region
      $region49: #{panoptic_forward.7} parent=47 // pred_check
        %p333 = pneg %p38
      $region50: #{panoptic_forward.7} parent=47 // pred_check_branch
        %335 = sbr.rel (%p333) target = $region52
      $region51: #{panoptic_forward.7} parent=47 // pred_region
        %s336 = smul.u32 32, %s18
        %p337 = scmp.lt.s32.totalorder %s336, 63
        %s338 = scalar_select %p337, %s336, 63
        %s339 = smul.addr %s338, 4
        %s340 = scalar_lea.vmem %s0, %s339
        %s341 = smul.u32 32, %s18
      $region52: #{panoptic_forward.7} parent=47 // pred_fallthru
        _
      // Predicated region
      $region53: #{panoptic_forward.7} parent=47 // pred_check
        %p342 = pneg %p64
      $region54: #{panoptic_forward.7} parent=47 // pred_check_branch
        %344 = sbr.rel (%p342) target = $region56
      $region55: #{panoptic_forward.7} parent=47 // pred_region
        %s345 = smul.u32 32, %s18
        %p346 = scmp.lt.s32.totalorder %s345, 63
        %s347 = scalar_select %p346, %s345, 63
        %s348 = smul.addr %s347, 8
        %s349 = scalar_lea.vmem %s1, %s348
        %s350 = smul.u32 32, %s18
      $region56: #{panoptic_forward.7} parent=47 // pred_fallthru
        _
    $region48: #{panoptic_forward.7} parent=5 // pred_fallthru
      _
    %p351 = scmp.le.s32.totalorder 1, %s18
    %p352 = scmp.lt.s32.totalorder %s18, 3
    %p353 = pnand %p351, %p352
    %p354 = pneg %p353
    // Predicated region
    $region57: #{panoptic_forward.7} parent=5 // pred_check
      _
    $region58: #{panoptic_forward.7} parent=5 // pred_check_branch
      %356 = sbr.rel (%p353) target = $region60
    $region59: #{panoptic_forward.7} parent=5 // pred_region
      %s357 = ssub.s32 %s18, 1
      %s358 = smul.u32 32, %s23
      %p359 = scmp.lt.s32.totalorder %s358, 63
      %s360 = scalar_select %p359, %s358, 63
      %s361 = smul.addr %s360, 4
      %s362 = scalar_lea.vmem %s0, %s361
      %p363 = pneg %p44
      %p364 = pneg %p41
      %s365 = smul.u32 32, %s23
      %p366 = scmp.lt.s32.totalorder %s365, 63
      %s367 = scalar_select %p366, %s365, 63
      %s368 = smul.addr %s367, 8
      %s369 = scalar_lea.vmem %s1, %s368
      %p370 = pneg %p70
      %p371 = pneg %p67
      %p372 = pneg %p91
      %p373 = pneg %p88
      %p374 = pneg %p112
      %p375 = pneg %p109
      %p376 = pneg %p133
      %p377 = pneg %p130
      %p378 = pneg %p154
      %p379 = pneg %p151
      %p380 = pneg %p175
      %p381 = pneg %p172
      %p382 = pneg %p196
      %p383 = pneg %p193
      %p384 = pneg %p217
      %p385 = pneg %p214
      %p386 = pneg %p238
      %p387 = pneg %p235
      %p388 = pneg %p264
      %p389 = pneg %p261
      %s390 = smul.u32 32, %s23
      %p391 = scmp.lt.s32.totalorder %s390, 63
      %s392 = scalar_select %p391, %s390, 63
      %s393 = smul.addr %s392, 4
      %s394 = scalar_lea.vmem %s10, %s393
      %p395 = pneg %p290
      %p396 = pneg %p287
      %p397 = scmp.lt.s32.totalorder %s23, 1
      %s398 = scalar_select %p397, %s23, 1
      %s399 = smul.addr %s398, 8
      %s400 = scalar_lea.vmem %s11, %s399
      %s401 = smul.u32 32, %s23
      %p402 = scmp.lt.s32.totalorder %s401, 63
      %s403 = scalar_select %p402, %s401, 63
      %s404 = smul.addr %s403, 4
      %s405 = scalar_lea.vmem %s0, %s404
      %s406 = smul.u32 32, %s23
      %s407 = smul.u32 32, %s23
      %p408 = scmp.lt.s32.totalorder %s407, 63
      %s409 = scalar_select %p408, %s407, 63
      %s410 = smul.addr %s409, 8
      %s411 = scalar_lea.vmem %s1, %s410
      %s412 = smul.u32 32, %s23
      %s413 = smul.u32 32, %s23
      %p414 = scmp.lt.s32.totalorder %s413, 63
      %s415 = scalar_select %p414, %s413, 63
      %s416 = smul.addr %s415, 4
      %s417 = scalar_lea.vmem %s10, %s416
      %s418 = smul.u32 32, %s23
      %p419 = scmp.lt.s32.totalorder %s23, 1
      %s420 = scalar_select %p419, %s23, 1
      %s421 = smul.addr %s420, 8
      %s422 = scalar_lea.vmem %s11, %s421
      %v424 = vld [vmem:[%s405] sm:$0xf]
      %v425 = vld [vmem:[%s405 + $0x4] sm:$0xf]
      %v426 = vld [vmem:[%s405 + $0x8] sm:$0xf]
      %v427 = vld [vmem:[%s405 + $0xc] sm:$0xf]
      %v428 = vld [vmem:[%s405 + $0x10] sm:$0xf]
      %v429 = vld [vmem:[%s405 + $0x14] sm:$0xf]
      %v430 = vld [vmem:[%s405 + $0x18] sm:$0xf]
      %v431 = vld [vmem:[%s405 + $0x1c] sm:$0xf]
      %v432 = vld [vmem:[%s405 + $0x20] sm:$0xf]
      %v433 = vld [vmem:[%s405 + $0x24] sm:$0xf]
      %v434 = vld [vmem:[%s405 + $0x28] sm:$0xf]
      %v435 = vld [vmem:[%s405 + $0x2c] sm:$0xf]
      %v436 = vld [vmem:[%s405 + $0x30] sm:$0xf]
      %v437 = vld [vmem:[%s405 + $0x34] sm:$0xf]
      %v438 = vld [vmem:[%s405 + $0x38] sm:$0xf]
      %v439 = vld [vmem:[%s405 + $0x3c] sm:$0xf]
      %v440 = vld [vmem:[%s405 + $0x40] sm:$0xf]
      %v441 = vld [vmem:[%s405 + $0x44] sm:$0xf]
      %v442 = vld [vmem:[%s405 + $0x48] sm:$0xf]
      %v443 = vld [vmem:[%s405 + $0x4c] sm:$0xf]
      %v444 = vld [vmem:[%s405 + $0x50] sm:$0xf]
      %v445 = vld [vmem:[%s405 + $0x54] sm:$0xf]
      %v446 = vld [vmem:[%s405 + $0x58] sm:$0xf]
      %v447 = vld [vmem:[%s405 + $0x5c] sm:$0xf]
      %v448 = vld [vmem:[%s405 + $0x60] sm:$0xf]
      %v449 = vld [vmem:[%s405 + $0x64] sm:$0xf]
      %v450 = vld [vmem:[%s405 + $0x68] sm:$0xf]
      %v451 = vld [vmem:[%s405 + $0x6c] sm:$0xf]
      %v452 = vld [vmem:[%s405 + $0x70] sm:$0xf]
      %v453 = vld [vmem:[%s405 + $0x74] sm:$0xf]
      %v454 = vld [vmem:[%s405 + $0x78] sm:$0xf]
      %v455 = vld [vmem:[%s405 + $0x7c] sm:$0xf]
      %v456 = vlaneseq
      %v457 = vand.u32 %v456, 127
      %v458 = vld [vmem:[%s2] sm:$0xf]
      %v459 = vld [vmem:[%s2 + $0x4] sm:$0xf]
      %v460 = vld [vmem:[%s2 + $0x8] sm:$0xf]
      %v461 = vld [vmem:[%s2 + $0xc] sm:$0xf]
      %v462 = vld [vmem:[%s2 + $0x10] sm:$0xf]
      %v463 = vld [vmem:[%s2 + $0x14] sm:$0xf]
      %v464 = vld [vmem:[%s2 + $0x18] sm:$0xf]
      %v465 = vld [vmem:[%s2 + $0x1c] sm:$0xf]
      %v466 = vld [vmem:[%s2 + $0x20] sm:$0xf]
      %v467 = vld [vmem:[%s2 + $0x24] sm:$0xf]
      %v468 = vld [vmem:[%s2 + $0x28] sm:$0xf]
      %v469 = vld [vmem:[%s2 + $0x2c] sm:$0xf]
      %v470 = vld [vmem:[%s2 + $0x30] sm:$0xf]
      %v471 = vld [vmem:[%s2 + $0x34] sm:$0xf]
      %v472 = vld [vmem:[%s2 + $0x38] sm:$0xf]
      %v473 = vld [vmem:[%s2 + $0x3c] sm:$0xf]
      %v474 = vld [vmem:[%s3] sm:$0x1]
      %v476 = vlaneseq
      %v477 = vshrl.u32 %v476, 7
      %v478 = vsub.s32 0, %v477
      %v479 = vrot.slane %v474, %v478
      %v513 = vunpack.c.l.b16 %v424
      %v514 = vunpack.c.l.b16 %v425
      %v515 = vunpack.c.l.b16 %v426
      %v516 = vunpack.c.l.b16 %v427
      %v517 = vunpack.c.l.b16 %v428
      %v518 = vunpack.c.l.b16 %v429
      %v519 = vunpack.c.l.b16 %v430
      %v520 = vunpack.c.l.b16 %v431
      %v521 = vunpack.c.l.b16 %v432
      %v522 = vunpack.c.l.b16 %v433
      %v523 = vunpack.c.l.b16 %v434
      %v524 = vunpack.c.l.b16 %v435
      %v525 = vunpack.c.l.b16 %v436
      %v526 = vunpack.c.l.b16 %v437
      %v527 = vunpack.c.l.b16 %v438
      %v528 = vunpack.c.l.b16 %v439
      %v529 = vunpack.c.l.b16 %v440
      %v530 = vunpack.c.l.b16 %v441
      %v531 = vunpack.c.l.b16 %v442
      %v532 = vunpack.c.l.b16 %v443
      %v533 = vunpack.c.l.b16 %v444
      %v534 = vunpack.c.l.b16 %v445
      %v535 = vunpack.c.l.b16 %v446
      %v536 = vunpack.c.l.b16 %v447
      %v537 = vunpack.c.l.b16 %v448
      %v538 = vunpack.c.l.b16 %v449
      %v539 = vunpack.c.l.b16 %v450
      %v540 = vunpack.c.l.b16 %v451
      %v541 = vunpack.c.l.b16 %v452
      %v542 = vunpack.c.l.b16 %v453
      %v543 = vunpack.c.l.b16 %v454
      %v544 = vunpack.c.l.b16 %v455
      %v545 = vpack.c.b16 %v514, %v513
      %v546 = vpack.c.b16 %v516, %v515
      %v547 = vpack.c.b16 %v518, %v517
      %v548 = vpack.c.b16 %v520, %v519
      %v549 = vpack.c.b16 %v522, %v521
      %v550 = vpack.c.b16 %v524, %v523
      %v551 = vpack.c.b16 %v526, %v525
      %v552 = vpack.c.b16 %v528, %v527
      %v553 = vpack.c.b16 %v530, %v529
      %v554 = vpack.c.b16 %v532, %v531
      %v555 = vpack.c.b16 %v534, %v533
      %v556 = vpack.c.b16 %v536, %v535
      %v557 = vpack.c.b16 %v538, %v537
      %v558 = vpack.c.b16 %v540, %v539
      %v559 = vpack.c.b16 %v542, %v541
      %v560 = vpack.c.b16 %v544, %v543
      %v593 = vunpack.c.l.b16 %v458
      %v594 = vunpack.c.l.b16 %v459
      %v595 = vunpack.c.l.b16 %v460
      %v596 = vunpack.c.l.b16 %v461
      %v597 = vunpack.c.l.b16 %v462
      %v598 = vunpack.c.l.b16 %v463
      %v599 = vunpack.c.l.b16 %v464
      %v600 = vunpack.c.l.b16 %v465
      %v601 = vunpack.c.l.b16 %v466
      %v602 = vunpack.c.l.b16 %v467
      %v603 = vunpack.c.l.b16 %v468
      %v604 = vunpack.c.l.b16 %v469
      %v605 = vunpack.c.l.b16 %v470
      %v606 = vunpack.c.l.b16 %v471
      %v607 = vunpack.c.l.b16 %v472
      %v608 = vunpack.c.l.b16 %v473
      %v609 = vpack.c.b16 %v594, %v593
      %v610 = vpack.c.b16 %v596, %v595
      %v611 = vpack.c.b16 %v598, %v597
      %v612 = vpack.c.b16 %v600, %v599
      %v613 = vpack.c.b16 %v602, %v601
      %v614 = vpack.c.b16 %v604, %v603
      %v615 = vpack.c.b16 %v606, %v605
      %v616 = vpack.c.b16 %v608, %v607
      %625 = vmatprep.subr.bf16.mxu0 0
      %626 = vmatpush1.bf16.msra.mxu0 %v609
      %627 = vmatprep.subr.bf16.mxu0 0
      %628 = vmatpush1.bf16.msra.mxu0 %v610
      %629 = vmatprep.subr.bf16.mxu0 0
      %630 = vmatpush1.bf16.msra.mxu0 %v611
      %631 = vmatprep.subr.bf16.mxu0 0
      %632 = vmatpush1.bf16.msra.mxu0 %v612
      %633 = vmatprep.subr.bf16.mxu0 0
      %634 = vmatpush1.bf16.msra.mxu0 %v613
      %635 = vmatprep.subr.bf16.mxu0 0
      %636 = vmatpush1.bf16.msra.mxu0 %v614
      %637 = vmatprep.subr.bf16.mxu0 0
      %638 = vmatpush1.bf16.msra.mxu0 %v615
      %639 = vmatprep.subr.bf16.mxu0 0
      %640 = vmatpush1.bf16.msra.mxu0 %v616
      %641 = vmatprep.subr.bf16.mxu0 0
      %642 = vmatpush1.bf16.msra.mxu0 0
      %643 = vmatprep.subr.bf16.mxu0 0
      %644 = vmatpush1.bf16.msra.mxu0 0
      %645 = vmatprep.subr.bf16.mxu0 0
      %646 = vmatpush1.bf16.msra.mxu0 0
      %647 = vmatprep.subr.bf16.mxu0 0
      %648 = vmatpush1.bf16.msra.mxu0 0
      %649 = vmatprep.subr.bf16.mxu0 0
      %650 = vmatpush1.bf16.msra.mxu0 0
      %651 = vmatprep.subr.bf16.mxu0 0
      %652 = vmatpush1.bf16.msra.mxu0 0
      %653 = vmatprep.subr.bf16.mxu0 0
      %654 = vmatpush1.bf16.msra.mxu0 0
      %655 = vmatprep.subr.bf16.mxu0 0
      %656 = vmatpush1.bf16.msra.mxu0 0
      %657 = vmatprep.mubr.bf16.mxu0 0
      %658 = vmatmul.mubr.bf16.gmra.mrb[0].mxu0 %v545
      %v659 = vpop.f32.mrb[0].mxu0
      %v660 = vadd.f32 %v479, %v659
      %v661 = vpop.f32.mrb[0].mxu0
      %v662 = vpop.f32.mrb[0].mxu0
      %v663 = vadd.f32 %v479, %v662
      %v664 = vpop.f32.mrb[0].mxu0
      %665 = vmatprep.mubr.bf16.mxu0 0
      %666 = vmatmul.mubr.bf16.gmra.mrb[0].mxu0 %v546
      %v667 = vpop.f32.mrb[0].mxu0
      %v668 = vadd.f32 %v479, %v667
      %v669 = vpop.f32.mrb[0].mxu0
      %v670 = vpop.f32.mrb[0].mxu0
      %v671 = vadd.f32 %v479, %v670
      %v672 = vpop.f32.mrb[0].mxu0
      %673 = vmatprep.mubr.bf16.mxu0 0
      %674 = vmatmul.mubr.bf16.gmra.mrb[0].mxu0 %v547
      %v675 = vpop.f32.mrb[0].mxu0
      %v676 = vadd.f32 %v479, %v675
      %v677 = vpop.f32.mrb[0].mxu0
      %v678 = vpop.f32.mrb[0].mxu0
      %v679 = vadd.f32 %v479, %v678
      %v680 = vpop.f32.mrb[0].mxu0
      %681 = vmatprep.mubr.bf16.mxu0 0
      %682 = vmatmul.mubr.bf16.gmra.mrb[0].mxu0 %v548
      %v683 = vpop.f32.mrb[0].mxu0
      %v684 = vadd.f32 %v479, %v683
      %v685 = vpop.f32.mrb[0].mxu0
      %v686 = vpop.f32.mrb[0].mxu0
      %v687 = vadd.f32 %v479, %v686
      %v688 = vpop.f32.mrb[0].mxu0
      %689 = vmatprep.mubr.bf16.mxu0 0
      %690 = vmatmul.mubr.bf16.gmra.mrb[0].mxu0 %v549
      %v691 = vpop.f32.mrb[0].mxu0
      %v692 = vadd.f32 %v479, %v691
      %v693 = vpop.f32.mrb[0].mxu0
      %v694 = vpop.f32.mrb[0].mxu0
      %v695 = vadd.f32 %v479, %v694
      %v696 = vpop.f32.mrb[0].mxu0
      %697 = vmatprep.mubr.bf16.mxu0 0
      %698 = vmatmul.mubr.bf16.gmra.mrb[0].mxu0 %v550
      %v699 = vpop.f32.mrb[0].mxu0
      %v700 = vadd.f32 %v479, %v699
      %v701 = vpop.f32.mrb[0].mxu0
      %v702 = vpop.f32.mrb[0].mxu0
      %v703 = vadd.f32 %v479, %v702
      %v704 = vpop.f32.mrb[0].mxu0
      %705 = vmatprep.mubr.bf16.mxu0 0
      %706 = vmatmul.mubr.bf16.gmra.mrb[0].mxu0 %v551
      %v707 = vpop.f32.mrb[0].mxu0
      %v708 = vadd.f32 %v479, %v707
      %v709 = vpop.f32.mrb[0].mxu0
      %v710 = vpop.f32.mrb[0].mxu0
      %v711 = vadd.f32 %v479, %v710
      %v712 = vpop.f32.mrb[0].mxu0
      %713 = vmatprep.mubr.bf16.mxu0 0
      %714 = vmatmul.mubr.bf16.gmra.mrb[0].mxu0 %v552
      %v715 = vpop.f32.mrb[0].mxu0
      %v716 = vadd.f32 %v479, %v715
      %v717 = vpop.f32.mrb[0].mxu0
      %v718 = vpop.f32.mrb[0].mxu0
      %v719 = vadd.f32 %v479, %v718
      %v720 = vpop.f32.mrb[0].mxu0
      %721 = vmatprep.mubr.bf16.mxu0 0
      %722 = vmatmul.mubr.bf16.gmra.mrb[0].mxu0 %v553
      %v723 = vpop.f32.mrb[0].mxu0
      %v724 = vadd.f32 %v479, %v723
      %v725 = vpop.f32.mrb[0].mxu0
      %v726 = vpop.f32.mrb[0].mxu0
      %v727 = vadd.f32 %v479, %v726
      %v728 = vpop.f32.mrb[0].mxu0
      %729 = vmatprep.mubr.bf16.mxu0 0
      %730 = vmatmul.mubr.bf16.gmra.mrb[0].mxu0 %v554
      %v731 = vpop.f32.mrb[0].mxu0
      %v732 = vadd.f32 %v479, %v731
      %v733 = vpop.f32.mrb[0].mxu0
      %v734 = vpop.f32.mrb[0].mxu0
      %v735 = vadd.f32 %v479, %v734
      %v736 = vpop.f32.mrb[0].mxu0
      %737 = vmatprep.mubr.bf16.mxu0 0
      %738 = vmatmul.mubr.bf16.gmra.mrb[0].mxu0 %v555
      %v739 = vpop.f32.mrb[0].mxu0
      %v740 = vadd.f32 %v479, %v739
      %v741 = vpop.f32.mrb[0].mxu0
      %v742 = vpop.f32.mrb[0].mxu0
      %v743 = vadd.f32 %v479, %v742
      %v744 = vpop.f32.mrb[0].mxu0
      %745 = vmatprep.mubr.bf16.mxu0 0
      %746 = vmatmul.mubr.bf16.gmra.mrb[0].mxu0 %v556
      %v747 = vpop.f32.mrb[0].mxu0
      %v748 = vadd.f32 %v479, %v747
      %v749 = vpop.f32.mrb[0].mxu0
      %v750 = vpop.f32.mrb[0].mxu0
      %v751 = vadd.f32 %v479, %v750
      %v752 = vpop.f32.mrb[0].mxu0
      %753 = vmatprep.mubr.bf16.mxu0 0
      %754 = vmatmul.mubr.bf16.gmra.mrb[0].mxu0 %v557
      %v755 = vpop.f32.mrb[0].mxu0
      %v756 = vadd.f32 %v479, %v755
      %v757 = vpop.f32.mrb[0].mxu0
      %v758 = vpop.f32.mrb[0].mxu0
      %v759 = vadd.f32 %v479, %v758
      %v760 = vpop.f32.mrb[0].mxu0
      %761 = vmatprep.mubr.bf16.mxu0 0
      %762 = vmatmul.mubr.bf16.gmra.mrb[0].mxu0 %v558
      %v763 = vpop.f32.mrb[0].mxu0
      %v764 = vadd.f32 %v479, %v763
      %v765 = vpop.f32.mrb[0].mxu0
      %v766 = vpop.f32.mrb[0].mxu0
      %v767 = vadd.f32 %v479, %v766
      %v768 = vpop.f32.mrb[0].mxu0
      %769 = vmatprep.mubr.bf16.mxu0 0
      %770 = vmatmul.mubr.bf16.gmra.mrb[0].mxu0 %v559
      %v771 = vpop.f32.mrb[0].mxu0
      %v772 = vadd.f32 %v479, %v771
      %v773 = vpop.f32.mrb[0].mxu0
      %v774 = vpop.f32.mrb[0].mxu0
      %v775 = vadd.f32 %v479, %v774
      %v776 = vpop.f32.mrb[0].mxu0
      %777 = vmatprep.mubr.bf16.mxu0 0
      %778 = vmatmul.mubr.bf16.gmra.mrb[0].mxu0 %v560
      %v779 = vpop.f32.mrb[0].mxu0
      %v780 = vadd.f32 %v479, %v779
      %v781 = vpop.f32.mrb[0].mxu0
      %v782 = vpop.f32.mrb[0].mxu0
      %v783 = vadd.f32 %v479, %v782
      %v784 = vpop.f32.mrb[0].mxu0
      %785 = vdwg.mxu0
      %v786 = vmax.f32 %v660, 0.0
      %v787 = vmax.f32 %v663, 0.0
      %v788 = vmax.f32 %v668, 0.0
      %v789 = vmax.f32 %v671, 0.0
      %v790 = vmax.f32 %v676, 0.0
      %v791 = vmax.f32 %v679, 0.0
      %v792 = vmax.f32 %v684, 0.0
      %v793 = vmax.f32 %v687, 0.0
      %v794 = vmax.f32 %v692, 0.0
      %v795 = vmax.f32 %v695, 0.0
      %v796 = vmax.f32 %v700, 0.0
      %v797 = vmax.f32 %v703, 0.0
      %v798 = vmax.f32 %v708, 0.0
      %v799 = vmax.f32 %v711, 0.0
      %v800 = vmax.f32 %v716, 0.0
      %v801 = vmax.f32 %v719, 0.0
      %v802 = vmax.f32 %v724, 0.0
      %v803 = vmax.f32 %v727, 0.0
      %v804 = vmax.f32 %v732, 0.0
      %v805 = vmax.f32 %v735, 0.0
      %v806 = vmax.f32 %v740, 0.0
      %v807 = vmax.f32 %v743, 0.0
      %v808 = vmax.f32 %v748, 0.0
      %v809 = vmax.f32 %v751, 0.0
      %v810 = vmax.f32 %v756, 0.0
      %v811 = vmax.f32 %v759, 0.0
      %v812 = vmax.f32 %v764, 0.0
      %v813 = vmax.f32 %v767, 0.0
      %v814 = vmax.f32 %v772, 0.0
      %v815 = vmax.f32 %v775, 0.0
      %v816 = vmax.f32 %v780, 0.0
      %v817 = vmax.f32 %v783, 0.0
      %v818 = vpack.c.bf16 %v787, %v786
      %v819 = vpack.c.bf16 %v789, %v788
      %v820 = vpack.c.bf16 %v791, %v790
      %v821 = vpack.c.bf16 %v793, %v792
      %v822 = vpack.c.bf16 %v795, %v794
      %v823 = vpack.c.bf16 %v797, %v796
      %v824 = vpack.c.bf16 %v799, %v798
      %v825 = vpack.c.bf16 %v801, %v800
      %v826 = vpack.c.bf16 %v803, %v802
      %v827 = vpack.c.bf16 %v805, %v804
      %v828 = vpack.c.bf16 %v807, %v806
      %v829 = vpack.c.bf16 %v809, %v808
      %v830 = vpack.c.bf16 %v811, %v810
      %v831 = vpack.c.bf16 %v813, %v812
      %v832 = vpack.c.bf16 %v815, %v814
      %v833 = vpack.c.bf16 %v817, %v816
      %v834 = vld [vmem:[%s4] sm:$0xf]
      %v835 = vld [vmem:[%s4 + $0x4] sm:$0xf]
      %v836 = vld [vmem:[%s4 + $0x8] sm:$0xf]
      %v837 = vld [vmem:[%s4 + $0xc] sm:$0xf]
      %v838 = vld [vmem:[%s4 + $0x10] sm:$0xf]
      %v839 = vld [vmem:[%s4 + $0x14] sm:$0xf]
      %v840 = vld [vmem:[%s4 + $0x18] sm:$0xf]
      %v841 = vld [vmem:[%s4 + $0x1c] sm:$0xf]
      %v842 = vld [vmem:[%s4 + $0x20] sm:$0xf]
      %v843 = vld [vmem:[%s4 + $0x24] sm:$0xf]
      %v844 = vld [vmem:[%s4 + $0x28] sm:$0xf]
      %v845 = vld [vmem:[%s4 + $0x2c] sm:$0xf]
      %v846 = vld [vmem:[%s4 + $0x30] sm:$0xf]
      %v847 = vld [vmem:[%s4 + $0x34] sm:$0xf]
      %v848 = vld [vmem:[%s4 + $0x38] sm:$0xf]
      %v849 = vld [vmem:[%s4 + $0x3c] sm:$0xf]
      %v850 = vld [vmem:[%s5] sm:$0x1]
      %v852 = vlaneseq
      %v853 = vshrl.u32 %v852, 7
      %v854 = vsub.s32 0, %v853
      %v855 = vrot.slane %v850, %v854
      %v873 = vunpack.c.l.b16 %v834
      %v874 = vunpack.c.l.b16 %v835
      %v875 = vunpack.c.l.b16 %v836
      %v876 = vunpack.c.l.b16 %v837
      %v877 = vunpack.c.l.b16 %v838
      %v878 = vunpack.c.l.b16 %v839
      %v879 = vunpack.c.l.b16 %v840
      %v880 = vunpack.c.l.b16 %v841
      %v881 = vunpack.c.l.b16 %v842
      %v882 = vunpack.c.l.b16 %v843
      %v883 = vunpack.c.l.b16 %v844
      %v884 = vunpack.c.l.b16 %v845
      %v885 = vunpack.c.l.b16 %v846
      %v886 = vunpack.c.l.b16 %v847
      %v887 = vunpack.c.l.b16 %v848
      %v888 = vunpack.c.l.b16 %v849
      %v889 = vpack.c.b16 %v874, %v873
      %v890 = vpack.c.b16 %v876, %v875
      %v891 = vpack.c.b16 %v878, %v877
      %v892 = vpack.c.b16 %v880, %v879
      %v893 = vpack.c.b16 %v882, %v881
      %v894 = vpack.c.b16 %v884, %v883
      %v895 = vpack.c.b16 %v886, %v885
      %v896 = vpack.c.b16 %v888, %v887
      %905 = vmatprep.subr.bf16.mxu0 0
      %906 = vmatpush1.bf16.msra.mxu0 %v889
      %907 = vmatprep.subr.bf16.mxu0 0
      %908 = vmatpush1.bf16.msra.mxu0 %v890
      %909 = vmatprep.subr.bf16.mxu0 0
      %910 = vmatpush1.bf16.msra.mxu0 %v891
      %911 = vmatprep.subr.bf16.mxu0 0
      %912 = vmatpush1.bf16.msra.mxu0 %v892
      %913 = vmatprep.subr.bf16.mxu0 0
      %914 = vmatpush1.bf16.msra.mxu0 %v893
      %915 = vmatprep.subr.bf16.mxu0 0
      %916 = vmatpush1.bf16.msra.mxu0 %v894
      %917 = vmatprep.subr.bf16.mxu0 0
      %918 = vmatpush1.bf16.msra.mxu0 %v895
      %919 = vmatprep.subr.bf16.mxu0 0
      %920 = vmatpush1.bf16.msra.mxu0 %v896
      %921 = vmatprep.subr.bf16.mxu0 0
      %922 = vmatpush1.bf16.msra.mxu0 0
      %923 = vmatprep.subr.bf16.mxu0 0
      %924 = vmatpush1.bf16.msra.mxu0 0
      %925 = vmatprep.subr.bf16.mxu0 0
      %926 = vmatpush1.bf16.msra.mxu0 0
      %927 = vmatprep.subr.bf16.mxu0 0
      %928 = vmatpush1.bf16.msra.mxu0 0
      %929 = vmatprep.subr.bf16.mxu0 0
      %930 = vmatpush1.bf16.msra.mxu0 0
      %931 = vmatprep.subr.bf16.mxu0 0
      %932 = vmatpush1.bf16.msra.mxu0 0
      %933 = vmatprep.subr.bf16.mxu0 0
      %934 = vmatpush1.bf16.msra.mxu0 0
      %935 = vmatprep.subr.bf16.mxu0 0
      %936 = vmatpush1.bf16.msra.mxu0 0
      %937 = vmatprep.mubr.bf16.mxu0 0
      %938 = vmatmul.mubr.bf16.gmra.mrb[0].mxu0 %v818
      %v939 = vpop.f32.mrb[0].mxu0
      %v940 = vadd.f32 %v855, %v939
      %v941 = vpop.f32.mrb[0].mxu0
      %v942 = vpop.f32.mrb[0].mxu0
      %v943 = vadd.f32 %v855, %v942
      %v944 = vpop.f32.mrb[0].mxu0
      %945 = vmatprep.mubr.bf16.mxu0 0
      %946 = vmatmul.mubr.bf16.gmra.mrb[0].mxu0 %v819
      %v947 = vpop.f32.mrb[0].mxu0
      %v948 = vadd.f32 %v855, %v947
      %v949 = vpop.f32.mrb[0].mxu0
      %v950 = vpop.f32.mrb[0].mxu0
      %v951 = vadd.f32 %v855, %v950
      %v952 = vpop.f32.mrb[0].mxu0
      %953 = vmatprep.mubr.bf16.mxu0 0
      %954 = vmatmul.mubr.bf16.gmra.mrb[0].mxu0 %v820
      %v955 = vpop.f32.mrb[0].mxu0
      %v956 = vadd.f32 %v855, %v955
      %v957 = vpop.f32.mrb[0].mxu0
      %v958 = vpop.f32.mrb[0].mxu0
      %v959 = vadd.f32 %v855, %v958
      %v960 = vpop.f32.mrb[0].mxu0
      %961 = vmatprep.mubr.bf16.mxu0 0
      %962 = vmatmul.mubr.bf16.gmra.mrb[0].mxu0 %v821
      %v963 = vpop.f32.mrb[0].mxu0
      %v964 = vadd.f32 %v855, %v963
      %v965 = vpop.f32.mrb[0].mxu0
      %v966 = vpop.f32.mrb[0].mxu0
      %v967 = vadd.f32 %v855, %v966
      %v968 = vpop.f32.mrb[0].mxu0
      %969 = vmatprep.mubr.bf16.mxu0 0
      %970 = vmatmul.mubr.bf16.gmra.mrb[0].mxu0 %v822
      %v971 = vpop.f32.mrb[0].mxu0
      %v972 = vadd.f32 %v855, %v971
      %v973 = vpop.f32.mrb[0].mxu0
      %v974 = vpop.f32.mrb[0].mxu0
      %v975 = vadd.f32 %v855, %v974
      %v976 = vpop.f32.mrb[0].mxu0
      %977 = vmatprep.mubr.bf16.mxu0 0
      %978 = vmatmul.mubr.bf16.gmra.mrb[0].mxu0 %v823
      %v979 = vpop.f32.mrb[0].mxu0
      %v980 = vadd.f32 %v855, %v979
      %v981 = vpop.f32.mrb[0].mxu0
      %v982 = vpop.f32.mrb[0].mxu0
      %v983 = vadd.f32 %v855, %v982
      %v984 = vpop.f32.mrb[0].mxu0
      %985 = vmatprep.mubr.bf16.mxu0 0
      %986 = vmatmul.mubr.bf16.gmra.mrb[0].mxu0 %v824
      %v987 = vpop.f32.mrb[0].mxu0
      %v988 = vadd.f32 %v855, %v987
      %v989 = vpop.f32.mrb[0].mxu0
      %v990 = vpop.f32.mrb[0].mxu0
      %v991 = vadd.f32 %v855, %v990
      %v992 = vpop.f32.mrb[0].mxu0
      %993 = vmatprep.mubr.bf16.mxu0 0
      %994 = vmatmul.mubr.bf16.gmra.mrb[0].mxu0 %v825
      %v995 = vpop.f32.mrb[0].mxu0
      %v996 = vadd.f32 %v855, %v995
      %v997 = vpop.f32.mrb[0].mxu0
      %v998 = vpop.f32.mrb[0].mxu0
      %v999 = vadd.f32 %v855, %v998
      %v1000 = vpop.f32.mrb[0].mxu0
      %1001 = vmatprep.mubr.bf16.mxu0 0
      %1002 = vmatmul.mubr.bf16.gmra.mrb[0].mxu0 %v826
      %v1003 = vpop.f32.mrb[0].mxu0
      %v1004 = vadd.f32 %v855, %v1003
      %v1005 = vpop.f32.mrb[0].mxu0
      %v1006 = vpop.f32.mrb[0].mxu0
      %v1007 = vadd.f32 %v855, %v1006
      %v1008 = vpop.f32.mrb[0].mxu0
      %1009 = vmatprep.mubr.bf16.mxu0 0
      %1010 = vmatmul.mubr.bf16.gmra.mrb[0].mxu0 %v827
      %v1011 = vpop.f32.mrb[0].mxu0
      %v1012 = vadd.f32 %v855, %v1011
      %v1013 = vpop.f32.mrb[0].mxu0
      %v1014 = vpop.f32.mrb[0].mxu0
      %v1015 = vadd.f32 %v855, %v1014
      %v1016 = vpop.f32.mrb[0].mxu0
      %1017 = vmatprep.mubr.bf16.mxu0 0
      %1018 = vmatmul.mubr.bf16.gmra.mrb[0].mxu0 %v828
      %v1019 = vpop.f32.mrb[0].mxu0
      %v1020 = vadd.f32 %v855, %v1019
      %v1021 = vpop.f32.mrb[0].mxu0
      %v1022 = vpop.f32.mrb[0].mxu0
      %v1023 = vadd.f32 %v855, %v1022
      %v1024 = vpop.f32.mrb[0].mxu0
      %1025 = vmatprep.mubr.bf16.mxu0 0
      %1026 = vmatmul.mubr.bf16.gmra.mrb[0].mxu0 %v829
      %v1027 = vpop.f32.mrb[0].mxu0
      %v1028 = vadd.f32 %v855, %v1027
      %v1029 = vpop.f32.mrb[0].mxu0
      %v1030 = vpop.f32.mrb[0].mxu0
      %v1031 = vadd.f32 %v855, %v1030
      %v1032 = vpop.f32.mrb[0].mxu0
      %1033 = vmatprep.mubr.bf16.mxu0 0
      %1034 = vmatmul.mubr.bf16.gmra.mrb[0].mxu0 %v830
      %v1035 = vpop.f32.mrb[0].mxu0
      %v1036 = vadd.f32 %v855, %v1035
      %v1037 = vpop.f32.mrb[0].mxu0
      %v1038 = vpop.f32.mrb[0].mxu0
      %v1039 = vadd.f32 %v855, %v1038
      %v1040 = vpop.f32.mrb[0].mxu0
      %1041 = vmatprep.mubr.bf16.mxu0 0
      %1042 = vmatmul.mubr.bf16.gmra.mrb[0].mxu0 %v831
      %v1043 = vpop.f32.mrb[0].mxu0
      %v1044 = vadd.f32 %v855, %v1043
      %v1045 = vpop.f32.mrb[0].mxu0
      %v1046 = vpop.f32.mrb[0].mxu0
      %v1047 = vadd.f32 %v855, %v1046
      %v1048 = vpop.f32.mrb[0].mxu0
      %1049 = vmatprep.mubr.bf16.mxu0 0
      %1050 = vmatmul.mubr.bf16.gmra.mrb[0].mxu0 %v832
      %v1051 = vpop.f32.mrb[0].mxu0
      %v1052 = vadd.f32 %v855, %v1051
      %v1053 = vpop.f32.mrb[0].mxu0
      %v1054 = vpop.f32.mrb[0].mxu0
      %v1055 = vadd.f32 %v855, %v1054
      %v1056 = vpop.f32.mrb[0].mxu0
      %1057 = vmatprep.mubr.bf16.mxu0 0
      %1058 = vmatmul.mubr.bf16.gmra.mrb[0].mxu0 %v833
      %v1059 = vpop.f32.mrb[0].mxu0
      %v1060 = vadd.f32 %v855, %v1059
      %v1061 = vpop.f32.mrb[0].mxu0
      %v1062 = vpop.f32.mrb[0].mxu0
      %v1063 = vadd.f32 %v855, %v1062
      %v1064 = vpop.f32.mrb[0].mxu0
      %1065 = vdwg.mxu0
      %v1066 = vxor.u32 %v940, 2147483648
      %v1067 = vxor.u32 %v943, 2147483648
      %v1068 = vxor.u32 %v948, 2147483648
      %v1069 = vxor.u32 %v951, 2147483648
      %v1070 = vxor.u32 %v956, 2147483648
      %v1071 = vxor.u32 %v959, 2147483648
      %v1072 = vxor.u32 %v964, 2147483648
      %v1073 = vxor.u32 %v967, 2147483648
      %v1074 = vxor.u32 %v972, 2147483648
      %v1075 = vxor.u32 %v975, 2147483648
      %v1076 = vxor.u32 %v980, 2147483648
      %v1077 = vxor.u32 %v983, 2147483648
      %v1078 = vxor.u32 %v988, 2147483648
      %v1079 = vxor.u32 %v991, 2147483648
      %v1080 = vxor.u32 %v996, 2147483648
      %v1081 = vxor.u32 %v999, 2147483648
      %v1082 = vxor.u32 %v1004, 2147483648
      %v1083 = vxor.u32 %v1007, 2147483648
      %v1084 = vxor.u32 %v1012, 2147483648
      %v1085 = vxor.u32 %v1015, 2147483648
      %v1086 = vxor.u32 %v1020, 2147483648
      %v1087 = vxor.u32 %v1023, 2147483648
      %v1088 = vxor.u32 %v1028, 2147483648
      %v1089 = vxor.u32 %v1031, 2147483648
      %v1090 = vxor.u32 %v1036, 2147483648
      %v1091 = vxor.u32 %v1039, 2147483648
      %v1092 = vxor.u32 %v1044, 2147483648
      %v1093 = vxor.u32 %v1047, 2147483648
      %v1094 = vxor.u32 %v1052, 2147483648
      %v1095 = vxor.u32 %v1055, 2147483648
      %v1096 = vxor.u32 %v1060, 2147483648
      %v1097 = vxor.u32 %v1063, 2147483648
      %v1098 = vmul.f32 %v1066, 1.442695
      %v1099 = vpow.pop %v1098
      %v1100 = vmul.f32 %v1067, 1.442695
      %v1101 = vpow.pop %v1100
      %v1102 = vmul.f32 %v1068, 1.442695
      %v1103 = vpow.pop %v1102
      %v1104 = vmul.f32 %v1069, 1.442695
      %v1105 = vpow.pop %v1104
      %v1106 = vmul.f32 %v1070, 1.442695
      %v1107 = vpow.pop %v1106
      %v1108 = vmul.f32 %v1071, 1.442695
      %v1109 = vpow.pop %v1108
      %v1110 = vmul.f32 %v1072, 1.442695
      %v1111 = vpow.pop %v1110
      %v1112 = vmul.f32 %v1073, 1.442695
      %v1113 = vpow.pop %v1112
      %v1114 = vmul.f32 %v1074, 1.442695
      %v1115 = vpow.pop %v1114
      %v1116 = vmul.f32 %v1075, 1.442695
      %v1117 = vpow.pop %v1116
      %v1118 = vmul.f32 %v1076, 1.442695
      %v1119 = vpow.pop %v1118
      %v1120 = vmul.f32 %v1077, 1.442695
      %v1121 = vpow.pop %v1120
      %v1122 = vmul.f32 %v1078, 1.442695
      %v1123 = vpow.pop %v1122
      %v1124 = vmul.f32 %v1079, 1.442695
      %v1125 = vpow.pop %v1124
      %v1126 = vmul.f32 %v1080, 1.442695
      %v1127 = vpow.pop %v1126
      %v1128 = vmul.f32 %v1081, 1.442695
      %v1129 = vpow.pop %v1128
      %v1130 = vmul.f32 %v1082, 1.442695
      %v1131 = vpow.pop %v1130
      %v1132 = vmul.f32 %v1083, 1.442695
      %v1133 = vpow.pop %v1132
      %v1134 = vmul.f32 %v1084, 1.442695
      %v1135 = vpow.pop %v1134
      %v1136 = vmul.f32 %v1085, 1.442695
      %v1137 = vpow.pop %v1136
      %v1138 = vmul.f32 %v1086, 1.442695
      %v1139 = vpow.pop %v1138
      %v1140 = vmul.f32 %v1087, 1.442695
      %v1141 = vpow.pop %v1140
      %v1142 = vmul.f32 %v1088, 1.442695
      %v1143 = vpow.pop %v1142
      %v1144 = vmul.f32 %v1089, 1.442695
      %v1145 = vpow.pop %v1144
      %v1146 = vmul.f32 %v1090, 1.442695
      %v1147 = vpow.pop %v1146
      %v1148 = vmul.f32 %v1091, 1.442695
      %v1149 = vpow.pop %v1148
      %v1150 = vmul.f32 %v1092, 1.442695
      %v1151 = vpow.pop %v1150
      %v1152 = vmul.f32 %v1093, 1.442695
      %v1153 = vpow.pop %v1152
      %v1154 = vmul.f32 %v1094, 1.442695
      %v1155 = vpow.pop %v1154
      %v1156 = vmul.f32 %v1095, 1.442695
      %v1157 = vpow.pop %v1156
      %v1158 = vmul.f32 %v1096, 1.442695
      %v1159 = vpow.pop %v1158
      %v1160 = vmul.f32 %v1097, 1.442695
      %v1161 = vpow.pop %v1160
      %v1162 = vadd.f32 %v1099, 1.0
      %v1163 = vadd.f32 %v1101, 1.0
      %v1164 = vadd.f32 %v1103, 1.0
      %v1165 = vadd.f32 %v1105, 1.0
      %v1166 = vadd.f32 %v1107, 1.0
      %v1167 = vadd.f32 %v1109, 1.0
      %v1168 = vadd.f32 %v1111, 1.0
      %v1169 = vadd.f32 %v1113, 1.0
      %v1170 = vadd.f32 %v1115, 1.0
      %v1171 = vadd.f32 %v1117, 1.0
      %v1172 = vadd.f32 %v1119, 1.0
      %v1173 = vadd.f32 %v1121, 1.0
      %v1174 = vadd.f32 %v1123, 1.0
      %v1175 = vadd.f32 %v1125, 1.0
      %v1176 = vadd.f32 %v1127, 1.0
      %v1177 = vadd.f32 %v1129, 1.0
      %v1178 = vadd.f32 %v1131, 1.0
      %v1179 = vadd.f32 %v1133, 1.0
      %v1180 = vadd.f32 %v1135, 1.0
      %v1181 = vadd.f32 %v1137, 1.0
      %v1182 = vadd.f32 %v1139, 1.0
      %v1183 = vadd.f32 %v1141, 1.0
      %v1184 = vadd.f32 %v1143, 1.0
      %v1185 = vadd.f32 %v1145, 1.0
      %v1186 = vadd.f32 %v1147, 1.0
      %v1187 = vadd.f32 %v1149, 1.0
      %v1188 = vadd.f32 %v1151, 1.0
      %v1189 = vadd.f32 %v1153, 1.0
      %v1190 = vadd.f32 %v1155, 1.0
      %v1191 = vadd.f32 %v1157, 1.0
      %v1192 = vadd.f32 %v1159, 1.0
      %v1193 = vadd.f32 %v1161, 1.0
      %v1194 = vrcp.pop %v1162
      %v1195 = vmul.f32 1.0, %v1194
      %v1196 = vrcp.pop %v1163
      %v1197 = vmul.f32 1.0, %v1196
      %v1198 = vrcp.pop %v1164
      %v1199 = vmul.f32 1.0, %v1198
      %v1200 = vrcp.pop %v1165
      %v1201 = vmul.f32 1.0, %v1200
      %v1202 = vrcp.pop %v1166
      %v1203 = vmul.f32 1.0, %v1202
      %v1204 = vrcp.pop %v1167
      %v1205 = vmul.f32 1.0, %v1204
      %v1206 = vrcp.pop %v1168
      %v1207 = vmul.f32 1.0, %v1206
      %v1208 = vrcp.pop %v1169
      %v1209 = vmul.f32 1.0, %v1208
      %v1210 = vrcp.pop %v1170
      %v1211 = vmul.f32 1.0, %v1210
      %v1212 = vrcp.pop %v1171
      %v1213 = vmul.f32 1.0, %v1212
      %v1214 = vrcp.pop %v1172
      %v1215 = vmul.f32 1.0, %v1214
      %v1216 = vrcp.pop %v1173
      %v1217 = vmul.f32 1.0, %v1216
      %v1218 = vrcp.pop %v1174
      %v1219 = vmul.f32 1.0, %v1218
      %v1220 = vrcp.pop %v1175
      %v1221 = vmul.f32 1.0, %v1220
      %v1222 = vrcp.pop %v1176
      %v1223 = vmul.f32 1.0, %v1222
      %v1224 = vrcp.pop %v1177
      %v1225 = vmul.f32 1.0, %v1224
      %v1226 = vrcp.pop %v1178
      %v1227 = vmul.f32 1.0, %v1226
      %v1228 = vrcp.pop %v1179
      %v1229 = vmul.f32 1.0, %v1228
      %v1230 = vrcp.pop %v1180
      %v1231 = vmul.f32 1.0, %v1230
      %v1232 = vrcp.pop %v1181
      %v1233 = vmul.f32 1.0, %v1232
      %v1234 = vrcp.pop %v1182
      %v1235 = vmul.f32 1.0, %v1234
      %v1236 = vrcp.pop %v1183
      %v1237 = vmul.f32 1.0, %v1236
      %v1238 = vrcp.pop %v1184
      %v1239 = vmul.f32 1.0, %v1238
      %v1240 = vrcp.pop %v1185
      %v1241 = vmul.f32 1.0, %v1240
      %v1242 = vrcp.pop %v1186
      %v1243 = vmul.f32 1.0, %v1242
      %v1244 = vrcp.pop %v1187
      %v1245 = vmul.f32 1.0, %v1244
      %v1246 = vrcp.pop %v1188
      %v1247 = vmul.f32 1.0, %v1246
      %v1248 = vrcp.pop %v1189
      %v1249 = vmul.f32 1.0, %v1248
      %v1250 = vrcp.pop %v1190
      %v1251 = vmul.f32 1.0, %v1250
      %v1252 = vrcp.pop %v1191
      %v1253 = vmul.f32 1.0, %v1252
      %v1254 = vrcp.pop %v1192
      %v1255 = vmul.f32 1.0, %v1254
      %v1256 = vrcp.pop %v1193
      %v1257 = vmul.f32 1.0, %v1256
      %v1258 = vmul.f32 %v1195, 8.0
      %v1259 = vmul.f32 %v1197, 8.0
      %v1260 = vmul.f32 %v1199, 8.0
      %v1261 = vmul.f32 %v1201, 8.0
      %v1262 = vmul.f32 %v1203, 8.0
      %v1263 = vmul.f32 %v1205, 8.0
      %v1264 = vmul.f32 %v1207, 8.0
      %v1265 = vmul.f32 %v1209, 8.0
      %v1266 = vmul.f32 %v1211, 8.0
      %v1267 = vmul.f32 %v1213, 8.0
      %v1268 = vmul.f32 %v1215, 8.0
      %v1269 = vmul.f32 %v1217, 8.0
      %v1270 = vmul.f32 %v1219, 8.0
      %v1271 = vmul.f32 %v1221, 8.0
      %v1272 = vmul.f32 %v1223, 8.0
      %v1273 = vmul.f32 %v1225, 8.0
      %v1274 = vmul.f32 %v1227, 8.0
      %v1275 = vmul.f32 %v1229, 8.0
      %v1276 = vmul.f32 %v1231, 8.0
      %v1277 = vmul.f32 %v1233, 8.0
      %v1278 = vmul.f32 %v1235, 8.0
      %v1279 = vmul.f32 %v1237, 8.0
      %v1280 = vmul.f32 %v1239, 8.0
      %v1281 = vmul.f32 %v1241, 8.0
      %v1282 = vmul.f32 %v1243, 8.0
      %v1283 = vmul.f32 %v1245, 8.0
      %v1284 = vmul.f32 %v1247, 8.0
      %v1285 = vmul.f32 %v1249, 8.0
      %v1286 = vmul.f32 %v1251, 8.0
      %v1287 = vmul.f32 %v1253, 8.0
      %v1288 = vmul.f32 %v1255, 8.0
      %v1289 = vmul.f32 %v1257, 8.0
      %vm1290 = vcmp.eq.s32.totalorder %v457, 16
      %v1291 = vld [vmem:[%s411] sm:$0xff]
      %v1292 = vld [vmem:[%s411 + $0x8] sm:$0xff]
      %v1293 = vld [vmem:[%s411 + $0x10] sm:$0xff]
      %v1294 = vld [vmem:[%s411 + $0x18] sm:$0xff]
      %v1295 = vld [vmem:[%s411 + $0x20] sm:$0xff]
      %v1296 = vld [vmem:[%s411 + $0x28] sm:$0xff]
      %v1297 = vld [vmem:[%s411 + $0x30] sm:$0xff]
      %v1298 = vld [vmem:[%s411 + $0x38] sm:$0xff]
      %v1299 = vld [vmem:[%s411 + $0x40] sm:$0xff]
      %v1300 = vld [vmem:[%s411 + $0x48] sm:$0xff]
      %v1301 = vld [vmem:[%s411 + $0x50] sm:$0xff]
      %v1302 = vld [vmem:[%s411 + $0x58] sm:$0xff]
      %v1303 = vld [vmem:[%s411 + $0x60] sm:$0xff]
      %v1304 = vld [vmem:[%s411 + $0x68] sm:$0xff]
      %v1305 = vld [vmem:[%s411 + $0x70] sm:$0xff]
      %v1306 = vld [vmem:[%s411 + $0x78] sm:$0xff]
      %v1307 = vld [vmem:[%s411 + $0x80] sm:$0xff]
      %v1308 = vld [vmem:[%s411 + $0x88] sm:$0xff]
      %v1309 = vld [vmem:[%s411 + $0x90] sm:$0xff]
      %v1310 = vld [vmem:[%s411 + $0x98] sm:$0xff]
      %v1311 = vld [vmem:[%s411 + $0xa0] sm:$0xff]
      %v1312 = vld [vmem:[%s411 + $0xa8] sm:$0xff]
      %v1313 = vld [vmem:[%s411 + $0xb0] sm:$0xff]
      %v1314 = vld [vmem:[%s411 + $0xb8] sm:$0xff]
      %v1315 = vld [vmem:[%s411 + $0xc0] sm:$0xff]
      %v1316 = vld [vmem:[%s411 + $0xc8] sm:$0xff]
      %v1317 = vld [vmem:[%s411 + $0xd0] sm:$0xff]
      %v1318 = vld [vmem:[%s411 + $0xd8] sm:$0xff]
      %v1319 = vld [vmem:[%s411 + $0xe0] sm:$0xff]
      %v1320 = vld [vmem:[%s411 + $0xe8] sm:$0xff]
      %v1321 = vld [vmem:[%s411 + $0xf0] sm:$0xff]
      %v1322 = vld [vmem:[%s411 + $0xf8] sm:$0xff]
      %1324 = vset.pattern.permute.xlu0 0
      %1325 = vperm.xlu0 %1324, %v1291
      %v1326 = vpop.permute.xlu0 %1325
      %1329 = vset.pattern.permute.xlu0 0
      %1330 = vperm.xlu0 %1329, %v1292
      %v1331 = vpop.permute.xlu0 %1330
      %1334 = vset.pattern.permute.xlu0 0
      %1335 = vperm.xlu0 %1334, %v1293
      %v1336 = vpop.permute.xlu0 %1335
      %1339 = vset.pattern.permute.xlu0 0
      %1340 = vperm.xlu0 %1339, %v1294
      %v1341 = vpop.permute.xlu0 %1340
      %1344 = vset.pattern.permute.xlu0 0
      %1345 = vperm.xlu0 %1344, %v1295
      %v1346 = vpop.permute.xlu0 %1345
      %1349 = vset.pattern.permute.xlu0 0
      %1350 = vperm.xlu0 %1349, %v1296
      %v1351 = vpop.permute.xlu0 %1350
      %1354 = vset.pattern.permute.xlu0 0
      %1355 = vperm.xlu0 %1354, %v1297
      %v1356 = vpop.permute.xlu0 %1355
      %1359 = vset.pattern.permute.xlu0 0
      %1360 = vperm.xlu0 %1359, %v1298
      %v1361 = vpop.permute.xlu0 %1360
      %1364 = vset.pattern.permute.xlu0 0
      %1365 = vperm.xlu0 %1364, %v1299
      %v1366 = vpop.permute.xlu0 %1365
      %1369 = vset.pattern.permute.xlu0 0
      %1370 = vperm.xlu0 %1369, %v1300
      %v1371 = vpop.permute.xlu0 %1370
      %1374 = vset.pattern.permute.xlu0 0
      %1375 = vperm.xlu0 %1374, %v1301
      %v1376 = vpop.permute.xlu0 %1375
      %1379 = vset.pattern.permute.xlu0 0
      %1380 = vperm.xlu0 %1379, %v1302
      %v1381 = vpop.permute.xlu0 %1380
      %1384 = vset.pattern.permute.xlu0 0
      %1385 = vperm.xlu0 %1384, %v1303
      %v1386 = vpop.permute.xlu0 %1385
      %1389 = vset.pattern.permute.xlu0 0
      %1390 = vperm.xlu0 %1389, %v1304
      %v1391 = vpop.permute.xlu0 %1390
      %1394 = vset.pattern.permute.xlu0 0
      %1395 = vperm.xlu0 %1394, %v1305
      %v1396 = vpop.permute.xlu0 %1395
      %1399 = vset.pattern.permute.xlu0 0
      %1400 = vperm.xlu0 %1399, %v1306
      %v1401 = vpop.permute.xlu0 %1400
      %1404 = vset.pattern.permute.xlu0 0
      %1405 = vperm.xlu0 %1404, %v1307
      %v1406 = vpop.permute.xlu0 %1405
      %1409 = vset.pattern.permute.xlu0 0
      %1410 = vperm.xlu0 %1409, %v1308
      %v1411 = vpop.permute.xlu0 %1410
      %1414 = vset.pattern.permute.xlu0 0
      %1415 = vperm.xlu0 %1414, %v1309
      %v1416 = vpop.permute.xlu0 %1415
      %1419 = vset.pattern.permute.xlu0 0
      %1420 = vperm.xlu0 %1419, %v1310
      %v1421 = vpop.permute.xlu0 %1420
      %1424 = vset.pattern.permute.xlu0 0
      %1425 = vperm.xlu0 %1424, %v1311
      %v1426 = vpop.permute.xlu0 %1425
      %1429 = vset.pattern.permute.xlu0 0
      %1430 = vperm.xlu0 %1429, %v1312
      %v1431 = vpop.permute.xlu0 %1430
      %1434 = vset.pattern.permute.xlu0 0
      %1435 = vperm.xlu0 %1434, %v1313
      %v1436 = vpop.permute.xlu0 %1435
      %1439 = vset.pattern.permute.xlu0 0
      %1440 = vperm.xlu0 %1439, %v1314
      %v1441 = vpop.permute.xlu0 %1440
      %1444 = vset.pattern.permute.xlu0 0
      %1445 = vperm.xlu0 %1444, %v1315
      %v1446 = vpop.permute.xlu0 %1445
      %1449 = vset.pattern.permute.xlu0 0
      %1450 = vperm.xlu0 %1449, %v1316
      %v1451 = vpop.permute.xlu0 %1450
      %1454 = vset.pattern.permute.xlu0 0
      %1455 = vperm.xlu0 %1454, %v1317
      %v1456 = vpop.permute.xlu0 %1455
      %1459 = vset.pattern.permute.xlu0 0
      %1460 = vperm.xlu0 %1459, %v1318
      %v1461 = vpop.permute.xlu0 %1460
      %1464 = vset.pattern.permute.xlu0 0
      %1465 = vperm.xlu0 %1464, %v1319
      %v1466 = vpop.permute.xlu0 %1465
      %1469 = vset.pattern.permute.xlu0 0
      %1470 = vperm.xlu0 %1469, %v1320
      %v1471 = vpop.permute.xlu0 %1470
      %1474 = vset.pattern.permute.xlu0 0
      %1475 = vperm.xlu0 %1474, %v1321
      %v1476 = vpop.permute.xlu0 %1475
      %1479 = vset.pattern.permute.xlu0 0
      %1480 = vperm.xlu0 %1479, %v1322
      %v1481 = vpop.permute.xlu0 %1480
      %v1483 = vsub.f32 %v1258, %v1326
      %v1484 = vsub.f32 %v1259, %v1331
      %v1485 = vsub.f32 %v1260, %v1336
      %v1486 = vsub.f32 %v1261, %v1341
      %v1487 = vsub.f32 %v1262, %v1346
      %v1488 = vsub.f32 %v1263, %v1351
      %v1489 = vsub.f32 %v1264, %v1356
      %v1490 = vsub.f32 %v1265, %v1361
      %v1491 = vsub.f32 %v1266, %v1366
      %v1492 = vsub.f32 %v1267, %v1371
      %v1493 = vsub.f32 %v1268, %v1376
      %v1494 = vsub.f32 %v1269, %v1381
      %v1495 = vsub.f32 %v1270, %v1386
      %v1496 = vsub.f32 %v1271, %v1391
      %v1497 = vsub.f32 %v1272, %v1396
      %v1498 = vsub.f32 %v1273, %v1401
      %v1499 = vsub.f32 %v1274, %v1406
      %v1500 = vsub.f32 %v1275, %v1411
      %v1501 = vsub.f32 %v1276, %v1416
      %v1502 = vsub.f32 %v1277, %v1421
      %v1503 = vsub.f32 %v1278, %v1426
      %v1504 = vsub.f32 %v1279, %v1431
      %v1505 = vsub.f32 %v1280, %v1436
      %v1506 = vsub.f32 %v1281, %v1441
      %v1507 = vsub.f32 %v1282, %v1446
      %v1508 = vsub.f32 %v1283, %v1451
      %v1509 = vsub.f32 %v1284, %v1456
      %v1510 = vsub.f32 %v1285, %v1461
      %v1511 = vsub.f32 %v1286, %v1466
      %v1512 = vsub.f32 %v1287, %v1471
      %v1513 = vsub.f32 %v1288, %v1476
      %v1514 = vsub.f32 %v1289, %v1481
      %v1515 = vsel %vm1290, %v1483, 0.0
      %v1516 = vsel %vm1290, %v1484, 0.0
      %v1517 = vsel %vm1290, %v1485, 0.0
      %v1518 = vsel %vm1290, %v1486, 0.0
      %v1519 = vsel %vm1290, %v1487, 0.0
      %v1520 = vsel %vm1290, %v1488, 0.0
      %v1521 = vsel %vm1290, %v1489, 0.0
      %v1522 = vsel %vm1290, %v1490, 0.0
      %v1523 = vsel %vm1290, %v1491, 0.0
      %v1524 = vsel %vm1290, %v1492, 0.0
      %v1525 = vsel %vm1290, %v1493, 0.0
      %v1526 = vsel %vm1290, %v1494, 0.0
      %v1527 = vsel %vm1290, %v1495, 0.0
      %v1528 = vsel %vm1290, %v1496, 0.0
      %v1529 = vsel %vm1290, %v1497, 0.0
      %v1530 = vsel %vm1290, %v1498, 0.0
      %v1531 = vsel %vm1290, %v1499, 0.0
      %v1532 = vsel %vm1290, %v1500, 0.0
      %v1533 = vsel %vm1290, %v1501, 0.0
      %v1534 = vsel %vm1290, %v1502, 0.0
      %v1535 = vsel %vm1290, %v1503, 0.0
      %v1536 = vsel %vm1290, %v1504, 0.0
      %v1537 = vsel %vm1290, %v1505, 0.0
      %v1538 = vsel %vm1290, %v1506, 0.0
      %v1539 = vsel %vm1290, %v1507, 0.0
      %v1540 = vsel %vm1290, %v1508, 0.0
      %v1541 = vsel %vm1290, %v1509, 0.0
      %v1542 = vsel %vm1290, %v1510, 0.0
      %v1543 = vsel %vm1290, %v1511, 0.0
      %v1544 = vsel %vm1290, %v1512, 0.0
      %v1545 = vsel %vm1290, %v1513, 0.0
      %v1546 = vsel %vm1290, %v1514, 0.0
      %v1547 = vand.u32 2147483647, %v1515
      %v1548 = vand.u32 2147483647, %v1516
      %v1549 = vand.u32 2147483647, %v1517
      %v1550 = vand.u32 2147483647, %v1518
      %v1551 = vand.u32 2147483647, %v1519
      %v1552 = vand.u32 2147483647, %v1520
      %v1553 = vand.u32 2147483647, %v1521
      %v1554 = vand.u32 2147483647, %v1522
      %v1555 = vand.u32 2147483647, %v1523
      %v1556 = vand.u32 2147483647, %v1524
      %v1557 = vand.u32 2147483647, %v1525
      %v1558 = vand.u32 2147483647, %v1526
      %v1559 = vand.u32 2147483647, %v1527
      %v1560 = vand.u32 2147483647, %v1528
      %v1561 = vand.u32 2147483647, %v1529
      %v1562 = vand.u32 2147483647, %v1530
      %v1563 = vand.u32 2147483647, %v1531
      %v1564 = vand.u32 2147483647, %v1532
      %v1565 = vand.u32 2147483647, %v1533
      %v1566 = vand.u32 2147483647, %v1534
      %v1567 = vand.u32 2147483647, %v1535
      %v1568 = vand.u32 2147483647, %v1536
      %v1569 = vand.u32 2147483647, %v1537
      %v1570 = vand.u32 2147483647, %v1538
      %v1571 = vand.u32 2147483647, %v1539
      %v1572 = vand.u32 2147483647, %v1540
      %v1573 = vand.u32 2147483647, %v1541
      %v1574 = vand.u32 2147483647, %v1542
      %v1575 = vand.u32 2147483647, %v1543
      %v1576 = vand.u32 2147483647, %v1544
      %v1577 = vand.u32 2147483647, %v1545
      %v1578 = vand.u32 2147483647, %v1546
      %v1579 = vadd.f32 %v1547, %v1548
      %v1580 = vadd.f32 %v1579, %v1549
      %v1581 = vadd.f32 %v1580, %v1550
      %v1582 = vadd.f32 %v1581, %v1551
      %v1583 = vadd.f32 %v1582, %v1552
      %v1584 = vadd.f32 %v1583, %v1553
      %v1585 = vadd.f32 %v1584, %v1554
      %v1586 = vadd.f32 %v1585, %v1555
      %v1587 = vadd.f32 %v1586, %v1556
      %v1588 = vadd.f32 %v1587, %v1557
      %v1589 = vadd.f32 %v1588, %v1558
      %v1590 = vadd.f32 %v1589, %v1559
      %v1591 = vadd.f32 %v1590, %v1560
      %v1592 = vadd.f32 %v1591, %v1561
      %v1593 = vadd.f32 %v1592, %v1562
      %v1594 = vadd.f32 %v1593, %v1563
      %v1595 = vadd.f32 %v1594, %v1564
      %v1596 = vadd.f32 %v1595, %v1565
      %v1597 = vadd.f32 %v1596, %v1566
      %v1598 = vadd.f32 %v1597, %v1567
      %v1599 = vadd.f32 %v1598, %v1568
      %v1600 = vadd.f32 %v1599, %v1569
      %v1601 = vadd.f32 %v1600, %v1570
      %v1602 = vadd.f32 %v1601, %v1571
      %v1603 = vadd.f32 %v1602, %v1572
      %v1604 = vadd.f32 %v1603, %v1573
      %v1605 = vadd.f32 %v1604, %v1574
      %v1606 = vadd.f32 %v1605, %v1575
      %v1607 = vadd.f32 %v1606, %v1576
      %v1608 = vadd.f32 %v1607, %v1577
      %v1609 = vadd.f32 %v1608, %v1578
      %1610 = vadd.xlane.f32.xlu0 %v1609
      %v1611 = vpop.xlane.xlu0 %1610
      %v1612 = vrot.slane %v1611, 4
      %v1613 = vadd.f32 %v1611, %v1612
      %v1614 = vrot.slane %v1613, 2
      %v1615 = vadd.f32 %v1613, %v1614
      %v1616 = vrot.slane %v1615, 1
      %v1617 = vadd.f32 %v1615, %v1616
      %s1618 = vtos %v1617
      %v1619 = vld [vmem:[%s6] sm:$0xf]
      %v1620 = vld [vmem:[%s6 + $0x4] sm:$0xf]
      %v1621 = vld [vmem:[%s6 + $0x8] sm:$0xf]
      %v1622 = vld [vmem:[%s6 + $0xc] sm:$0xf]
      %v1623 = vld [vmem:[%s6 + $0x10] sm:$0xf]
      %v1624 = vld [vmem:[%s6 + $0x14] sm:$0xf]
      %v1625 = vld [vmem:[%s6 + $0x18] sm:$0xf]
      %v1626 = vld [vmem:[%s6 + $0x1c] sm:$0xf]
      %v1627 = vld [vmem:[%s6 + $0x20] sm:$0xf]
      %v1628 = vld [vmem:[%s6 + $0x24] sm:$0xf]
      %v1629 = vld [vmem:[%s6 + $0x28] sm:$0xf]
      %v1630 = vld [vmem:[%s6 + $0x2c] sm:$0xf]
      %v1631 = vld [vmem:[%s6 + $0x30] sm:$0xf]
      %v1632 = vld [vmem:[%s6 + $0x34] sm:$0xf]
      %v1633 = vld [vmem:[%s6 + $0x38] sm:$0xf]
      %v1634 = vld [vmem:[%s6 + $0x3c] sm:$0xf]
      %v1635 = vld [vmem:[%s7] sm:$0x1]
      %v1637 = vlaneseq
      %v1638 = vshrl.u32 %v1637, 7
      %v1639 = vsub.s32 0, %v1638
      %v1640 = vrot.slane %v1635, %v1639
      %v1658 = vunpack.c.l.b16 %v1619
      %v1659 = vunpack.c.l.b16 %v1620
      %v1660 = vunpack.c.l.b16 %v1621
      %v1661 = vunpack.c.l.b16 %v1622
      %v1662 = vunpack.c.l.b16 %v1623
      %v1663 = vunpack.c.l.b16 %v1624
      %v1664 = vunpack.c.l.b16 %v1625
      %v1665 = vunpack.c.l.b16 %v1626
      %v1666 = vunpack.c.l.b16 %v1627
      %v1667 = vunpack.c.l.b16 %v1628
      %v1668 = vunpack.c.l.b16 %v1629
      %v1669 = vunpack.c.l.b16 %v1630
      %v1670 = vunpack.c.l.b16 %v1631
      %v1671 = vunpack.c.l.b16 %v1632
      %v1672 = vunpack.c.l.b16 %v1633
      %v1673 = vunpack.c.l.b16 %v1634
      %v1674 = vpack.c.b16 %v1659, %v1658
      %v1675 = vpack.c.b16 %v1661, %v1660
      %v1676 = vpack.c.b16 %v1663, %v1662
      %v1677 = vpack.c.b16 %v1665, %v1664
      %v1678 = vpack.c.b16 %v1667, %v1666
      %v1679 = vpack.c.b16 %v1669, %v1668
      %v1680 = vpack.c.b16 %v1671, %v1670
      %v1681 = vpack.c.b16 %v1673, %v1672
      %1690 = vmatprep.subr.bf16.mxu0 0
      %1691 = vmatpush1.bf16.msra.mxu0 %v1674
      %1692 = vmatprep.subr.bf16.mxu0 0
      %1693 = vmatpush1.bf16.msra.mxu0 %v1675
      %1694 = vmatprep.subr.bf16.mxu0 0
      %1695 = vmatpush1.bf16.msra.mxu0 %v1676
      %1696 = vmatprep.subr.bf16.mxu0 0
      %1697 = vmatpush1.bf16.msra.mxu0 %v1677
      %1698 = vmatprep.subr.bf16.mxu0 0
      %1699 = vmatpush1.bf16.msra.mxu0 %v1678
      %1700 = vmatprep.subr.bf16.mxu0 0
      %1701 = vmatpush1.bf16.msra.mxu0 %v1679
      %1702 = vmatprep.subr.bf16.mxu0 0
      %1703 = vmatpush1.bf16.msra.mxu0 %v1680
      %1704 = vmatprep.subr.bf16.mxu0 0
      %1705 = vmatpush1.bf16.msra.mxu0 %v1681
      %1706 = vmatprep.subr.bf16.mxu0 0
      %1707 = vmatpush1.bf16.msra.mxu0 0
      %1708 = vmatprep.subr.bf16.mxu0 0
      %1709 = vmatpush1.bf16.msra.mxu0 0
      %1710 = vmatprep.subr.bf16.mxu0 0
      %1711 = vmatpush1.bf16.msra.mxu0 0
      %1712 = vmatprep.subr.bf16.mxu0 0
      %1713 = vmatpush1.bf16.msra.mxu0 0
      %1714 = vmatprep.subr.bf16.mxu0 0
      %1715 = vmatpush1.bf16.msra.mxu0 0
      %1716 = vmatprep.subr.bf16.mxu0 0
      %1717 = vmatpush1.bf16.msra.mxu0 0
      %1718 = vmatprep.subr.bf16.mxu0 0
      %1719 = vmatpush1.bf16.msra.mxu0 0
      %1720 = vmatprep.subr.bf16.mxu0 0
      %1721 = vmatpush1.bf16.msra.mxu0 0
      %1722 = vmatprep.mubr.bf16.mxu0 0
      %1723 = vmatmul.mubr.bf16.gmra.mrb[0].mxu0 %v818
      %v1724 = vpop.f32.mrb[0].mxu0
      %v1725 = vadd.f32 %v1640, %v1724
      %v1726 = vpop.f32.mrb[0].mxu0
      %v1727 = vpop.f32.mrb[0].mxu0
      %v1728 = vadd.f32 %v1640, %v1727
      %v1729 = vpop.f32.mrb[0].mxu0
      %1730 = vmatprep.mubr.bf16.mxu0 0
      %1731 = vmatmul.mubr.bf16.gmra.mrb[0].mxu0 %v819
      %v1732 = vpop.f32.mrb[0].mxu0
      %v1733 = vadd.f32 %v1640, %v1732
      %v1734 = vpop.f32.mrb[0].mxu0
      %v1735 = vpop.f32.mrb[0].mxu0
      %v1736 = vadd.f32 %v1640, %v1735
      %v1737 = vpop.f32.mrb[0].mxu0
      %1738 = vmatprep.mubr.bf16.mxu0 0
      %1739 = vmatmul.mubr.bf16.gmra.mrb[0].mxu0 %v820
      %v1740 = vpop.f32.mrb[0].mxu0
      %v1741 = vadd.f32 %v1640, %v1740
      %v1742 = vpop.f32.mrb[0].mxu0
      %v1743 = vpop.f32.mrb[0].mxu0
      %v1744 = vadd.f32 %v1640, %v1743
      %v1745 = vpop.f32.mrb[0].mxu0
      %1746 = vmatprep.mubr.bf16.mxu0 0
      %1747 = vmatmul.mubr.bf16.gmra.mrb[0].mxu0 %v821
      %v1748 = vpop.f32.mrb[0].mxu0
      %v1749 = vadd.f32 %v1640, %v1748
      %v1750 = vpop.f32.mrb[0].mxu0
      %v1751 = vpop.f32.mrb[0].mxu0
      %v1752 = vadd.f32 %v1640, %v1751
      %v1753 = vpop.f32.mrb[0].mxu0
      %1754 = vmatprep.mubr.bf16.mxu0 0
      %1755 = vmatmul.mubr.bf16.gmra.mrb[0].mxu0 %v822
      %v1756 = vpop.f32.mrb[0].mxu0
      %v1757 = vadd.f32 %v1640, %v1756
      %v1758 = vpop.f32.mrb[0].mxu0
      %v1759 = vpop.f32.mrb[0].mxu0
      %v1760 = vadd.f32 %v1640, %v1759
      %v1761 = vpop.f32.mrb[0].mxu0
      %1762 = vmatprep.mubr.bf16.mxu0 0
      %1763 = vmatmul.mubr.bf16.gmra.mrb[0].mxu0 %v823
      %v1764 = vpop.f32.mrb[0].mxu0
      %v1765 = vadd.f32 %v1640, %v1764
      %v1766 = vpop.f32.mrb[0].mxu0
      %v1767 = vpop.f32.mrb[0].mxu0
      %v1768 = vadd.f32 %v1640, %v1767
      %v1769 = vpop.f32.mrb[0].mxu0
      %1770 = vmatprep.mubr.bf16.mxu0 0
      %1771 = vmatmul.mubr.bf16.gmra.mrb[0].mxu0 %v824
      %v1772 = vpop.f32.mrb[0].mxu0
      %v1773 = vadd.f32 %v1640, %v1772
      %v1774 = vpop.f32.mrb[0].mxu0
      %v1775 = vpop.f32.mrb[0].mxu0
      %v1776 = vadd.f32 %v1640, %v1775
      %v1777 = vpop.f32.mrb[0].mxu0
      %1778 = vmatprep.mubr.bf16.mxu0 0
      %1779 = vmatmul.mubr.bf16.gmra.mrb[0].mxu0 %v825
      %v1780 = vpop.f32.mrb[0].mxu0
      %v1781 = vadd.f32 %v1640, %v1780
      %v1782 = vpop.f32.mrb[0].mxu0
      %v1783 = vpop.f32.mrb[0].mxu0
      %v1784 = vadd.f32 %v1640, %v1783
      %v1785 = vpop.f32.mrb[0].mxu0
      %1786 = vmatprep.mubr.bf16.mxu0 0
      %1787 = vmatmul.mubr.bf16.gmra.mrb[0].mxu0 %v826
      %v1788 = vpop.f32.mrb[0].mxu0
      %v1789 = vadd.f32 %v1640, %v1788
      %v1790 = vpop.f32.mrb[0].mxu0
      %v1791 = vpop.f32.mrb[0].mxu0
      %v1792 = vadd.f32 %v1640, %v1791
      %v1793 = vpop.f32.mrb[0].mxu0
      %1794 = vmatprep.mubr.bf16.mxu0 0
      %1795 = vmatmul.mubr.bf16.gmra.mrb[0].mxu0 %v827
      %v1796 = vpop.f32.mrb[0].mxu0
      %v1797 = vadd.f32 %v1640, %v1796
      %v1798 = vpop.f32.mrb[0].mxu0
      %v1799 = vpop.f32.mrb[0].mxu0
      %v1800 = vadd.f32 %v1640, %v1799
      %v1801 = vpop.f32.mrb[0].mxu0
      %1802 = vmatprep.mubr.bf16.mxu0 0
      %1803 = vmatmul.mubr.bf16.gmra.mrb[0].mxu0 %v828
      %v1804 = vpop.f32.mrb[0].mxu0
      %v1805 = vadd.f32 %v1640, %v1804
      %v1806 = vpop.f32.mrb[0].mxu0
      %v1807 = vpop.f32.mrb[0].mxu0
      %v1808 = vadd.f32 %v1640, %v1807
      %v1809 = vpop.f32.mrb[0].mxu0
      %1810 = vmatprep.mubr.bf16.mxu0 0
      %1811 = vmatmul.mubr.bf16.gmra.mrb[0].mxu0 %v829
      %v1812 = vpop.f32.mrb[0].mxu0
      %v1813 = vadd.f32 %v1640, %v1812
      %v1814 = vpop.f32.mrb[0].mxu0
      %v1815 = vpop.f32.mrb[0].mxu0
      %v1816 = vadd.f32 %v1640, %v1815
      %v1817 = vpop.f32.mrb[0].mxu0
      %1818 = vmatprep.mubr.bf16.mxu0 0
      %1819 = vmatmul.mubr.bf16.gmra.mrb[0].mxu0 %v830
      %v1820 = vpop.f32.mrb[0].mxu0
      %v1821 = vadd.f32 %v1640, %v1820
      %v1822 = vpop.f32.mrb[0].mxu0
      %v1823 = vpop.f32.mrb[0].mxu0
      %v1824 = vadd.f32 %v1640, %v1823
      %v1825 = vpop.f32.mrb[0].mxu0
      %1826 = vmatprep.mubr.bf16.mxu0 0
      %1827 = vmatmul.mubr.bf16.gmra.mrb[0].mxu0 %v831
      %v1828 = vpop.f32.mrb[0].mxu0
      %v1829 = vadd.f32 %v1640, %v1828
      %v1830 = vpop.f32.mrb[0].mxu0
      %v1831 = vpop.f32.mrb[0].mxu0
      %v1832 = vadd.f32 %v1640, %v1831
      %v1833 = vpop.f32.mrb[0].mxu0
      %1834 = vmatprep.mubr.bf16.mxu0 0
      %1835 = vmatmul.mubr.bf16.gmra.mrb[0].mxu0 %v832
      %v1836 = vpop.f32.mrb[0].mxu0
      %v1837 = vadd.f32 %v1640, %v1836
      %v1838 = vpop.f32.mrb[0].mxu0
      %v1839 = vpop.f32.mrb[0].mxu0
      %v1840 = vadd.f32 %v1640, %v1839
      %v1841 = vpop.f32.mrb[0].mxu0
      %1842 = vmatprep.mubr.bf16.mxu0 0
      %1843 = vmatmul.mubr.bf16.gmra.mrb[0].mxu0 %v833
      %v1844 = vpop.f32.mrb[0].mxu0
      %v1845 = vadd.f32 %v1640, %v1844
      %v1846 = vpop.f32.mrb[0].mxu0
      %v1847 = vpop.f32.mrb[0].mxu0
      %v1848 = vadd.f32 %v1640, %v1847
      %v1849 = vpop.f32.mrb[0].mxu0
      %1850 = vdwg.mxu0
      %v1851 = vmax.f32 %v1725, 0.0
      %v1852 = vmax.f32 %v1728, 0.0
      %v1853 = vmax.f32 %v1733, 0.0
      %v1854 = vmax.f32 %v1736, 0.0
      %v1855 = vmax.f32 %v1741, 0.0
      %v1856 = vmax.f32 %v1744, 0.0
      %v1857 = vmax.f32 %v1749, 0.0
      %v1858 = vmax.f32 %v1752, 0.0
      %v1859 = vmax.f32 %v1757, 0.0
      %v1860 = vmax.f32 %v1760, 0.0
      %v1861 = vmax.f32 %v1765, 0.0
      %v1862 = vmax.f32 %v1768, 0.0
      %v1863 = vmax.f32 %v1773, 0.0
      %v1864 = vmax.f32 %v1776, 0.0
      %v1865 = vmax.f32 %v1781, 0.0
      %v1866 = vmax.f32 %v1784, 0.0
      %v1867 = vmax.f32 %v1789, 0.0
      %v1868 = vmax.f32 %v1792, 0.0
      %v1869 = vmax.f32 %v1797, 0.0
      %v1870 = vmax.f32 %v1800, 0.0
      %v1871 = vmax.f32 %v1805, 0.0
      %v1872 = vmax.f32 %v1808, 0.0
      %v1873 = vmax.f32 %v1813, 0.0
      %v1874 = vmax.f32 %v1816, 0.0
      %v1875 = vmax.f32 %v1821, 0.0
      %v1876 = vmax.f32 %v1824, 0.0
      %v1877 = vmax.f32 %v1829, 0.0
      %v1878 = vmax.f32 %v1832, 0.0
      %v1879 = vmax.f32 %v1837, 0.0
      %v1880 = vmax.f32 %v1840, 0.0
      %v1881 = vmax.f32 %v1845, 0.0
      %v1882 = vmax.f32 %v1848, 0.0
      %v1883 = vpack.c.bf16 %v1852, %v1851
      %v1884 = vpack.c.bf16 %v1854, %v1853
      %v1885 = vpack.c.bf16 %v1856, %v1855
      %v1886 = vpack.c.bf16 %v1858, %v1857
      %v1887 = vpack.c.bf16 %v1860, %v1859
      %v1888 = vpack.c.bf16 %v1862, %v1861
      %v1889 = vpack.c.bf16 %v1864, %v1863
      %v1890 = vpack.c.bf16 %v1866, %v1865
      %v1891 = vpack.c.bf16 %v1868, %v1867
      %v1892 = vpack.c.bf16 %v1870, %v1869
      %v1893 = vpack.c.bf16 %v1872, %v1871
      %v1894 = vpack.c.bf16 %v1874, %v1873
      %v1895 = vpack.c.bf16 %v1876, %v1875
      %v1896 = vpack.c.bf16 %v1878, %v1877
      %v1897 = vpack.c.bf16 %v1880, %v1879
      %v1898 = vpack.c.bf16 %v1882, %v1881
      %v1899 = vld [vmem:[%s8] sm:$0xf]
      %v1900 = vld [vmem:[%s8 + $0x4] sm:$0xf]
      %v1901 = vld [vmem:[%s8 + $0x8] sm:$0xf]
      %v1902 = vld [vmem:[%s8 + $0xc] sm:$0xf]
      %v1903 = vld [vmem:[%s8 + $0x10] sm:$0xf]
      %v1904 = vld [vmem:[%s8 + $0x14] sm:$0xf]
      %v1905 = vld [vmem:[%s8 + $0x18] sm:$0xf]
      %v1906 = vld [vmem:[%s8 + $0x1c] sm:$0xf]
      %v1907 = vld [vmem:[%s8 + $0x20] sm:$0xf]
      %v1908 = vld [vmem:[%s8 + $0x24] sm:$0xf]
      %v1909 = vld [vmem:[%s8 + $0x28] sm:$0xf]
      %v1910 = vld [vmem:[%s8 + $0x2c] sm:$0xf]
      %v1911 = vld [vmem:[%s8 + $0x30] sm:$0xf]
      %v1912 = vld [vmem:[%s8 + $0x34] sm:$0xf]
      %v1913 = vld [vmem:[%s8 + $0x38] sm:$0xf]
      %v1914 = vld [vmem:[%s8 + $0x3c] sm:$0xf]
      %v1915 = vld [vmem:[%s9] sm:$0x1]
      %v1917 = vlaneseq
      %v1918 = vshrl.u32 %v1917, 7
      %v1919 = vsub.s32 0, %v1918
      %v1920 = vrot.slane %v1915, %v1919
      %v1938 = vunpack.c.l.b16 %v1899
      %v1939 = vunpack.c.l.b16 %v1900
      %v1940 = vunpack.c.l.b16 %v1901
      %v1941 = vunpack.c.l.b16 %v1902
      %v1942 = vunpack.c.l.b16 %v1903
      %v1943 = vunpack.c.l.b16 %v1904
      %v1944 = vunpack.c.l.b16 %v1905
      %v1945 = vunpack.c.l.b16 %v1906
      %v1946 = vunpack.c.l.b16 %v1907
      %v1947 = vunpack.c.l.b16 %v1908
      %v1948 = vunpack.c.l.b16 %v1909
      %v1949 = vunpack.c.l.b16 %v1910
      %v1950 = vunpack.c.l.b16 %v1911
      %v1951 = vunpack.c.l.b16 %v1912
      %v1952 = vunpack.c.l.b16 %v1913
      %v1953 = vunpack.c.l.b16 %v1914
      %v1954 = vpack.c.b16 %v1939, %v1938
      %v1955 = vpack.c.b16 %v1941, %v1940
      %v1956 = vpack.c.b16 %v1943, %v1942
      %v1957 = vpack.c.b16 %v1945, %v1944
      %v1958 = vpack.c.b16 %v1947, %v1946
      %v1959 = vpack.c.b16 %v1949, %v1948
      %v1960 = vpack.c.b16 %v1951, %v1950
      %v1961 = vpack.c.b16 %v1953, %v1952
      %1970 = vmatprep.subr.bf16.mxu0 0
      %1971 = vmatpush1.bf16.msra.mxu0 %v1954
      %1972 = vmatprep.subr.bf16.mxu0 0
      %1973 = vmatpush1.bf16.msra.mxu0 %v1955
      %1974 = vmatprep.subr.bf16.mxu0 0
      %1975 = vmatpush1.bf16.msra.mxu0 %v1956
      %1976 = vmatprep.subr.bf16.mxu0 0
      %1977 = vmatpush1.bf16.msra.mxu0 %v1957
      %1978 = vmatprep.subr.bf16.mxu0 0
      %1979 = vmatpush1.bf16.msra.mxu0 %v1958
      %1980 = vmatprep.subr.bf16.mxu0 0
      %1981 = vmatpush1.bf16.msra.mxu0 %v1959
      %1982 = vmatprep.subr.bf16.mxu0 0
      %1983 = vmatpush1.bf16.msra.mxu0 %v1960
      %1984 = vmatprep.subr.bf16.mxu0 0
      %1985 = vmatpush1.bf16.msra.mxu0 %v1961
      %1986 = vmatprep.subr.bf16.mxu0 0
      %1987 = vmatpush1.bf16.msra.mxu0 0
      %1988 = vmatprep.subr.bf16.mxu0 0
      %1989 = vmatpush1.bf16.msra.mxu0 0
      %1990 = vmatprep.subr.bf16.mxu0 0
      %1991 = vmatpush1.bf16.msra.mxu0 0
      %1992 = vmatprep.subr.bf16.mxu0 0
      %1993 = vmatpush1.bf16.msra.mxu0 0
      %1994 = vmatprep.subr.bf16.mxu0 0
      %1995 = vmatpush1.bf16.msra.mxu0 0
      %1996 = vmatprep.subr.bf16.mxu0 0
      %1997 = vmatpush1.bf16.msra.mxu0 0
      %1998 = vmatprep.subr.bf16.mxu0 0
      %1999 = vmatpush1.bf16.msra.mxu0 0
      %2000 = vmatprep.subr.bf16.mxu0 0
      %2001 = vmatpush1.bf16.msra.mxu0 0
      %2002 = vmatprep.mubr.bf16.mxu0 0
      %2003 = vmatmul.mubr.bf16.gmra.mrb[0].mxu0 %v1883
      %v2004 = vpop.f32.mrb[0].mxu0
      %v2005 = vadd.f32 %v1920, %v2004
      %v2006 = vpop.f32.mrb[0].mxu0
      %v2007 = vpop.f32.mrb[0].mxu0
      %v2008 = vadd.f32 %v1920, %v2007
      %v2009 = vpop.f32.mrb[0].mxu0
      %2010 = vmatprep.mubr.bf16.mxu0 0
      %2011 = vmatmul.mubr.bf16.gmra.mrb[0].mxu0 %v1884
      %v2012 = vpop.f32.mrb[0].mxu0
      %v2013 = vadd.f32 %v1920, %v2012
      %v2014 = vpop.f32.mrb[0].mxu0
      %v2015 = vpop.f32.mrb[0].mxu0
      %v2016 = vadd.f32 %v1920, %v2015
      %v2017 = vpop.f32.mrb[0].mxu0
      %2018 = vmatprep.mubr.bf16.mxu0 0
      %2019 = vmatmul.mubr.bf16.gmra.mrb[0].mxu0 %v1885
      %v2020 = vpop.f32.mrb[0].mxu0
      %v2021 = vadd.f32 %v1920, %v2020
      %v2022 = vpop.f32.mrb[0].mxu0
      %v2023 = vpop.f32.mrb[0].mxu0
      %v2024 = vadd.f32 %v1920, %v2023
      %v2025 = vpop.f32.mrb[0].mxu0
      %2026 = vmatprep.mubr.bf16.mxu0 0
      %2027 = vmatmul.mubr.bf16.gmra.mrb[0].mxu0 %v1886
      %v2028 = vpop.f32.mrb[0].mxu0
      %v2029 = vadd.f32 %v1920, %v2028
      %v2030 = vpop.f32.mrb[0].mxu0
      %v2031 = vpop.f32.mrb[0].mxu0
      %v2032 = vadd.f32 %v1920, %v2031
      %v2033 = vpop.f32.mrb[0].mxu0
      %2034 = vmatprep.mubr.bf16.mxu0 0
      %2035 = vmatmul.mubr.bf16.gmra.mrb[0].mxu0 %v1887
      %v2036 = vpop.f32.mrb[0].mxu0
      %v2037 = vadd.f32 %v1920, %v2036
      %v2038 = vpop.f32.mrb[0].mxu0
      %v2039 = vpop.f32.mrb[0].mxu0
      %v2040 = vadd.f32 %v1920, %v2039
      %v2041 = vpop.f32.mrb[0].mxu0
      %2042 = vmatprep.mubr.bf16.mxu0 0
      %2043 = vmatmul.mubr.bf16.gmra.mrb[0].mxu0 %v1888
      %v2044 = vpop.f32.mrb[0].mxu0
      %v2045 = vadd.f32 %v1920, %v2044
      %v2046 = vpop.f32.mrb[0].mxu0
      %v2047 = vpop.f32.mrb[0].mxu0
      %v2048 = vadd.f32 %v1920, %v2047
      %v2049 = vpop.f32.mrb[0].mxu0
      %2050 = vmatprep.mubr.bf16.mxu0 0
      %2051 = vmatmul.mubr.bf16.gmra.mrb[0].mxu0 %v1889
      %v2052 = vpop.f32.mrb[0].mxu0
      %v2053 = vadd.f32 %v1920, %v2052
      %v2054 = vpop.f32.mrb[0].mxu0
      %v2055 = vpop.f32.mrb[0].mxu0
      %v2056 = vadd.f32 %v1920, %v2055
      %v2057 = vpop.f32.mrb[0].mxu0
      %2058 = vmatprep.mubr.bf16.mxu0 0
      %2059 = vmatmul.mubr.bf16.gmra.mrb[0].mxu0 %v1890
      %v2060 = vpop.f32.mrb[0].mxu0
      %v2061 = vadd.f32 %v1920, %v2060
      %v2062 = vpop.f32.mrb[0].mxu0
      %v2063 = vpop.f32.mrb[0].mxu0
      %v2064 = vadd.f32 %v1920, %v2063
      %v2065 = vpop.f32.mrb[0].mxu0
      %2066 = vmatprep.mubr.bf16.mxu0 0
      %2067 = vmatmul.mubr.bf16.gmra.mrb[0].mxu0 %v1891
      %v2068 = vpop.f32.mrb[0].mxu0
      %v2069 = vadd.f32 %v1920, %v2068
      %v2070 = vpop.f32.mrb[0].mxu0
      %v2071 = vpop.f32.mrb[0].mxu0
      %v2072 = vadd.f32 %v1920, %v2071
      %v2073 = vpop.f32.mrb[0].mxu0
      %2074 = vmatprep.mubr.bf16.mxu0 0
      %2075 = vmatmul.mubr.bf16.gmra.mrb[0].mxu0 %v1892
      %v2076 = vpop.f32.mrb[0].mxu0
      %v2077 = vadd.f32 %v1920, %v2076
      %v2078 = vpop.f32.mrb[0].mxu0
      %v2079 = vpop.f32.mrb[0].mxu0
      %v2080 = vadd.f32 %v1920, %v2079
      %v2081 = vpop.f32.mrb[0].mxu0
      %2082 = vmatprep.mubr.bf16.mxu0 0
      %2083 = vmatmul.mubr.bf16.gmra.mrb[0].mxu0 %v1893
      %v2084 = vpop.f32.mrb[0].mxu0
      %v2085 = vadd.f32 %v1920, %v2084
      %v2086 = vpop.f32.mrb[0].mxu0
      %v2087 = vpop.f32.mrb[0].mxu0
      %v2088 = vadd.f32 %v1920, %v2087
      %v2089 = vpop.f32.mrb[0].mxu0
      %2090 = vmatprep.mubr.bf16.mxu0 0
      %2091 = vmatmul.mubr.bf16.gmra.mrb[0].mxu0 %v1894
      %v2092 = vpop.f32.mrb[0].mxu0
      %v2093 = vadd.f32 %v1920, %v2092
      %v2094 = vpop.f32.mrb[0].mxu0
      %v2095 = vpop.f32.mrb[0].mxu0
      %v2096 = vadd.f32 %v1920, %v2095
      %v2097 = vpop.f32.mrb[0].mxu0
      %2098 = vmatprep.mubr.bf16.mxu0 0
      %2099 = vmatmul.mubr.bf16.gmra.mrb[0].mxu0 %v1895
      %v2100 = vpop.f32.mrb[0].mxu0
      %v2101 = vadd.f32 %v1920, %v2100
      %v2102 = vpop.f32.mrb[0].mxu0
      %v2103 = vpop.f32.mrb[0].mxu0
      %v2104 = vadd.f32 %v1920, %v2103
      %v2105 = vpop.f32.mrb[0].mxu0
      %2106 = vmatprep.mubr.bf16.mxu0 0
      %2107 = vmatmul.mubr.bf16.gmra.mrb[0].mxu0 %v1896
      %v2108 = vpop.f32.mrb[0].mxu0
      %v2109 = vadd.f32 %v1920, %v2108
      %v2110 = vpop.f32.mrb[0].mxu0
      %v2111 = vpop.f32.mrb[0].mxu0
      %v2112 = vadd.f32 %v1920, %v2111
      %v2113 = vpop.f32.mrb[0].mxu0
      %2114 = vmatprep.mubr.bf16.mxu0 0
      %2115 = vmatmul.mubr.bf16.gmra.mrb[0].mxu0 %v1897
      %v2116 = vpop.f32.mrb[0].mxu0
      %v2117 = vadd.f32 %v1920, %v2116
      %v2118 = vpop.f32.mrb[0].mxu0
      %v2119 = vpop.f32.mrb[0].mxu0
      %v2120 = vadd.f32 %v1920, %v2119
      %v2121 = vpop.f32.mrb[0].mxu0
      %2122 = vmatprep.mubr.bf16.mxu0 0
      %2123 = vmatmul.mubr.bf16.gmra.mrb[0].mxu0 %v1898
      %v2124 = vpop.f32.mrb[0].mxu0
      %v2125 = vadd.f32 %v1920, %v2124
      %v2126 = vpop.f32.mrb[0].mxu0
      %v2127 = vpop.f32.mrb[0].mxu0
      %v2128 = vadd.f32 %v1920, %v2127
      %v2129 = vpop.f32.mrb[0].mxu0
      %2130 = vdwg.mxu0
      %2131 = vmax.xlane.f32.xlu0 %v2005
      %v2132 = vpop.xlane.xlu0 %2131
      %2133 = vmax.xlane.f32.xlu0 %v2008
      %v2134 = vpop.xlane.xlu0 %2133
      %2135 = vmax.xlane.f32.xlu0 %v2013
      %v2136 = vpop.xlane.xlu0 %2135
      %2137 = vmax.xlane.f32.xlu0 %v2016
      %v2138 = vpop.xlane.xlu0 %2137
      %2139 = vmax.xlane.f32.xlu0 %v2021
      %v2140 = vpop.xlane.xlu0 %2139
      %2141 = vmax.xlane.f32.xlu0 %v2024
      %v2142 = vpop.xlane.xlu0 %2141
      %2143 = vmax.xlane.f32.xlu0 %v2029
      %v2144 = vpop.xlane.xlu0 %2143
      %2145 = vmax.xlane.f32.xlu0 %v2032
      %v2146 = vpop.xlane.xlu0 %2145
      %2147 = vmax.xlane.f32.xlu0 %v2037
      %v2148 = vpop.xlane.xlu0 %2147
      %2149 = vmax.xlane.f32.xlu0 %v2040
      %v2150 = vpop.xlane.xlu0 %2149
      %2151 = vmax.xlane.f32.xlu0 %v2045
      %v2152 = vpop.xlane.xlu0 %2151
      %2153 = vmax.xlane.f32.xlu0 %v2048
      %v2154 = vpop.xlane.xlu0 %2153
      %2155 = vmax.xlane.f32.xlu0 %v2053
      %v2156 = vpop.xlane.xlu0 %2155
      %2157 = vmax.xlane.f32.xlu0 %v2056
      %v2158 = vpop.xlane.xlu0 %2157
      %2159 = vmax.xlane.f32.xlu0 %v2061
      %v2160 = vpop.xlane.xlu0 %2159
      %2161 = vmax.xlane.f32.xlu0 %v2064
      %v2162 = vpop.xlane.xlu0 %2161
      %2163 = vmax.xlane.f32.xlu0 %v2069
      %v2164 = vpop.xlane.xlu0 %2163
      %2165 = vmax.xlane.f32.xlu0 %v2072
      %v2166 = vpop.xlane.xlu0 %2165
      %2167 = vmax.xlane.f32.xlu0 %v2077
      %v2168 = vpop.xlane.xlu0 %2167
      %2169 = vmax.xlane.f32.xlu0 %v2080
      %v2170 = vpop.xlane.xlu0 %2169
      %2171 = vmax.xlane.f32.xlu0 %v2085
      %v2172 = vpop.xlane.xlu0 %2171
      %2173 = vmax.xlane.f32.xlu0 %v2088
      %v2174 = vpop.xlane.xlu0 %2173
      %2175 = vmax.xlane.f32.xlu0 %v2093
      %v2176 = vpop.xlane.xlu0 %2175
      %2177 = vmax.xlane.f32.xlu0 %v2096
      %v2178 = vpop.xlane.xlu0 %2177
      %2179 = vmax.xlane.f32.xlu0 %v2101
      %v2180 = vpop.xlane.xlu0 %2179
      %2181 = vmax.xlane.f32.xlu0 %v2104
      %v2182 = vpop.xlane.xlu0 %2181
      %2183 = vmax.xlane.f32.xlu0 %v2109
      %v2184 = vpop.xlane.xlu0 %2183
      %2185 = vmax.xlane.f32.xlu0 %v2112
      %v2186 = vpop.xlane.xlu0 %2185
      %2187 = vmax.xlane.f32.xlu0 %v2117
      %v2188 = vpop.xlane.xlu0 %2187
      %2189 = vmax.xlane.f32.xlu0 %v2120
      %v2190 = vpop.xlane.xlu0 %2189
      %2191 = vmax.xlane.f32.xlu0 %v2125
      %v2192 = vpop.xlane.xlu0 %2191
      %2193 = vmax.xlane.f32.xlu0 %v2128
      %v2194 = vpop.xlane.xlu0 %2193
      %v2195 = vsub.f32 %v2005, %v2132
      %v2196 = vsub.f32 %v2008, %v2134
      %v2197 = vsub.f32 %v2013, %v2136
      %v2198 = vsub.f32 %v2016, %v2138
      %v2199 = vsub.f32 %v2021, %v2140
      %v2200 = vsub.f32 %v2024, %v2142
      %v2201 = vsub.f32 %v2029, %v2144
      %v2202 = vsub.f32 %v2032, %v2146
      %v2203 = vsub.f32 %v2037, %v2148
      %v2204 = vsub.f32 %v2040, %v2150
      %v2205 = vsub.f32 %v2045, %v2152
      %v2206 = vsub.f32 %v2048, %v2154
      %v2207 = vsub.f32 %v2053, %v2156
      %v2208 = vsub.f32 %v2056, %v2158
      %v2209 = vsub.f32 %v2061, %v2160
      %v2210 = vsub.f32 %v2064, %v2162
      %v2211 = vsub.f32 %v2069, %v2164
      %v2212 = vsub.f32 %v2072, %v2166
      %v2213 = vsub.f32 %v2077, %v2168
      %v2214 = vsub.f32 %v2080, %v2170
      %v2215 = vsub.f32 %v2085, %v2172
      %v2216 = vsub.f32 %v2088, %v2174
      %v2217 = vsub.f32 %v2093, %v2176
      %v2218 = vsub.f32 %v2096, %v2178
      %v2219 = vsub.f32 %v2101, %v2180
      %v2220 = vsub.f32 %v2104, %v2182
      %v2221 = vsub.f32 %v2109, %v2184
      %v2222 = vsub.f32 %v2112, %v2186
      %v2223 = vsub.f32 %v2117, %v2188
      %v2224 = vsub.f32 %v2120, %v2190
      %v2225 = vsub.f32 %v2125, %v2192
      %v2226 = vsub.f32 %v2128, %v2194
      %v2227 = vmul.f32 %v2195, 1.442695
      %v2228 = vpow.pop %v2227
      %v2229 = vmul.f32 %v2196, 1.442695
      %v2230 = vpow.pop %v2229
      %v2231 = vmul.f32 %v2197, 1.442695
      %v2232 = vpow.pop %v2231
      %v2233 = vmul.f32 %v2198, 1.442695
      %v2234 = vpow.pop %v2233
      %v2235 = vmul.f32 %v2199, 1.442695
      %v2236 = vpow.pop %v2235
      %v2237 = vmul.f32 %v2200, 1.442695
      %v2238 = vpow.pop %v2237
      %v2239 = vmul.f32 %v2201, 1.442695
      %v2240 = vpow.pop %v2239
      %v2241 = vmul.f32 %v2202, 1.442695
      %v2242 = vpow.pop %v2241
      %v2243 = vmul.f32 %v2203, 1.442695
      %v2244 = vpow.pop %v2243
      %v2245 = vmul.f32 %v2204, 1.442695
      %v2246 = vpow.pop %v2245
      %v2247 = vmul.f32 %v2205, 1.442695
      %v2248 = vpow.pop %v2247
      %v2249 = vmul.f32 %v2206, 1.442695
      %v2250 = vpow.pop %v2249
      %v2251 = vmul.f32 %v2207, 1.442695
      %v2252 = vpow.pop %v2251
      %v2253 = vmul.f32 %v2208, 1.442695
      %v2254 = vpow.pop %v2253
      %v2255 = vmul.f32 %v2209, 1.442695
      %v2256 = vpow.pop %v2255
      %v2257 = vmul.f32 %v2210, 1.442695
      %v2258 = vpow.pop %v2257
      %v2259 = vmul.f32 %v2211, 1.442695
      %v2260 = vpow.pop %v2259
      %v2261 = vmul.f32 %v2212, 1.442695
      %v2262 = vpow.pop %v2261
      %v2263 = vmul.f32 %v2213, 1.442695
      %v2264 = vpow.pop %v2263
      %v2265 = vmul.f32 %v2214, 1.442695
      %v2266 = vpow.pop %v2265
      %v2267 = vmul.f32 %v2215, 1.442695
      %v2268 = vpow.pop %v2267
      %v2269 = vmul.f32 %v2216, 1.442695
      %v2270 = vpow.pop %v2269
      %v2271 = vmul.f32 %v2217, 1.442695
      %v2272 = vpow.pop %v2271
      %v2273 = vmul.f32 %v2218, 1.442695
      %v2274 = vpow.pop %v2273
      %v2275 = vmul.f32 %v2219, 1.442695
      %v2276 = vpow.pop %v2275
      %v2277 = vmul.f32 %v2220, 1.442695
      %v2278 = vpow.pop %v2277
      %v2279 = vmul.f32 %v2221, 1.442695
      %v2280 = vpow.pop %v2279
      %v2281 = vmul.f32 %v2222, 1.442695
      %v2282 = vpow.pop %v2281
      %v2283 = vmul.f32 %v2223, 1.442695
      %v2284 = vpow.pop %v2283
      %v2285 = vmul.f32 %v2224, 1.442695
      %v2286 = vpow.pop %v2285
      %v2287 = vmul.f32 %v2225, 1.442695
      %v2288 = vpow.pop %v2287
      %v2289 = vmul.f32 %v2226, 1.442695
      %v2290 = vpow.pop %v2289
      %2291 = vadd.xlane.f32.xlu0 %v2228
      %v2292 = vpop.xlane.xlu0 %2291
      %2293 = vadd.xlane.f32.xlu0 %v2230
      %v2294 = vpop.xlane.xlu0 %2293
      %2295 = vadd.xlane.f32.xlu0 %v2232
      %v2296 = vpop.xlane.xlu0 %2295
      %2297 = vadd.xlane.f32.xlu0 %v2234
      %v2298 = vpop.xlane.xlu0 %2297
      %2299 = vadd.xlane.f32.xlu0 %v2236
      %v2300 = vpop.xlane.xlu0 %2299
      %2301 = vadd.xlane.f32.xlu0 %v2238
      %v2302 = vpop.xlane.xlu0 %2301
      %2303 = vadd.xlane.f32.xlu0 %v2240
      %v2304 = vpop.xlane.xlu0 %2303
      %2305 = vadd.xlane.f32.xlu0 %v2242
      %v2306 = vpop.xlane.xlu0 %2305
      %2307 = vadd.xlane.f32.xlu0 %v2244
      %v2308 = vpop.xlane.xlu0 %2307
      %2309 = vadd.xlane.f32.xlu0 %v2246
      %v2310 = vpop.xlane.xlu0 %2309
      %2311 = vadd.xlane.f32.xlu0 %v2248
      %v2312 = vpop.xlane.xlu0 %2311
      %2313 = vadd.xlane.f32.xlu0 %v2250
      %v2314 = vpop.xlane.xlu0 %2313
      %2315 = vadd.xlane.f32.xlu0 %v2252
      %v2316 = vpop.xlane.xlu0 %2315
      %2317 = vadd.xlane.f32.xlu0 %v2254
      %v2318 = vpop.xlane.xlu0 %2317
      %2319 = vadd.xlane.f32.xlu0 %v2256
      %v2320 = vpop.xlane.xlu0 %2319
      %2321 = vadd.xlane.f32.xlu0 %v2258
      %v2322 = vpop.xlane.xlu0 %2321
      %2323 = vadd.xlane.f32.xlu0 %v2260
      %v2324 = vpop.xlane.xlu0 %2323
      %2325 = vadd.xlane.f32.xlu0 %v2262
      %v2326 = vpop.xlane.xlu0 %2325
      %2327 = vadd.xlane.f32.xlu0 %v2264
      %v2328 = vpop.xlane.xlu0 %2327
      %2329 = vadd.xlane.f32.xlu0 %v2266
      %v2330 = vpop.xlane.xlu0 %2329
      %2331 = vadd.xlane.f32.xlu0 %v2268
      %v2332 = vpop.xlane.xlu0 %2331
      %2333 = vadd.xlane.f32.xlu0 %v2270
      %v2334 = vpop.xlane.xlu0 %2333
      %2335 = vadd.xlane.f32.xlu0 %v2272
      %v2336 = vpop.xlane.xlu0 %2335
      %2337 = vadd.xlane.f32.xlu0 %v2274
      %v2338 = vpop.xlane.xlu0 %2337
      %2339 = vadd.xlane.f32.xlu0 %v2276
      %v2340 = vpop.xlane.xlu0 %2339
      %2341 = vadd.xlane.f32.xlu0 %v2278
      %v2342 = vpop.xlane.xlu0 %2341
      %2343 = vadd.xlane.f32.xlu0 %v2280
      %v2344 = vpop.xlane.xlu0 %2343
      %2345 = vadd.xlane.f32.xlu0 %v2282
      %v2346 = vpop.xlane.xlu0 %2345
      %2347 = vadd.xlane.f32.xlu0 %v2284
      %v2348 = vpop.xlane.xlu0 %2347
      %2349 = vadd.xlane.f32.xlu0 %v2286
      %v2350 = vpop.xlane.xlu0 %2349
      %2351 = vadd.xlane.f32.xlu0 %v2288
      %v2352 = vpop.xlane.xlu0 %2351
      %2353 = vadd.xlane.f32.xlu0 %v2290
      %v2354 = vpop.xlane.xlu0 %2353
      %v2355 = vlog2.pop %v2292
      %v2356 = vmul.f32 %v2355, 0.6931472
      %v2357 = vlog2.pop %v2294
      %v2358 = vmul.f32 %v2357, 0.6931472
      %v2359 = vlog2.pop %v2296
      %v2360 = vmul.f32 %v2359, 0.6931472
      %v2361 = vlog2.pop %v2298
      %v2362 = vmul.f32 %v2361, 0.6931472
      %v2363 = vlog2.pop %v2300
      %v2364 = vmul.f32 %v2363, 0.6931472
      %v2365 = vlog2.pop %v2302
      %v2366 = vmul.f32 %v2365, 0.6931472
      %v2367 = vlog2.pop %v2304
      %v2368 = vmul.f32 %v2367, 0.6931472
      %v2369 = vlog2.pop %v2306
      %v2370 = vmul.f32 %v2369, 0.6931472
      %v2371 = vlog2.pop %v2308
      %v2372 = vmul.f32 %v2371, 0.6931472
      %v2373 = vlog2.pop %v2310
      %v2374 = vmul.f32 %v2373, 0.6931472
      %v2375 = vlog2.pop %v2312
      %v2376 = vmul.f32 %v2375, 0.6931472
      %v2377 = vlog2.pop %v2314
      %v2378 = vmul.f32 %v2377, 0.6931472
      %v2379 = vlog2.pop %v2316
      %v2380 = vmul.f32 %v2379, 0.6931472
      %v2381 = vlog2.pop %v2318
      %v2382 = vmul.f32 %v2381, 0.6931472
      %v2383 = vlog2.pop %v2320
      %v2384 = vmul.f32 %v2383, 0.6931472
      %v2385 = vlog2.pop %v2322
      %v2386 = vmul.f32 %v2385, 0.6931472
      %v2387 = vlog2.pop %v2324
      %v2388 = vmul.f32 %v2387, 0.6931472
      %v2389 = vlog2.pop %v2326
      %v2390 = vmul.f32 %v2389, 0.6931472
      %v2391 = vlog2.pop %v2328
      %v2392 = vmul.f32 %v2391, 0.6931472
      %v2393 = vlog2.pop %v2330
      %v2394 = vmul.f32 %v2393, 0.6931472
      %v2395 = vlog2.pop %v2332
      %v2396 = vmul.f32 %v2395, 0.6931472
      %v2397 = vlog2.pop %v2334
      %v2398 = vmul.f32 %v2397, 0.6931472
      %v2399 = vlog2.pop %v2336
      %v2400 = vmul.f32 %v2399, 0.6931472
      %v2401 = vlog2.pop %v2338
      %v2402 = vmul.f32 %v2401, 0.6931472
      %v2403 = vlog2.pop %v2340
      %v2404 = vmul.f32 %v2403, 0.6931472
      %v2405 = vlog2.pop %v2342
      %v2406 = vmul.f32 %v2405, 0.6931472
      %v2407 = vlog2.pop %v2344
      %v2408 = vmul.f32 %v2407, 0.6931472
      %v2409 = vlog2.pop %v2346
      %v2410 = vmul.f32 %v2409, 0.6931472
      %v2411 = vlog2.pop %v2348
      %v2412 = vmul.f32 %v2411, 0.6931472
      %v2413 = vlog2.pop %v2350
      %v2414 = vmul.f32 %v2413, 0.6931472
      %v2415 = vlog2.pop %v2352
      %v2416 = vmul.f32 %v2415, 0.6931472
      %v2417 = vlog2.pop %v2354
      %v2418 = vmul.f32 %v2417, 0.6931472
      %v2419 = vadd.f32 %v2132, %v2356
      %v2420 = vadd.f32 %v2134, %v2358
      %v2421 = vadd.f32 %v2136, %v2360
      %v2422 = vadd.f32 %v2138, %v2362
      %v2423 = vadd.f32 %v2140, %v2364
      %v2424 = vadd.f32 %v2142, %v2366
      %v2425 = vadd.f32 %v2144, %v2368
      %v2426 = vadd.f32 %v2146, %v2370
      %v2427 = vadd.f32 %v2148, %v2372
      %v2428 = vadd.f32 %v2150, %v2374
      %v2429 = vadd.f32 %v2152, %v2376
      %v2430 = vadd.f32 %v2154, %v2378
      %v2431 = vadd.f32 %v2156, %v2380
      %v2432 = vadd.f32 %v2158, %v2382
      %v2433 = vadd.f32 %v2160, %v2384
      %v2434 = vadd.f32 %v2162, %v2386
      %v2435 = vadd.f32 %v2164, %v2388
      %v2436 = vadd.f32 %v2166, %v2390
      %v2437 = vadd.f32 %v2168, %v2392
      %v2438 = vadd.f32 %v2170, %v2394
      %v2439 = vadd.f32 %v2172, %v2396
      %v2440 = vadd.f32 %v2174, %v2398
      %v2441 = vadd.f32 %v2176, %v2400
      %v2442 = vadd.f32 %v2178, %v2402
      %v2443 = vadd.f32 %v2180, %v2404
      %v2444 = vadd.f32 %v2182, %v2406
      %v2445 = vadd.f32 %v2184, %v2408
      %v2446 = vadd.f32 %v2186, %v2410
      %v2447 = vadd.f32 %v2188, %v2412
      %v2448 = vadd.f32 %v2190, %v2414
      %v2449 = vadd.f32 %v2192, %v2416
      %v2450 = vadd.f32 %v2194, %v2418
      %v2451 = vsub.f32 %v2419, %v2005
      %v2452 = vsub.f32 %v2420, %v2008
      %v2453 = vsub.f32 %v2421, %v2013
      %v2454 = vsub.f32 %v2422, %v2016
      %v2455 = vsub.f32 %v2423, %v2021
      %v2456 = vsub.f32 %v2424, %v2024
      %v2457 = vsub.f32 %v2425, %v2029
      %v2458 = vsub.f32 %v2426, %v2032
      %v2459 = vsub.f32 %v2427, %v2037
      %v2460 = vsub.f32 %v2428, %v2040
      %v2461 = vsub.f32 %v2429, %v2045
      %v2462 = vsub.f32 %v2430, %v2048
      %v2463 = vsub.f32 %v2431, %v2053
      %v2464 = vsub.f32 %v2432, %v2056
      %v2465 = vsub.f32 %v2433, %v2061
      %v2466 = vsub.f32 %v2434, %v2064
      %v2467 = vsub.f32 %v2435, %v2069
      %v2468 = vsub.f32 %v2436, %v2072
      %v2469 = vsub.f32 %v2437, %v2077
      %v2470 = vsub.f32 %v2438, %v2080
      %v2471 = vsub.f32 %v2439, %v2085
      %v2472 = vsub.f32 %v2440, %v2088
      %v2473 = vsub.f32 %v2441, %v2093
      %v2474 = vsub.f32 %v2442, %v2096
      %v2475 = vsub.f32 %v2443, %v2101
      %v2476 = vsub.f32 %v2444, %v2104
      %v2477 = vsub.f32 %v2445, %v2109
      %v2478 = vsub.f32 %v2446, %v2112
      %v2479 = vsub.f32 %v2447, %v2117
      %v2480 = vsub.f32 %v2448, %v2120
      %v2481 = vsub.f32 %v2449, %v2125
      %v2482 = vsub.f32 %v2450, %v2128
      %vm2483 = vcmask 7168
      %v2484 = vsel %vm2483, %v2451, 0.0
      %v2485 = vsel %vm2483, %v2452, 0.0
      %v2486 = vadd.f32 %v2484, %v2485
      %v2487 = vsel %vm2483, %v2453, 0.0
      %v2488 = vadd.f32 %v2486, %v2487
      %v2489 = vsel %vm2483, %v2454, 0.0
      %v2490 = vadd.f32 %v2488, %v2489
      %v2491 = vsel %vm2483, %v2455, 0.0
      %v2492 = vadd.f32 %v2490, %v2491
      %v2493 = vsel %vm2483, %v2456, 0.0
      %v2494 = vadd.f32 %v2492, %v2493
      %v2495 = vsel %vm2483, %v2457, 0.0
      %v2496 = vadd.f32 %v2494, %v2495
      %v2497 = vsel %vm2483, %v2458, 0.0
      %v2498 = vadd.f32 %v2496, %v2497
      %v2499 = vsel %vm2483, %v2459, 0.0
      %v2500 = vadd.f32 %v2498, %v2499
      %v2501 = vsel %vm2483, %v2460, 0.0
      %v2502 = vadd.f32 %v2500, %v2501
      %v2503 = vsel %vm2483, %v2461, 0.0
      %v2504 = vadd.f32 %v2502, %v2503
      %v2505 = vsel %vm2483, %v2462, 0.0
      %v2506 = vadd.f32 %v2504, %v2505
      %v2507 = vsel %vm2483, %v2463, 0.0
      %v2508 = vadd.f32 %v2506, %v2507
      %v2509 = vsel %vm2483, %v2464, 0.0
      %v2510 = vadd.f32 %v2508, %v2509
      %v2511 = vsel %vm2483, %v2465, 0.0
      %v2512 = vadd.f32 %v2510, %v2511
      %v2513 = vsel %vm2483, %v2466, 0.0
      %v2514 = vadd.f32 %v2512, %v2513
      %v2515 = vsel %vm2483, %v2467, 0.0
      %v2516 = vadd.f32 %v2514, %v2515
      %v2517 = vsel %vm2483, %v2468, 0.0
      %v2518 = vadd.f32 %v2516, %v2517
      %v2519 = vsel %vm2483, %v2469, 0.0
      %v2520 = vadd.f32 %v2518, %v2519
      %v2521 = vsel %vm2483, %v2470, 0.0
      %v2522 = vadd.f32 %v2520, %v2521
      %v2523 = vsel %vm2483, %v2471, 0.0
      %v2524 = vadd.f32 %v2522, %v2523
      %v2525 = vsel %vm2483, %v2472, 0.0
      %v2526 = vadd.f32 %v2524, %v2525
      %v2527 = vsel %vm2483, %v2473, 0.0
      %v2528 = vadd.f32 %v2526, %v2527
      %v2529 = vsel %vm2483, %v2474, 0.0
      %v2530 = vadd.f32 %v2528, %v2529
      %v2531 = vsel %vm2483, %v2475, 0.0
      %v2532 = vadd.f32 %v2530, %v2531
      %v2533 = vsel %vm2483, %v2476, 0.0
      %v2534 = vadd.f32 %v2532, %v2533
      %v2535 = vsel %vm2483, %v2477, 0.0
      %v2536 = vadd.f32 %v2534, %v2535
      %v2537 = vsel %vm2483, %v2478, 0.0
      %v2538 = vadd.f32 %v2536, %v2537
      %v2539 = vsel %vm2483, %v2479, 0.0
      %v2540 = vadd.f32 %v2538, %v2539
      %v2541 = vsel %vm2483, %v2480, 0.0
      %v2542 = vadd.f32 %v2540, %v2541
      %v2543 = vsel %vm2483, %v2481, 0.0
      %v2544 = vadd.f32 %v2542, %v2543
      %v2545 = vsel %vm2483, %v2482, 0.0
      %v2546 = vadd.f32 %v2544, %v2545
      %2547 = vadd.xlane.f32.xlu0 %v2546
      %v2548 = vpop.xlane.xlu0 %2547
      %v2549 = vrot.slane %v2548, 4
      %v2550 = vadd.f32 %v2548, %v2549
      %v2551 = vrot.slane %v2550, 2
      %v2552 = vadd.f32 %v2550, %v2551
      %v2553 = vrot.slane %v2552, 1
      %v2554 = vadd.f32 %v2552, %v2553
      %s2555 = vtos %v2554
      %vm2556 = vcmp.lt.s32.totalorder %v457, 16
      %v2557 = vsel %vm2556, %v2005, 0.0
      %v2558 = vsel %vm2556, %v2008, 0.0
      %v2559 = vsel %vm2556, %v2013, 0.0
      %v2560 = vsel %vm2556, %v2016, 0.0
      %v2561 = vsel %vm2556, %v2021, 0.0
      %v2562 = vsel %vm2556, %v2024, 0.0
      %v2563 = vsel %vm2556, %v2029, 0.0
      %v2564 = vsel %vm2556, %v2032, 0.0
      %v2565 = vsel %vm2556, %v2037, 0.0
      %v2566 = vsel %vm2556, %v2040, 0.0
      %v2567 = vsel %vm2556, %v2045, 0.0
      %v2568 = vsel %vm2556, %v2048, 0.0
      %v2569 = vsel %vm2556, %v2053, 0.0
      %v2570 = vsel %vm2556, %v2056, 0.0
      %v2571 = vsel %vm2556, %v2061, 0.0
      %v2572 = vsel %vm2556, %v2064, 0.0
      %v2573 = vsel %vm2556, %v2069, 0.0
      %v2574 = vsel %vm2556, %v2072, 0.0
      %v2575 = vsel %vm2556, %v2077, 0.0
      %v2576 = vsel %vm2556, %v2080, 0.0
      %v2577 = vsel %vm2556, %v2085, 0.0
      %v2578 = vsel %vm2556, %v2088, 0.0
      %v2579 = vsel %vm2556, %v2093, 0.0
      %v2580 = vsel %vm2556, %v2096, 0.0
      %v2581 = vsel %vm2556, %v2101, 0.0
      %v2582 = vsel %vm2556, %v2104, 0.0
      %v2583 = vsel %vm2556, %v2109, 0.0
      %v2584 = vsel %vm2556, %v2112, 0.0
      %v2585 = vsel %vm2556, %v2117, 0.0
      %v2586 = vsel %vm2556, %v2120, 0.0
      %v2587 = vsel %vm2556, %v2125, 0.0
      %v2588 = vsel %vm2556, %v2128, 0.0
      %v2589 = vsel %vm1290, %v1258, 0.0
      %v2590 = vsel %vm1290, %v1259, 0.0
      %v2591 = vsel %vm1290, %v1260, 0.0
      %v2592 = vsel %vm1290, %v1261, 0.0
      %v2593 = vsel %vm1290, %v1262, 0.0
      %v2594 = vsel %vm1290, %v1263, 0.0
      %v2595 = vsel %vm1290, %v1264, 0.0
      %v2596 = vsel %vm1290, %v1265, 0.0
      %v2597 = vsel %vm1290, %v1266, 0.0
      %v2598 = vsel %vm1290, %v1267, 0.0
      %v2599 = vsel %vm1290, %v1268, 0.0
      %v2600 = vsel %vm1290, %v1269, 0.0
      %v2601 = vsel %vm1290, %v1270, 0.0
      %v2602 = vsel %vm1290, %v1271, 0.0
      %v2603 = vsel %vm1290, %v1272, 0.0
      %v2604 = vsel %vm1290, %v1273, 0.0
      %v2605 = vsel %vm1290, %v1274, 0.0
      %v2606 = vsel %vm1290, %v1275, 0.0
      %v2607 = vsel %vm1290, %v1276, 0.0
      %v2608 = vsel %vm1290, %v1277, 0.0
      %v2609 = vsel %vm1290, %v1278, 0.0
      %v2610 = vsel %vm1290, %v1279, 0.0
      %v2611 = vsel %vm1290, %v1280, 0.0
      %v2612 = vsel %vm1290, %v1281, 0.0
      %v2613 = vsel %vm1290, %v1282, 0.0
      %v2614 = vsel %vm1290, %v1283, 0.0
      %v2615 = vsel %vm1290, %v1284, 0.0
      %v2616 = vsel %vm1290, %v1285, 0.0
      %v2617 = vsel %vm1290, %v1286, 0.0
      %v2618 = vsel %vm1290, %v1287, 0.0
      %v2619 = vsel %vm1290, %v1288, 0.0
      %v2620 = vsel %vm1290, %v1289, 0.0
      %v2621 = vadd.f32 %v2557, %v2589
      %v2622 = vadd.f32 %v2558, %v2590
      %v2623 = vadd.f32 %v2559, %v2591
      %v2624 = vadd.f32 %v2560, %v2592
      %v2625 = vadd.f32 %v2561, %v2593
      %v2626 = vadd.f32 %v2562, %v2594
      %v2627 = vadd.f32 %v2563, %v2595
      %v2628 = vadd.f32 %v2564, %v2596
      %v2629 = vadd.f32 %v2565, %v2597
      %v2630 = vadd.f32 %v2566, %v2598
      %v2631 = vadd.f32 %v2567, %v2599
      %v2632 = vadd.f32 %v2568, %v2600
      %v2633 = vadd.f32 %v2569, %v2601
      %v2634 = vadd.f32 %v2570, %v2602
      %v2635 = vadd.f32 %v2571, %v2603
      %v2636 = vadd.f32 %v2572, %v2604
      %v2637 = vadd.f32 %v2573, %v2605
      %v2638 = vadd.f32 %v2574, %v2606
      %v2639 = vadd.f32 %v2575, %v2607
      %v2640 = vadd.f32 %v2576, %v2608
      %v2641 = vadd.f32 %v2577, %v2609
      %v2642 = vadd.f32 %v2578, %v2610
      %v2643 = vadd.f32 %v2579, %v2611
      %v2644 = vadd.f32 %v2580, %v2612
      %v2645 = vadd.f32 %v2581, %v2613
      %v2646 = vadd.f32 %v2582, %v2614
      %v2647 = vadd.f32 %v2583, %v2615
      %v2648 = vadd.f32 %v2584, %v2616
      %v2649 = vadd.f32 %v2585, %v2617
      %v2650 = vadd.f32 %v2586, %v2618
      %v2651 = vadd.f32 %v2587, %v2619
      %v2652 = vadd.f32 %v2588, %v2620
      %v2653 = vadd.f32 %v2621, %v786
      %v2654 = vadd.f32 %v2622, %v787
      %v2655 = vadd.f32 %v2623, %v788
      %v2656 = vadd.f32 %v2624, %v789
      %v2657 = vadd.f32 %v2625, %v790
      %v2658 = vadd.f32 %v2626, %v791
      %v2659 = vadd.f32 %v2627, %v792
      %v2660 = vadd.f32 %v2628, %v793
      %v2661 = vadd.f32 %v2629, %v794
      %v2662 = vadd.f32 %v2630, %v795
      %v2663 = vadd.f32 %v2631, %v796
      %v2664 = vadd.f32 %v2632, %v797
      %v2665 = vadd.f32 %v2633, %v798
      %v2666 = vadd.f32 %v2634, %v799
      %v2667 = vadd.f32 %v2635, %v800
      %v2668 = vadd.f32 %v2636, %v801
      %v2669 = vadd.f32 %v2637, %v802
      %v2670 = vadd.f32 %v2638, %v803
      %v2671 = vadd.f32 %v2639, %v804
      %v2672 = vadd.f32 %v2640, %v805
      %v2673 = vadd.f32 %v2641, %v806
      %v2674 = vadd.f32 %v2642, %v807
      %v2675 = vadd.f32 %v2643, %v808
      %v2676 = vadd.f32 %v2644, %v809
      %v2677 = vadd.f32 %v2645, %v810
      %v2678 = vadd.f32 %v2646, %v811
      %v2679 = vadd.f32 %v2647, %v812
      %v2680 = vadd.f32 %v2648, %v813
      %v2681 = vadd.f32 %v2649, %v814
      %v2682 = vadd.f32 %v2650, %v815
      %v2683 = vadd.f32 %v2651, %v816
      %v2684 = vadd.f32 %v2652, %v817
      %v2685 = vpack.c.bf16 %v2654, %v2653
      %v2686 = vpack.c.bf16 %v2656, %v2655
      %v2687 = vpack.c.bf16 %v2658, %v2657
      %v2688 = vpack.c.bf16 %v2660, %v2659
      %v2689 = vpack.c.bf16 %v2662, %v2661
      %v2690 = vpack.c.bf16 %v2664, %v2663
      %v2691 = vpack.c.bf16 %v2666, %v2665
      %v2692 = vpack.c.bf16 %v2668, %v2667
      %v2693 = vpack.c.bf16 %v2670, %v2669
      %v2694 = vpack.c.bf16 %v2672, %v2671
      %v2695 = vpack.c.bf16 %v2674, %v2673
      %v2696 = vpack.c.bf16 %v2676, %v2675
      %v2697 = vpack.c.bf16 %v2678, %v2677
      %v2698 = vpack.c.bf16 %v2680, %v2679
      %v2699 = vpack.c.bf16 %v2682, %v2681
      %v2700 = vpack.c.bf16 %v2684, %v2683
      %v2717 = vunpack.c.l.b16 %v2685
      %v2718 = vunpack.c.h.b16 %v2685
      %v2719 = vunpack.c.l.b16 %v2686
      %v2720 = vunpack.c.h.b16 %v2686
      %v2721 = vunpack.c.l.b16 %v2687
      %v2722 = vunpack.c.h.b16 %v2687
      %v2723 = vunpack.c.l.b16 %v2688
      %v2724 = vunpack.c.h.b16 %v2688
      %v2725 = vunpack.c.l.b16 %v2689
      %v2726 = vunpack.c.h.b16 %v2689
      %v2727 = vunpack.c.l.b16 %v2690
      %v2728 = vunpack.c.h.b16 %v2690
      %v2729 = vunpack.c.l.b16 %v2691
      %v2730 = vunpack.c.h.b16 %v2691
      %v2731 = vunpack.c.l.b16 %v2692
      %v2732 = vunpack.c.h.b16 %v2692
      %v2733 = vunpack.c.l.b16 %v2693
      %v2734 = vunpack.c.h.b16 %v2693
      %v2735 = vunpack.c.l.b16 %v2694
      %v2736 = vunpack.c.h.b16 %v2694
      %v2737 = vunpack.c.l.b16 %v2695
      %v2738 = vunpack.c.h.b16 %v2695
      %v2739 = vunpack.c.l.b16 %v2696
      %v2740 = vunpack.c.h.b16 %v2696
      %v2741 = vunpack.c.l.b16 %v2697
      %v2742 = vunpack.c.h.b16 %v2697
      %v2743 = vunpack.c.l.b16 %v2698
      %v2744 = vunpack.c.h.b16 %v2698
      %v2745 = vunpack.c.l.b16 %v2699
      %v2746 = vunpack.c.h.b16 %v2699
      %v2747 = vunpack.c.l.b16 %v2700
      %v2748 = vunpack.c.h.b16 %v2700
      %v2749 = vpack.c.b16 %v2717, %v2717
      %v2750 = vpack.c.b16 %v2718, %v2718
      %v2751 = vpack.c.b16 %v2719, %v2719
      %v2752 = vpack.c.b16 %v2720, %v2720
      %v2753 = vpack.c.b16 %v2721, %v2721
      %v2754 = vpack.c.b16 %v2722, %v2722
      %v2755 = vpack.c.b16 %v2723, %v2723
      %v2756 = vpack.c.b16 %v2724, %v2724
      %v2757 = vpack.c.b16 %v2725, %v2725
      %v2758 = vpack.c.b16 %v2726, %v2726
      %v2759 = vpack.c.b16 %v2727, %v2727
      %v2760 = vpack.c.b16 %v2728, %v2728
      %v2761 = vpack.c.b16 %v2729, %v2729
      %v2762 = vpack.c.b16 %v2730, %v2730
      %v2763 = vpack.c.b16 %v2731, %v2731
      %v2764 = vpack.c.b16 %v2732, %v2732
      %v2765 = vpack.c.b16 %v2733, %v2733
      %v2766 = vpack.c.b16 %v2734, %v2734
      %v2767 = vpack.c.b16 %v2735, %v2735
      %v2768 = vpack.c.b16 %v2736, %v2736
      %v2769 = vpack.c.b16 %v2737, %v2737
      %v2770 = vpack.c.b16 %v2738, %v2738
      %v2771 = vpack.c.b16 %v2739, %v2739
      %v2772 = vpack.c.b16 %v2740, %v2740
      %v2773 = vpack.c.b16 %v2741, %v2741
      %v2774 = vpack.c.b16 %v2742, %v2742
      %v2775 = vpack.c.b16 %v2743, %v2743
      %v2776 = vpack.c.b16 %v2744, %v2744
      %v2777 = vpack.c.b16 %v2745, %v2745
      %v2778 = vpack.c.b16 %v2746, %v2746
      %v2779 = vpack.c.b16 %v2747, %v2747
      %v2780 = vpack.c.b16 %v2748, %v2748
      %2813 = vst [vmem:[%s417] sm:$0xf] %v2749
      %2814 = vst [vmem:[%s417 + $0x4] sm:$0xf] %v2750
      %2815 = vst [vmem:[%s417 + $0x8] sm:$0xf] %v2751
      %2816 = vst [vmem:[%s417 + $0xc] sm:$0xf] %v2752
      %2817 = vst [vmem:[%s417 + $0x10] sm:$0xf] %v2753
      %2818 = vst [vmem:[%s417 + $0x14] sm:$0xf] %v2754
      %2819 = vst [vmem:[%s417 + $0x18] sm:$0xf] %v2755
      %2820 = vst [vmem:[%s417 + $0x1c] sm:$0xf] %v2756
      %2821 = vst [vmem:[%s417 + $0x20] sm:$0xf] %v2757
      %2822 = vst [vmem:[%s417 + $0x24] sm:$0xf] %v2758
      %2823 = vst [vmem:[%s417 + $0x28] sm:$0xf] %v2759
      %2824 = vst [vmem:[%s417 + $0x2c] sm:$0xf] %v2760
      %2825 = vst [vmem:[%s417 + $0x30] sm:$0xf] %v2761
      %2826 = vst [vmem:[%s417 + $0x34] sm:$0xf] %v2762
      %2827 = vst [vmem:[%s417 + $0x38] sm:$0xf] %v2763
      %2828 = vst [vmem:[%s417 + $0x3c] sm:$0xf] %v2764
      %2829 = vst [vmem:[%s417 + $0x40] sm:$0xf] %v2765
      %2830 = vst [vmem:[%s417 + $0x44] sm:$0xf] %v2766
      %2831 = vst [vmem:[%s417 + $0x48] sm:$0xf] %v2767
      %2832 = vst [vmem:[%s417 + $0x4c] sm:$0xf] %v2768
      %2833 = vst [vmem:[%s417 + $0x50] sm:$0xf] %v2769
      %2834 = vst [vmem:[%s417 + $0x54] sm:$0xf] %v2770
      %2835 = vst [vmem:[%s417 + $0x58] sm:$0xf] %v2771
      %2836 = vst [vmem:[%s417 + $0x5c] sm:$0xf] %v2772
      %2837 = vst [vmem:[%s417 + $0x60] sm:$0xf] %v2773
      %2838 = vst [vmem:[%s417 + $0x64] sm:$0xf] %v2774
      %2839 = vst [vmem:[%s417 + $0x68] sm:$0xf] %v2775
      %2840 = vst [vmem:[%s417 + $0x6c] sm:$0xf] %v2776
      %2841 = vst [vmem:[%s417 + $0x70] sm:$0xf] %v2777
      %2842 = vst [vmem:[%s417 + $0x74] sm:$0xf] %v2778
      %2843 = vst [vmem:[%s417 + $0x78] sm:$0xf] %v2779
      %2844 = vst [vmem:[%s417 + $0x7c] sm:$0xf] %v2780
      %v2845 = vlaneseq
      %v2846 = vshrl.u32 %v2845, 7
      %vm2847 = vcmp.eq.s32.totalorder %v2846, 0
      %vm2848 = vcmp.eq.s32.totalorder %v457, 0
      %vm2849 = vmand %vm2847, %vm2848
      %vm2850 = vcmp.eq.s32.totalorder %v457, 1
      %vm2851 = vmand %vm2847, %vm2850
      %v2852 = vstv %s2555
      %v2853 = vsel %vm2851, %v2852, 0.0
      %v2854 = vstv %s1618
      %v2855 = vsel %vm2849, %v2854, %v2853
      %2856 = vst [vmem:[%s422] sm:$0xff] %v2855
      %s2857 = smul.u32 32, %s23
      %p2858 = scmp.lt.s32.totalorder %s2857, 63
      %s2859 = scalar_select %p2858, %s2857, 63
      %s2860 = smul.addr %s2859, 4
      %s2861 = scalar_lea.vmem %s10, %s2860
      %p2862 = scmp.lt.s32.totalorder %s23, 1
      %s2863 = scalar_select %p2862, %s23, 1
      %s2864 = smul.addr %s2863, 8
      %s2865 = scalar_lea.vmem %s11, %s2864
      // Predicated region
      $region61: #{panoptic_forward.7} parent=59 // pred_check
        %p2866 = pneg %p261
      $region62: #{panoptic_forward.7} parent=59 // pred_check_branch
        %2868 = sbr.rel (%p2866) target = $region64
      $region63: #{panoptic_forward.7} parent=59 // pred_region
        %s2869 = smul.u32 32, %s23
      $region64: #{panoptic_forward.7} parent=59 // pred_fallthru
        _
      // Predicated region
      $region65: #{panoptic_forward.7} parent=59 // pred_check
        %p2870 = pneg %p287
      $region66: #{panoptic_forward.7} parent=59 // pred_check_branch
        %2872 = sbr.rel (%p2870) target = $region68
      $region67: #{panoptic_forward.7} parent=59 // pred_region
        _
      $region68: #{panoptic_forward.7} parent=59 // pred_fallthru
        _
    $region60: #{panoptic_forward.7} parent=5 // pred_fallthru
      _
    %p2873 = scmp.le.s32.totalorder 2, %s18
    // Predicated region
    $region69: #{panoptic_forward.7} parent=5 // pred_check
      %p2874 = pneg %p2873
    $region70: #{panoptic_forward.7} parent=5 // pred_check_branch
      %2876 = sbr.rel (%p2874) target = $region72
    $region71: #{panoptic_forward.7} parent=5 // pred_region
      %s2877 = ssub.s32 %s18, 2
      // Predicated region
      $region73: #{panoptic_forward.7} parent=71 // pred_check
        %p2878 = pneg %p267
      $region74: #{panoptic_forward.7} parent=71 // pred_check_branch
        %2880 = sbr.rel (%p2878) target = $region76
      $region75: #{panoptic_forward.7} parent=71 // pred_region
        %s2881 = smul.u32 32, %s24
        %p2882 = scmp.lt.s32.totalorder %s2881, 63
        %s2883 = scalar_select %p2882, %s2881, 63
        %s2884 = smul.addr %s2883, 4
        %s2885 = scalar_lea.vmem %s10, %s2884
      $region76: #{panoptic_forward.7} parent=71 // pred_fallthru
        _
      // Predicated region
      $region77: #{panoptic_forward.7} parent=71 // pred_check
        %p2886 = pneg %p293
      $region78: #{panoptic_forward.7} parent=71 // pred_check_branch
        %2888 = sbr.rel (%p2886) target = $region80
      $region79: #{panoptic_forward.7} parent=71 // pred_region
        %p2889 = scmp.lt.s32.totalorder %s24, 1
        %s2890 = scalar_select %p2889, %s24, 1
        %s2891 = smul.addr %s2890, 8
        %s2892 = scalar_lea.vmem %s11, %s2891
      $region80: #{panoptic_forward.7} parent=71 // pred_fallthru
        _
    $region72: #{panoptic_forward.7} parent=5 // pred_fallthru
      _
  $region6: #{panoptic_forward.7} parent=0 // loop_footer
    %s22 = sadd.s32 1, %s18
  $region7: #{panoptic_forward.7} parent=0 // loop_footer_branch
    %17 = sbr.rel target = $region3
  $region8: #{panoptic_forward.7} parent=0 // loop_exit
    _

</llo_original>
